<compile_context>
chip_gen: v7x
topology: tpu7x:2x2x1
jax: 0.10.0
libtpu: 0.0.40
codegen_flags: <defaults>
</compile_context>

<pallas_src>
import functools

import numpy as np
import jax
import jax.numpy as jnp
from jax.experimental import pallas as pl
from jax.experimental.pallas import tpu as pltpu

K = 3          # conv kernel size (both convs)
C0 = 10        # cnn_0 out channels
C1 = 5         # cnn_1 out channels
HIDDEN = 100   # fc_0 out features
LANE = 128     # lane-padding granularity


# ----------------------------- Pallas kernel -------------------------------

def _critic_kernel(x_ref, a0_ref, b0_ref, a1_ref, b1_ref,
                   wf0_ref, bf0_ref, wf1_ref, bf1_ref, out_ref):
    """Fused forward: conv0 -> relu -> conv1 -> relu -> fc0 -> relu -> fc1.

    All four stages are 2-D MXU matmuls over CHW-flattened activations; the
    conv operators a0/a1 were materialized offline.
    """
    h = x_ref[...]                                                # (tb, Cin*H*W)
    h = jnp.maximum(
        jnp.dot(h, a0_ref[...], preferred_element_type=jnp.float32) + b0_ref[...],
        0.0)                                                      # (tb, C0*H1*W1)
    h = jnp.maximum(
        jnp.dot(h, a1_ref[...], preferred_element_type=jnp.float32) + b1_ref[...],
        0.0)                                                      # (tb, C1*H2*W2)
    h = jnp.maximum(
        jnp.dot(h, wf0_ref[...], preferred_element_type=jnp.float32) + bf0_ref[...],
        0.0)                                                      # (tb, 128)
    out_ref[...] = (
        jnp.dot(h, wf1_ref[...], preferred_element_type=jnp.float32) + bf1_ref[...]
    )                                                             # (tb, 128), col 0 = value


# ------------------------------ JAX wrapper --------------------------------

def _pick_batch_tile(batch):
    if batch <= 8:
        return batch
    for t in (256, 128, 64, 32, 16, 8):
        if batch % t == 0:
            return t
    return batch


@functools.partial(jax.jit, static_argnames=("out_dim",))
def critic_cnn_forward(kp, x_nchw, out_dim=1):
    """Forward pass. x_nchw: (B, Cin, H, W) float32. Returns state value (B, out_dim)."""
    # TODO(synk): the unbatched (3-D input) branch of the PyTorch forward is not
    # implemented; pass NCHW batches.
    B = x_nchw.shape[0]
    xf = x_nchw.reshape(B, -1)                 # CHW flatten (matches conv-matrix rows)

    tb = _pick_batch_tile(B)
    out_pad = kp["bf1"].shape[1]               # 128 (lane-dense output slab)
    weight_names = ("a0", "b0", "a1", "b1", "wf0", "bf0", "wf1", "bf1")

    in_specs = [pl.BlockSpec((tb, xf.shape[1]), lambda i: (i, 0))]
    in_specs += [pl.BlockSpec(kp[n].shape, lambda i: (0, 0)) for n in weight_names]

    padded = pl.pallas_call(
        _critic_kernel,
        out_shape=jax.ShapeDtypeStruct((B, out_pad), jnp.float32),
        grid=(B // tb,),
        in_specs=in_specs,
        out_specs=pl.BlockSpec((tb, out_pad), lambda i: (i, 0)),
        compiler_params=pltpu.CompilerParams(
            dimension_semantics=("parallel",),
            vmem_limit_bytes=40 * 1024 * 1024),
    )(xf, *(kp[n] for n in weight_names))

    return padded[:, :out_dim]


# -------------------------- parameters & reference -------------------------

def init_params(key, in_channels, H, W):
    """Deterministic PyTorch-shaped params (U(-1/sqrt(fan_in), 1/sqrt(fan_in)))."""
    ks = jax.random.split(key, 8)

    def u(k, shape, fan_in):
        b = 1.0 / float(np.sqrt(fan_in))
        return jax.random.uniform(k, shape, jnp.float32, -b, b)

    flat = (H - 2 * (K - 1)) * (W - 2 * (K - 1)) * C1
    return {
        "cnn0_w": u(ks[0], (C0, in_channels, K, K), in_channels * K * K),
        "cnn0_b": u(ks[1], (C0,), in_channels * K * K),
        "cnn1_w": u(ks[2], (C1, C0, K, K), C0 * K * K),
        "cnn1_b": u(ks[3], (C1,), C0 * K * K),
        "fc0_w": u(ks[4], (HIDDEN, flat), flat),
        "fc0_b": u(ks[5], (HIDDEN,), flat),
        "fc1_w": u(ks[6], (1, HIDDEN), HIDDEN),
        "fc1_b": u(ks[7], (1,), HIDDEN),
    }


def _conv_as_matmul(w_oihw, cin, H, W):
    """Dense matmul operator for a valid conv, CHW-flattened on both sides.

    Built by probing the conv with the identity basis, so columns are exactly
    the conv response of each input unit vector (entries are the original
    weights; the rest are exact zeros)."""
    n = cin * H * W
    basis = jnp.eye(n, dtype=jnp.float32).reshape(n, cin, H, W)
    y = jax.lax.conv_general_dilated(
        basis, w_oihw, (1, 1), "VALID",
        dimension_numbers=("NCHW", "OIHW", "NCHW"))
    return y.reshape(n, -1)                    # (cin*H*W, cout*Ho*Wo)


def to_kernel_params(tp, in_channels, H, W):
    """Offline re-layout: conv -> matmul operators, lane-padded fc weights."""
    H1, W1 = H - K + 1, W - K + 1
    H2, W2 = H1 - K + 1, W1 - K + 1
    hidden = tp["fc0_w"].shape[0]
    out_dim = tp["fc1_w"].shape[0]

    a0 = _conv_as_matmul(tp["cnn0_w"], in_channels, H, W)      # (Cin*H*W, C0*H1*W1)
    a1 = _conv_as_matmul(tp["cnn1_w"], C0, H1, W1)             # (C0*H1*W1, C1*H2*W2)
    b0 = jnp.repeat(tp["cnn0_b"], H1 * W1).reshape(1, -1)      # CHW-order bias row
    b1 = jnp.repeat(tp["cnn1_b"], H2 * W2).reshape(1, -1)

    hp = ((hidden + LANE - 1) // LANE) * LANE                  # 100 -> 128
    op = LANE                                                  # value head 1 -> 128
    wf0 = jnp.zeros((a1.shape[1], hp), jnp.float32).at[:, :hidden].set(tp["fc0_w"].T)
    bf0 = jnp.zeros((1, hp), jnp.float32).at[0, :hidden].set(tp["fc0_b"])
    wf1 = jnp.zeros((hp, op), jnp.float32).at[:hidden, :out_dim].set(tp["fc1_w"].T)
    bf1 = jnp.zeros((1, op), jnp.float32).at[0, :out_dim].set(tp["fc1_b"])

    return {"a0": a0, "b0": b0, "a1": a1, "b1": b1,
            "wf0": wf0, "bf0": bf0, "wf1": wf1, "bf1": bf1}


def reference_forward(tp, x_nchw):
    """Pure-JAX (XLA) reference mirroring the PyTorch CriticCNN forward."""
    dn = ("NCHW", "OIHW", "NCHW")
    y = jax.lax.conv_general_dilated(x_nchw, tp["cnn0_w"], (1, 1), "VALID",
                                     dimension_numbers=dn)
    y = jax.nn.relu(y + tp["cnn0_b"][None, :, None, None])
    y = jax.lax.conv_general_dilated(y, tp["cnn1_w"], (1, 1), "VALID",
                                     dimension_numbers=dn)
    y = jax.nn.relu(y + tp["cnn1_b"][None, :, None, None])
    y = y.reshape(y.shape[0], -1)                              # CHW flatten
    y = jax.nn.relu(y @ tp["fc0_w"].T + tp["fc0_b"])
    return y @ tp["fc1_w"].T + tp["fc1_b"]                     # (B, 1)


# ---------------------------------- main ------------------------------------

if __name__ == "__main__":
    B, Cin, H, W = 2, 1, 16, 16          # state_space = (1, 16, 16)

    root = jax.random.PRNGKey(0)
    k_params, k_x = jax.random.split(root)
    tp = init_params(k_params, Cin, H, W)
    kp = to_kernel_params(tp, Cin, H, W)

    x = jax.random.normal(k_x, (B, Cin, H, W), dtype=jnp.float32)

    value = critic_cnn_forward(kp, x)
    value = jax.block_until_ready(value)
    ref = jax.block_until_ready(reference_forward(tp, x))

    assert value.shape == (B, 1)
    np.testing.assert_allclose(np.asarray(value), np.asarray(ref),
                               rtol=1e-4, atol=1e-5)
    print("KERNEL_OK")
</pallas_src>

<mosaic_0001>
module attributes {stable_mosaic.version = 11 : i64} {
  func.func @_critic_kernel(%arg0: i32, %arg1: memref<2x256xf32, #tpu.memory_space<vmem>>, %arg2: memref<256x1960xf32, #tpu.memory_space<vmem>>, %arg3: memref<1x1960xf32, #tpu.memory_space<vmem>>, %arg4: memref<1960x720xf32, #tpu.memory_space<vmem>>, %arg5: memref<1x720xf32, #tpu.memory_space<vmem>>, %arg6: memref<720x128xf32, #tpu.memory_space<vmem>>, %arg7: memref<1x128xf32, #tpu.memory_space<vmem>>, %arg8: memref<128x128xf32, #tpu.memory_space<vmem>>, %arg9: memref<1x128xf32, #tpu.memory_space<vmem>>, %arg10: memref<2x128xf32, #tpu.memory_space<vmem>>) attributes {dimension_semantics = [#tpu.dimension_semantics<parallel>], iteration_bounds = array<i64: 1>, scalar_prefetch = 0 : i64, scratch_operands = 0 : i64, tpu.core_type = #tpu.core_type<tc>, window_params = [{transform_indices = @transform_0, window_bounds = array<i64: 2, 256>}, {pipeline_mode = #tpu.pipeline_mode<synchronous>, transform_indices = @transform_1, window_bounds = array<i64: 256, 1960>}, {pipeline_mode = #tpu.pipeline_mode<synchronous>, transform_indices = @transform_2, window_bounds = array<i64: 1, 1960>}, {pipeline_mode = #tpu.pipeline_mode<synchronous>, transform_indices = @transform_3, window_bounds = array<i64: 1960, 720>}, {pipeline_mode = #tpu.pipeline_mode<synchronous>, transform_indices = @transform_4, window_bounds = array<i64: 1, 720>}, {pipeline_mode = #tpu.pipeline_mode<synchronous>, transform_indices = @transform_5, window_bounds = array<i64: 720, 128>}, {pipeline_mode = #tpu.pipeline_mode<synchronous>, transform_indices = @transform_6, window_bounds = array<i64: 1, 128>}, {pipeline_mode = #tpu.pipeline_mode<synchronous>, transform_indices = @transform_7, window_bounds = array<i64: 128, 128>}, {pipeline_mode = #tpu.pipeline_mode<synchronous>, transform_indices = @transform_8, window_bounds = array<i64: 1, 128>}, {transform_indices = @transform_9, window_bounds = array<i64: 2, 128>}]} {
    %c0 = arith.constant 0 : index
    %c0_0 = arith.constant 0 : index
    %0 = vector.load %arg1[%c0, %c0_0] : memref<2x256xf32, #tpu.memory_space<vmem>>, vector<2x256xf32>
    %c0_1 = arith.constant 0 : index
    %c0_2 = arith.constant 0 : index
    %1 = vector.load %arg2[%c0_1, %c0_2] : memref<256x1960xf32, #tpu.memory_space<vmem>>, vector<256x1960xf32>
    %cst = arith.constant dense<0.000000e+00> : vector<2x1960xf32>
    %2 = tpu.matmul %0, %1, %cst {dimension_numbers = #tpu.dot_dimension_numbers<[1], [0], [0], [1], [0, 0, 1, 1], [], []>} : vector<2x256xf32>, vector<256x1960xf32>, vector<2x1960xf32> -> vector<2x1960xf32>
    %c0_3 = arith.constant 0 : index
    %c0_4 = arith.constant 0 : index
    %3 = vector.load %arg3[%c0_3, %c0_4] : memref<1x1960xf32, #tpu.memory_space<vmem>>, vector<1x1960xf32>
    %4 = vector.broadcast %3 : vector<1x1960xf32> to vector<2x1960xf32>
    %5 = arith.addf %2, %4 : vector<2x1960xf32>
    %cst_5 = arith.constant 0.000000e+00 : f32
    %6 = vector.broadcast %cst_5 : f32 to vector<2x1960xf32>
    %7 = arith.maximumf %5, %6 : vector<2x1960xf32>
    %c0_6 = arith.constant 0 : index
    %c0_7 = arith.constant 0 : index
    %8 = vector.load %arg4[%c0_6, %c0_7] : memref<1960x720xf32, #tpu.memory_space<vmem>>, vector<1960x720xf32>
    %cst_8 = arith.constant dense<0.000000e+00> : vector<2x720xf32>
    %9 = tpu.matmul %7, %8, %cst_8 {dimension_numbers = #tpu.dot_dimension_numbers<[1], [0], [0], [1], [0, 0, 1, 1], [], []>} : vector<2x1960xf32>, vector<1960x720xf32>, vector<2x720xf32> -> vector<2x720xf32>
    %c0_9 = arith.constant 0 : index
    %c0_10 = arith.constant 0 : index
    %10 = vector.load %arg5[%c0_9, %c0_10] : memref<1x720xf32, #tpu.memory_space<vmem>>, vector<1x720xf32>
    %11 = vector.broadcast %10 : vector<1x720xf32> to vector<2x720xf32>
    %12 = arith.addf %9, %11 : vector<2x720xf32>
    %cst_11 = arith.constant 0.000000e+00 : f32
    %13 = vector.broadcast %cst_11 : f32 to vector<2x720xf32>
    %14 = arith.maximumf %12, %13 : vector<2x720xf32>
    %c0_12 = arith.constant 0 : index
    %c0_13 = arith.constant 0 : index
    %15 = vector.load %arg6[%c0_12, %c0_13] : memref<720x128xf32, #tpu.memory_space<vmem>>, vector<720x128xf32>
    %cst_14 = arith.constant dense<0.000000e+00> : vector<2x128xf32>
    %16 = tpu.matmul %14, %15, %cst_14 {dimension_numbers = #tpu.dot_dimension_numbers<[1], [0], [0], [1], [0, 0, 1, 1], [], []>} : vector<2x720xf32>, vector<720x128xf32>, vector<2x128xf32> -> vector<2x128xf32>
    %c0_15 = arith.constant 0 : index
    %c0_16 = arith.constant 0 : index
    %17 = vector.load %arg7[%c0_15, %c0_16] : memref<1x128xf32, #tpu.memory_space<vmem>>, vector<1x128xf32>
    %18 = vector.broadcast %17 : vector<1x128xf32> to vector<2x128xf32>
    %19 = arith.addf %16, %18 : vector<2x128xf32>
    %cst_17 = arith.constant 0.000000e+00 : f32
    %20 = vector.broadcast %cst_17 : f32 to vector<2x128xf32>
    %21 = arith.maximumf %19, %20 : vector<2x128xf32>
    %c0_18 = arith.constant 0 : index
    %c0_19 = arith.constant 0 : index
    %22 = vector.load %arg8[%c0_18, %c0_19] : memref<128x128xf32, #tpu.memory_space<vmem>>, vector<128x128xf32>
    %cst_20 = arith.constant dense<0.000000e+00> : vector<2x128xf32>
    %23 = tpu.matmul %21, %22, %cst_20 {dimension_numbers = #tpu.dot_dimension_numbers<[1], [0], [0], [1], [0, 0, 1, 1], [], []>} : vector<2x128xf32>, vector<128x128xf32>, vector<2x128xf32> -> vector<2x128xf32>
    %c0_21 = arith.constant 0 : index
    %c0_22 = arith.constant 0 : index
    %24 = vector.load %arg9[%c0_21, %c0_22] : memref<1x128xf32, #tpu.memory_space<vmem>>, vector<1x128xf32>
    %25 = vector.broadcast %24 : vector<1x128xf32> to vector<2x128xf32>
    %26 = arith.addf %23, %25 : vector<2x128xf32>
    %c0_23 = arith.constant 0 : index
    %c0_24 = arith.constant 0 : index
    %27 = vector.load %arg10[%c0_23, %c0_24] : memref<2x128xf32, #tpu.memory_space<vmem>>, vector<2x128xf32>
    tpu.vector_store %arg10[%c0_23, %c0_24], %26 {strides = array<i32>} : memref<2x128xf32, #tpu.memory_space<vmem>>, vector<2x128xf32>,
    return
  }
  func.func @transform_0(%arg0: i32) -> (i32, i32) {
    %c0_i32 = arith.constant 0 : i32
    %c0_i32_0 = arith.constant 0 : i32
    return %arg0, %c0_i32 : i32, i32
  }
  func.func @transform_1(%arg0: i32) -> (i32, i32) {
    %c0_i32 = arith.constant 0 : i32
    %c0_i32_0 = arith.constant 0 : i32
    %c0_i32_1 = arith.constant 0 : i32
    return %c0_i32, %c0_i32_0 : i32, i32
  }
  func.func @transform_2(%arg0: i32) -> (i32, i32) {
    %c0_i32 = arith.constant 0 : i32
    %c0_i32_0 = arith.constant 0 : i32
    %c0_i32_1 = arith.constant 0 : i32
    return %c0_i32, %c0_i32_0 : i32, i32
  }
  func.func @transform_3(%arg0: i32) -> (i32, i32) {
    %c0_i32 = arith.constant 0 : i32
    %c0_i32_0 = arith.constant 0 : i32
    %c0_i32_1 = arith.constant 0 : i32
    return %c0_i32, %c0_i32_0 : i32, i32
  }
  func.func @transform_4(%arg0: i32) -> (i32, i32) {
    %c0_i32 = arith.constant 0 : i32
    %c0_i32_0 = arith.constant 0 : i32
    %c0_i32_1 = arith.constant 0 : i32
    return %c0_i32, %c0_i32_0 : i32, i32
  }
  func.func @transform_5(%arg0: i32) -> (i32, i32) {
    %c0_i32 = arith.constant 0 : i32
    %c0_i32_0 = arith.constant 0 : i32
    %c0_i32_1 = arith.constant 0 : i32
    return %c0_i32, %c0_i32_0 : i32, i32
  }
  func.func @transform_6(%arg0: i32) -> (i32, i32) {
    %c0_i32 = arith.constant 0 : i32
    %c0_i32_0 = arith.constant 0 : i32
    %c0_i32_1 = arith.constant 0 : i32
    return %c0_i32, %c0_i32_0 : i32, i32
  }
  func.func @transform_7(%arg0: i32) -> (i32, i32) {
    %c0_i32 = arith.constant 0 : i32
    %c0_i32_0 = arith.constant 0 : i32
    %c0_i32_1 = arith.constant 0 : i32
    return %c0_i32, %c0_i32_0 : i32, i32
  }
  func.func @transform_8(%arg0: i32) -> (i32, i32) {
    %c0_i32 = arith.constant 0 : i32
    %c0_i32_0 = arith.constant 0 : i32
    %c0_i32_1 = arith.constant 0 : i32
    return %c0_i32, %c0_i32_0 : i32, i32
  }
  func.func @transform_9(%arg0: i32) -> (i32, i32) {
    %c0_i32 = arith.constant 0 : i32
    %c0_i32_0 = arith.constant 0 : i32
    return %arg0, %c0_i32 : i32, i32
  }
}

</mosaic_0001>

<llo_original>
// kernel: critic_cnn_forward.1
$region0: #{critic_cnn_forward.1}
  #allocation0 [shape = 'u32[]', space=smem, size = 0x4, offset = 0x4, fixed_abs, tag = 'smem constant byte address 0x4 - core index']
  #allocation1 [shape = 'u32[144,128]{1,0:T(1,128)}', space=vmem, size = 0x12000, scoped, tag = 'internal scratch']
  %s0 = inlined_call_operand.vmem [shape: f32[2,256], index: 0, kind: input, shape index: {}]
  %s1 = inlined_call_operand.vmem [shape: f32[256,1960], index: 1, kind: input, shape index: {}]
  %s2 = inlined_call_operand.vmem [shape: f32[1,1960], index: 2, kind: input, shape index: {}]
  %s3 = inlined_call_operand.vmem [shape: f32[1960,720], index: 3, kind: input, shape index: {}]
  %s4 = inlined_call_operand.vmem [shape: f32[1,720], index: 4, kind: input, shape index: {}]
  %s5 = inlined_call_operand.vmem [shape: f32[720,128], index: 5, kind: input, shape index: {}]
  %s6 = inlined_call_operand.vmem [shape: f32[1,128], index: 6, kind: input, shape index: {}]
  %s7 = inlined_call_operand.vmem [shape: f32[128,128], index: 7, kind: input, shape index: {}]
  %s8 = inlined_call_operand.vmem [shape: f32[1,128], index: 8, kind: input, shape index: {}]
  %s9 = inlined_call_operand.vmem [shape: f32[2,128], index: 9, kind: output, shape index: {}]
  %s10 = sld [smem:[#allocation0]]
  $region46: #{critic_cnn_forward.1} parent=0
    _
  %s12 = ssub.s32 1, %s10
  %s13 = scalar_select 0, %s12, %s10
  // Predicated region
  $region2: #{critic_cnn_forward.1} parent=0 // pred_check
    _
  $region3: #{critic_cnn_forward.1} parent=0 // pred_check_branch
    %15 = sbr.rel (0) target = $region5
  $region4: #{critic_cnn_forward.1} parent=0 // pred_region
    _
  $region5: #{critic_cnn_forward.1} parent=0 // pred_fallthru
    _
  // Predicated region
  $region6: #{critic_cnn_forward.1} parent=0 // pred_check
    _
  $region7: #{critic_cnn_forward.1} parent=0 // pred_check_branch
    %17 = sbr.rel (0) target = $region9
  $region8: #{critic_cnn_forward.1} parent=0 // pred_region
    _
  $region9: #{critic_cnn_forward.1} parent=0 // pred_fallthru
    _
  // Predicated region
  $region10: #{critic_cnn_forward.1} parent=0 // pred_check
    _
  $region11: #{critic_cnn_forward.1} parent=0 // pred_check_branch
    %19 = sbr.rel (0) target = $region13
  $region12: #{critic_cnn_forward.1} parent=0 // pred_region
    _
  $region13: #{critic_cnn_forward.1} parent=0 // pred_fallthru
    _
  // Predicated region
  $region14: #{critic_cnn_forward.1} parent=0 // pred_check
    _
  $region15: #{critic_cnn_forward.1} parent=0 // pred_check_branch
    %21 = sbr.rel (0) target = $region17
  $region16: #{critic_cnn_forward.1} parent=0 // pred_region
    _
  $region17: #{critic_cnn_forward.1} parent=0 // pred_fallthru
    _
  // Predicated region
  $region18: #{critic_cnn_forward.1} parent=0 // pred_check
    _
  $region19: #{critic_cnn_forward.1} parent=0 // pred_check_branch
    %23 = sbr.rel (0) target = $region21
  $region20: #{critic_cnn_forward.1} parent=0 // pred_region
    _
  $region21: #{critic_cnn_forward.1} parent=0 // pred_fallthru
    _
  // Predicated region
  $region22: #{critic_cnn_forward.1} parent=0 // pred_check
    _
  $region23: #{critic_cnn_forward.1} parent=0 // pred_check_branch
    %25 = sbr.rel (0) target = $region25
  $region24: #{critic_cnn_forward.1} parent=0 // pred_region
    _
  $region25: #{critic_cnn_forward.1} parent=0 // pred_fallthru
    _
  // Predicated region
  $region26: #{critic_cnn_forward.1} parent=0 // pred_check
    _
  $region27: #{critic_cnn_forward.1} parent=0 // pred_check_branch
    %27 = sbr.rel (0) target = $region29
  $region28: #{critic_cnn_forward.1} parent=0 // pred_region
    _
  $region29: #{critic_cnn_forward.1} parent=0 // pred_fallthru
    _
  // Predicated region
  $region30: #{critic_cnn_forward.1} parent=0 // pred_check
    _
  $region31: #{critic_cnn_forward.1} parent=0 // pred_check_branch
    %29 = sbr.rel (0) target = $region33
  $region32: #{critic_cnn_forward.1} parent=0 // pred_region
    _
  $region33: #{critic_cnn_forward.1} parent=0 // pred_fallthru
    _
  // Predicated region
  $region34: #{critic_cnn_forward.1} parent=0 // pred_check
    _
  $region35: #{critic_cnn_forward.1} parent=0 // pred_check_branch
    %31 = sbr.rel (0) target = $region37
  $region36: #{critic_cnn_forward.1} parent=0 // pred_region
    _
  $region37: #{critic_cnn_forward.1} parent=0 // pred_fallthru
    _
  %v32 = vld [vmem:[%s0] sm:$0xf]
  %v33 = vld [vmem:[%s1] sm:$0xff]
  %v34 = vld [vmem:[%s1 + $0x8] sm:$0xff]
  %v35 = vld [vmem:[%s1 + $0x10] sm:$0xff]
  %v36 = vld [vmem:[%s1 + $0x18] sm:$0xff]
  %v37 = vld [vmem:[%s1 + $0x20] sm:$0xff]
  %v38 = vld [vmem:[%s1 + $0x28] sm:$0xff]
  %v39 = vld [vmem:[%s1 + $0x30] sm:$0xff]
  %v40 = vld [vmem:[%s1 + $0x38] sm:$0xff]
  %v41 = vld [vmem:[%s1 + $0x40] sm:$0xff]
  %v42 = vld [vmem:[%s1 + $0x48] sm:$0xff]
  %v43 = vld [vmem:[%s1 + $0x50] sm:$0xff]
  %v44 = vld [vmem:[%s1 + $0x58] sm:$0xff]
  %v45 = vld [vmem:[%s1 + $0x60] sm:$0xff]
  %v46 = vld [vmem:[%s1 + $0x68] sm:$0xff]
  %v47 = vld [vmem:[%s1 + $0x70] sm:$0xff]
  %v48 = vld [vmem:[%s1 + $0x78] sm:$0xff]
  %v49 = vld [vmem:[%s1 + $0x80] sm:$0xff]
  %v50 = vld [vmem:[%s1 + $0x88] sm:$0xff]
  %v51 = vld [vmem:[%s1 + $0x90] sm:$0xff]
  %v52 = vld [vmem:[%s1 + $0x98] sm:$0xff]
  %v53 = vld [vmem:[%s1 + $0xa0] sm:$0xff]
  %v54 = vld [vmem:[%s1 + $0xa8] sm:$0xff]
  %v55 = vld [vmem:[%s1 + $0xb0] sm:$0xff]
  %v56 = vld [vmem:[%s1 + $0xb8] sm:$0xff]
  %v57 = vld [vmem:[%s1 + $0xc0] sm:$0xff]
  %v58 = vld [vmem:[%s1 + $0xc8] sm:$0xff]
  %v59 = vld [vmem:[%s1 + $0xd0] sm:$0xff]
  %v60 = vld [vmem:[%s1 + $0xd8] sm:$0xff]
  %v61 = vld [vmem:[%s1 + $0xe0] sm:$0xff]
  %v62 = vld [vmem:[%s1 + $0xe8] sm:$0xff]
  %v63 = vld [vmem:[%s1 + $0xf0] sm:$0xff]
  %v64 = vld [vmem:[%s1 + $0xf8] sm:$0xff]
  %v65 = vld [vmem:[%s1 + $0x100] sm:$0xff]
  %v66 = vld [vmem:[%s1 + $0x108] sm:$0xff]
  %v67 = vld [vmem:[%s1 + $0x110] sm:$0xff]
  %v68 = vld [vmem:[%s1 + $0x118] sm:$0xff]
  %v69 = vld [vmem:[%s1 + $0x120] sm:$0xff]
  %v70 = vld [vmem:[%s1 + $0x128] sm:$0xff]
  %v71 = vld [vmem:[%s1 + $0x130] sm:$0xff]
  %v72 = vld [vmem:[%s1 + $0x138] sm:$0xff]
  %v73 = vld [vmem:[%s1 + $0x140] sm:$0xff]
  %v74 = vld [vmem:[%s1 + $0x148] sm:$0xff]
  %v75 = vld [vmem:[%s1 + $0x150] sm:$0xff]
  %v76 = vld [vmem:[%s1 + $0x158] sm:$0xff]
  %v77 = vld [vmem:[%s1 + $0x160] sm:$0xff]
  %v78 = vld [vmem:[%s1 + $0x168] sm:$0xff]
  %v79 = vld [vmem:[%s1 + $0x170] sm:$0xff]
  %v80 = vld [vmem:[%s1 + $0x178] sm:$0xff]
  %v81 = vld [vmem:[%s1 + $0x180] sm:$0xff]
  %v82 = vld [vmem:[%s1 + $0x188] sm:$0xff]
  %v83 = vld [vmem:[%s1 + $0x190] sm:$0xff]
  %v84 = vld [vmem:[%s1 + $0x198] sm:$0xff]
  %v85 = vld [vmem:[%s1 + $0x1a0] sm:$0xff]
  %v86 = vld [vmem:[%s1 + $0x1a8] sm:$0xff]
  %v87 = vld [vmem:[%s1 + $0x1b0] sm:$0xff]
  %v88 = vld [vmem:[%s1 + $0x1b8] sm:$0xff]
  %v89 = vld [vmem:[%s1 + $0x1c0] sm:$0xff]
  %v90 = vld [vmem:[%s1 + $0x1c8] sm:$0xff]
  %v91 = vld [vmem:[%s1 + $0x1d0] sm:$0xff]
  %v92 = vld [vmem:[%s1 + $0x1d8] sm:$0xff]
  %v93 = vld [vmem:[%s1 + $0x1e0] sm:$0xff]
  %v94 = vld [vmem:[%s1 + $0x1e8] sm:$0xff]
  %v95 = vld [vmem:[%s1 + $0x1f0] sm:$0xff]
  %v96 = vld [vmem:[%s1 + $0x1f8] sm:$0xff]
  %v97 = vld [vmem:[%s1 + $0x200] sm:$0xff]
  %v98 = vld [vmem:[%s1 + $0x208] sm:$0xff]
  %v99 = vld [vmem:[%s1 + $0x210] sm:$0xff]
  %v100 = vld [vmem:[%s1 + $0x218] sm:$0xff]
  %v101 = vld [vmem:[%s1 + $0x220] sm:$0xff]
  %v102 = vld [vmem:[%s1 + $0x228] sm:$0xff]
  %v103 = vld [vmem:[%s1 + $0x230] sm:$0xff]
  %v104 = vld [vmem:[%s1 + $0x238] sm:$0xff]
  %v105 = vld [vmem:[%s1 + $0x240] sm:$0xff]
  %v106 = vld [vmem:[%s1 + $0x248] sm:$0xff]
  %v107 = vld [vmem:[%s1 + $0x250] sm:$0xff]
  %v108 = vld [vmem:[%s1 + $0x258] sm:$0xff]
  %v109 = vld [vmem:[%s1 + $0x260] sm:$0xff]
  %v110 = vld [vmem:[%s1 + $0x268] sm:$0xff]
  %v111 = vld [vmem:[%s1 + $0x270] sm:$0xff]
  %v112 = vld [vmem:[%s1 + $0x278] sm:$0xff]
  %v113 = vld [vmem:[%s1 + $0x280] sm:$0xff]
  %v114 = vld [vmem:[%s1 + $0x288] sm:$0xff]
  %v115 = vld [vmem:[%s1 + $0x290] sm:$0xff]
  %v116 = vld [vmem:[%s1 + $0x298] sm:$0xff]
  %v117 = vld [vmem:[%s1 + $0x2a0] sm:$0xff]
  %v118 = vld [vmem:[%s1 + $0x2a8] sm:$0xff]
  %v119 = vld [vmem:[%s1 + $0x2b0] sm:$0xff]
  %v120 = vld [vmem:[%s1 + $0x2b8] sm:$0xff]
  %v121 = vld [vmem:[%s1 + $0x2c0] sm:$0xff]
  %v122 = vld [vmem:[%s1 + $0x2c8] sm:$0xff]
  %v123 = vld [vmem:[%s1 + $0x2d0] sm:$0xff]
  %v124 = vld [vmem:[%s1 + $0x2d8] sm:$0xff]
  %v125 = vld [vmem:[%s1 + $0x2e0] sm:$0xff]
  %v126 = vld [vmem:[%s1 + $0x2e8] sm:$0xff]
  %v127 = vld [vmem:[%s1 + $0x2f0] sm:$0xff]
  %v128 = vld [vmem:[%s1 + $0x2f8] sm:$0xff]
  %v129 = vld [vmem:[%s1 + $0x300] sm:$0xff]
  %v130 = vld [vmem:[%s1 + $0x308] sm:$0xff]
  %v131 = vld [vmem:[%s1 + $0x310] sm:$0xff]
  %v132 = vld [vmem:[%s1 + $0x318] sm:$0xff]
  %v133 = vld [vmem:[%s1 + $0x320] sm:$0xff]
  %v134 = vld [vmem:[%s1 + $0x328] sm:$0xff]
  %v135 = vld [vmem:[%s1 + $0x330] sm:$0xff]
  %v136 = vld [vmem:[%s1 + $0x338] sm:$0xff]
  %v137 = vld [vmem:[%s1 + $0x340] sm:$0xff]
  %v138 = vld [vmem:[%s1 + $0x348] sm:$0xff]
  %v139 = vld [vmem:[%s1 + $0x350] sm:$0xff]
  %v140 = vld [vmem:[%s1 + $0x358] sm:$0xff]
  %v141 = vld [vmem:[%s1 + $0x360] sm:$0xff]
  %v142 = vld [vmem:[%s1 + $0x368] sm:$0xff]
  %v143 = vld [vmem:[%s1 + $0x370] sm:$0xff]
  %v144 = vld [vmem:[%s1 + $0x378] sm:$0xff]
  %v145 = vld [vmem:[%s1 + $0x380] sm:$0xff]
  %v146 = vld [vmem:[%s1 + $0x388] sm:$0xff]
  %v147 = vld [vmem:[%s1 + $0x390] sm:$0xff]
  %v148 = vld [vmem:[%s1 + $0x398] sm:$0xff]
  %v149 = vld [vmem:[%s1 + $0x3a0] sm:$0xff]
  %v150 = vld [vmem:[%s1 + $0x3a8] sm:$0xff]
  %v151 = vld [vmem:[%s1 + $0x3b0] sm:$0xff]
  %v152 = vld [vmem:[%s1 + $0x3b8] sm:$0xff]
  %v153 = vld [vmem:[%s1 + $0x3c0] sm:$0xff]
  %v154 = vld [vmem:[%s1 + $0x3c8] sm:$0xff]
  %v155 = vld [vmem:[%s1 + $0x3d0] sm:$0xff]
  %v156 = vld [vmem:[%s1 + $0x3d8] sm:$0xff]
  %v157 = vld [vmem:[%s1 + $0x3e0] sm:$0xff]
  %v158 = vld [vmem:[%s1 + $0x3e8] sm:$0xff]
  %v159 = vld [vmem:[%s1 + $0x3f0] sm:$0xff]
  %v160 = vld [vmem:[%s1 + $0x3f8] sm:$0xff]
  %v161 = vld [vmem:[%s1 + $0x400] sm:$0xff]
  %v162 = vld [vmem:[%s1 + $0x408] sm:$0xff]
  %v163 = vld [vmem:[%s1 + $0x410] sm:$0xff]
  %v164 = vld [vmem:[%s1 + $0x418] sm:$0xff]
  %v165 = vld [vmem:[%s1 + $0x420] sm:$0xff]
  %v166 = vld [vmem:[%s1 + $0x428] sm:$0xff]
  %v167 = vld [vmem:[%s1 + $0x430] sm:$0xff]
  %v168 = vld [vmem:[%s1 + $0x438] sm:$0xff]
  %v169 = vld [vmem:[%s1 + $0x440] sm:$0xff]
  %v170 = vld [vmem:[%s1 + $0x448] sm:$0xff]
  %v171 = vld [vmem:[%s1 + $0x450] sm:$0xff]
  %v172 = vld [vmem:[%s1 + $0x458] sm:$0xff]
  %v173 = vld [vmem:[%s1 + $0x460] sm:$0xff]
  %v174 = vld [vmem:[%s1 + $0x468] sm:$0xff]
  %v175 = vld [vmem:[%s1 + $0x470] sm:$0xff]
  %v176 = vld [vmem:[%s1 + $0x478] sm:$0xff]
  %v177 = vld [vmem:[%s1 + $0x480] sm:$0xff]
  %v178 = vld [vmem:[%s1 + $0x488] sm:$0xff]
  %v179 = vld [vmem:[%s1 + $0x490] sm:$0xff]
  %v180 = vld [vmem:[%s1 + $0x498] sm:$0xff]
  %v181 = vld [vmem:[%s1 + $0x4a0] sm:$0xff]
  %v182 = vld [vmem:[%s1 + $0x4a8] sm:$0xff]
  %v183 = vld [vmem:[%s1 + $0x4b0] sm:$0xff]
  %v184 = vld [vmem:[%s1 + $0x4b8] sm:$0xff]
  %v185 = vld [vmem:[%s1 + $0x4c0] sm:$0xff]
  %v186 = vld [vmem:[%s1 + $0x4c8] sm:$0xff]
  %v187 = vld [vmem:[%s1 + $0x4d0] sm:$0xff]
  %v188 = vld [vmem:[%s1 + $0x4d8] sm:$0xff]
  %v189 = vld [vmem:[%s1 + $0x4e0] sm:$0xff]
  %v190 = vld [vmem:[%s1 + $0x4e8] sm:$0xff]
  %v191 = vld [vmem:[%s1 + $0x4f0] sm:$0xff]
  %v192 = vld [vmem:[%s1 + $0x4f8] sm:$0xff]
  %v193 = vld [vmem:[%s1 + $0x500] sm:$0xff]
  %v194 = vld [vmem:[%s1 + $0x508] sm:$0xff]
  %v195 = vld [vmem:[%s1 + $0x510] sm:$0xff]
  %v196 = vld [vmem:[%s1 + $0x518] sm:$0xff]
  %v197 = vld [vmem:[%s1 + $0x520] sm:$0xff]
  %v198 = vld [vmem:[%s1 + $0x528] sm:$0xff]
  %v199 = vld [vmem:[%s1 + $0x530] sm:$0xff]
  %v200 = vld [vmem:[%s1 + $0x538] sm:$0xff]
  %v201 = vld [vmem:[%s1 + $0x540] sm:$0xff]
  %v202 = vld [vmem:[%s1 + $0x548] sm:$0xff]
  %v203 = vld [vmem:[%s1 + $0x550] sm:$0xff]
  %v204 = vld [vmem:[%s1 + $0x558] sm:$0xff]
  %v205 = vld [vmem:[%s1 + $0x560] sm:$0xff]
  %v206 = vld [vmem:[%s1 + $0x568] sm:$0xff]
  %v207 = vld [vmem:[%s1 + $0x570] sm:$0xff]
  %v208 = vld [vmem:[%s1 + $0x578] sm:$0xff]
  %v209 = vld [vmem:[%s1 + $0x580] sm:$0xff]
  %v210 = vld [vmem:[%s1 + $0x588] sm:$0xff]
  %v211 = vld [vmem:[%s1 + $0x590] sm:$0xff]
  %v212 = vld [vmem:[%s1 + $0x598] sm:$0xff]
  %v213 = vld [vmem:[%s1 + $0x5a0] sm:$0xff]
  %v214 = vld [vmem:[%s1 + $0x5a8] sm:$0xff]
  %v215 = vld [vmem:[%s1 + $0x5b0] sm:$0xff]
  %v216 = vld [vmem:[%s1 + $0x5b8] sm:$0xff]
  %v217 = vld [vmem:[%s1 + $0x5c0] sm:$0xff]
  %v218 = vld [vmem:[%s1 + $0x5c8] sm:$0xff]
  %v219 = vld [vmem:[%s1 + $0x5d0] sm:$0xff]
  %v220 = vld [vmem:[%s1 + $0x5d8] sm:$0xff]
  %v221 = vld [vmem:[%s1 + $0x5e0] sm:$0xff]
  %v222 = vld [vmem:[%s1 + $0x5e8] sm:$0xff]
  %v223 = vld [vmem:[%s1 + $0x5f0] sm:$0xff]
  %v224 = vld [vmem:[%s1 + $0x5f8] sm:$0xff]
  %v225 = vld [vmem:[%s1 + $0x600] sm:$0xff]
  %v226 = vld [vmem:[%s1 + $0x608] sm:$0xff]
  %v227 = vld [vmem:[%s1 + $0x610] sm:$0xff]
  %v228 = vld [vmem:[%s1 + $0x618] sm:$0xff]
  %v229 = vld [vmem:[%s1 + $0x620] sm:$0xff]
  %v230 = vld [vmem:[%s1 + $0x628] sm:$0xff]
  %v231 = vld [vmem:[%s1 + $0x630] sm:$0xff]
  %v232 = vld [vmem:[%s1 + $0x638] sm:$0xff]
  %v233 = vld [vmem:[%s1 + $0x640] sm:$0xff]
  %v234 = vld [vmem:[%s1 + $0x648] sm:$0xff]
  %v235 = vld [vmem:[%s1 + $0x650] sm:$0xff]
  %v236 = vld [vmem:[%s1 + $0x658] sm:$0xff]
  %v237 = vld [vmem:[%s1 + $0x660] sm:$0xff]
  %v238 = vld [vmem:[%s1 + $0x668] sm:$0xff]
  %v239 = vld [vmem:[%s1 + $0x670] sm:$0xff]
  %v240 = vld [vmem:[%s1 + $0x678] sm:$0xff]
  %v241 = vld [vmem:[%s1 + $0x680] sm:$0xff]
  %v242 = vld [vmem:[%s1 + $0x688] sm:$0xff]
  %v243 = vld [vmem:[%s1 + $0x690] sm:$0xff]
  %v244 = vld [vmem:[%s1 + $0x698] sm:$0xff]
  %v245 = vld [vmem:[%s1 + $0x6a0] sm:$0xff]
  %v246 = vld [vmem:[%s1 + $0x6a8] sm:$0xff]
  %v247 = vld [vmem:[%s1 + $0x6b0] sm:$0xff]
  %v248 = vld [vmem:[%s1 + $0x6b8] sm:$0xff]
  %v249 = vld [vmem:[%s1 + $0x6c0] sm:$0xff]
  %v250 = vld [vmem:[%s1 + $0x6c8] sm:$0xff]
  %v251 = vld [vmem:[%s1 + $0x6d0] sm:$0xff]
  %v252 = vld [vmem:[%s1 + $0x6d8] sm:$0xff]
  %v253 = vld [vmem:[%s1 + $0x6e0] sm:$0xff]
  %v254 = vld [vmem:[%s1 + $0x6e8] sm:$0xff]
  %v255 = vld [vmem:[%s1 + $0x6f0] sm:$0xff]
  %v256 = vld [vmem:[%s1 + $0x6f8] sm:$0xff]
  %v257 = vld [vmem:[%s1 + $0x700] sm:$0xff]
  %v258 = vld [vmem:[%s1 + $0x708] sm:$0xff]
  %v259 = vld [vmem:[%s1 + $0x710] sm:$0xff]
  %v260 = vld [vmem:[%s1 + $0x718] sm:$0xff]
  %v261 = vld [vmem:[%s1 + $0x720] sm:$0xff]
  %v262 = vld [vmem:[%s1 + $0x728] sm:$0xff]
  %v263 = vld [vmem:[%s1 + $0x730] sm:$0xff]
  %v264 = vld [vmem:[%s1 + $0x738] sm:$0xff]
  %v265 = vld [vmem:[%s1 + $0x740] sm:$0xff]
  %v266 = vld [vmem:[%s1 + $0x748] sm:$0xff]
  %v267 = vld [vmem:[%s1 + $0x750] sm:$0xff]
  %v268 = vld [vmem:[%s1 + $0x758] sm:$0xff]
  %v269 = vld [vmem:[%s1 + $0x760] sm:$0xff]
  %v270 = vld [vmem:[%s1 + $0x768] sm:$0xff]
  %v271 = vld [vmem:[%s1 + $0x770] sm:$0xff]
  %v272 = vld [vmem:[%s1 + $0x778] sm:$0xff]
  %v273 = vld [vmem:[%s1 + $0x780] sm:$0xff]
  %v274 = vld [vmem:[%s1 + $0x788] sm:$0xff]
  %v275 = vld [vmem:[%s1 + $0x790] sm:$0xff]
  %v276 = vld [vmem:[%s1 + $0x798] sm:$0xff]
  %v277 = vld [vmem:[%s1 + $0x7a0] sm:$0xff]
  %v278 = vld [vmem:[%s1 + $0x7a8] sm:$0xff]
  %v279 = vld [vmem:[%s1 + $0x7b0] sm:$0xff]
  %v280 = vld [vmem:[%s1 + $0x7b8] sm:$0xff]
  %v281 = vld [vmem:[%s1 + $0x7c0] sm:$0xff]
  %v282 = vld [vmem:[%s1 + $0x7c8] sm:$0xff]
  %v283 = vld [vmem:[%s1 + $0x7d0] sm:$0xff]
  %v284 = vld [vmem:[%s1 + $0x7d8] sm:$0xff]
  %v285 = vld [vmem:[%s1 + $0x7e0] sm:$0xff]
  %v286 = vld [vmem:[%s1 + $0x7e8] sm:$0xff]
  %v287 = vld [vmem:[%s1 + $0x7f0] sm:$0xff]
  %v288 = vld [vmem:[%s1 + $0x7f8] sm:$0xff]
  %v289 = vld [vmem:[%s1 + $0x800] sm:$0xff]
  %v290 = vld [vmem:[%s1 + $0x808] sm:$0xff]
  %v291 = vld [vmem:[%s1 + $0x810] sm:$0xff]
  %v292 = vld [vmem:[%s1 + $0x818] sm:$0xff]
  %v293 = vld [vmem:[%s1 + $0x820] sm:$0xff]
  %v294 = vld [vmem:[%s1 + $0x828] sm:$0xff]
  %v295 = vld [vmem:[%s1 + $0x830] sm:$0xff]
  %v296 = vld [vmem:[%s1 + $0x838] sm:$0xff]
  %v297 = vld [vmem:[%s1 + $0x840] sm:$0xff]
  %v298 = vld [vmem:[%s1 + $0x848] sm:$0xff]
  %v299 = vld [vmem:[%s1 + $0x850] sm:$0xff]
  %v300 = vld [vmem:[%s1 + $0x858] sm:$0xff]
  %v301 = vld [vmem:[%s1 + $0x860] sm:$0xff]
  %v302 = vld [vmem:[%s1 + $0x868] sm:$0xff]
  %v303 = vld [vmem:[%s1 + $0x870] sm:$0xff]
  %v304 = vld [vmem:[%s1 + $0x878] sm:$0xff]
  %v305 = vld [vmem:[%s1 + $0x880] sm:$0xff]
  %v306 = vld [vmem:[%s1 + $0x888] sm:$0xff]
  %v307 = vld [vmem:[%s1 + $0x890] sm:$0xff]
  %v308 = vld [vmem:[%s1 + $0x898] sm:$0xff]
  %v309 = vld [vmem:[%s1 + $0x8a0] sm:$0xff]
  %v310 = vld [vmem:[%s1 + $0x8a8] sm:$0xff]
  %v311 = vld [vmem:[%s1 + $0x8b0] sm:$0xff]
  %v312 = vld [vmem:[%s1 + $0x8b8] sm:$0xff]
  %v313 = vld [vmem:[%s1 + $0x8c0] sm:$0xff]
  %v314 = vld [vmem:[%s1 + $0x8c8] sm:$0xff]
  %v315 = vld [vmem:[%s1 + $0x8d0] sm:$0xff]
  %v316 = vld [vmem:[%s1 + $0x8d8] sm:$0xff]
  %v317 = vld [vmem:[%s1 + $0x8e0] sm:$0xff]
  %v318 = vld [vmem:[%s1 + $0x8e8] sm:$0xff]
  %v319 = vld [vmem:[%s1 + $0x8f0] sm:$0xff]
  %v320 = vld [vmem:[%s1 + $0x8f8] sm:$0xff]
  %v321 = vld [vmem:[%s1 + $0x900] sm:$0xff]
  %v322 = vld [vmem:[%s1 + $0x908] sm:$0xff]
  %v323 = vld [vmem:[%s1 + $0x910] sm:$0xff]
  %v324 = vld [vmem:[%s1 + $0x918] sm:$0xff]
  %v325 = vld [vmem:[%s1 + $0x920] sm:$0xff]
  %v326 = vld [vmem:[%s1 + $0x928] sm:$0xff]
  %v327 = vld [vmem:[%s1 + $0x930] sm:$0xff]
  %v328 = vld [vmem:[%s1 + $0x938] sm:$0xff]
  %v329 = vld [vmem:[%s1 + $0x940] sm:$0xff]
  %v330 = vld [vmem:[%s1 + $0x948] sm:$0xff]
  %v331 = vld [vmem:[%s1 + $0x950] sm:$0xff]
  %v332 = vld [vmem:[%s1 + $0x958] sm:$0xff]
  %v333 = vld [vmem:[%s1 + $0x960] sm:$0xff]
  %v334 = vld [vmem:[%s1 + $0x968] sm:$0xff]
  %v335 = vld [vmem:[%s1 + $0x970] sm:$0xff]
  %v336 = vld [vmem:[%s1 + $0x978] sm:$0xff]
  %v337 = vld [vmem:[%s1 + $0x980] sm:$0xff]
  %v338 = vld [vmem:[%s1 + $0x988] sm:$0xff]
  %v339 = vld [vmem:[%s1 + $0x990] sm:$0xff]
  %v340 = vld [vmem:[%s1 + $0x998] sm:$0xff]
  %v341 = vld [vmem:[%s1 + $0x9a0] sm:$0xff]
  %v342 = vld [vmem:[%s1 + $0x9a8] sm:$0xff]
  %v343 = vld [vmem:[%s1 + $0x9b0] sm:$0xff]
  %v344 = vld [vmem:[%s1 + $0x9b8] sm:$0xff]
  %v345 = vld [vmem:[%s1 + $0x9c0] sm:$0xff]
  %v346 = vld [vmem:[%s1 + $0x9c8] sm:$0xff]
  %v347 = vld [vmem:[%s1 + $0x9d0] sm:$0xff]
  %v348 = vld [vmem:[%s1 + $0x9d8] sm:$0xff]
  %v349 = vld [vmem:[%s1 + $0x9e0] sm:$0xff]
  %v350 = vld [vmem:[%s1 + $0x9e8] sm:$0xff]
  %v351 = vld [vmem:[%s1 + $0x9f0] sm:$0xff]
  %v352 = vld [vmem:[%s1 + $0x9f8] sm:$0xff]
  %v353 = vld [vmem:[%s1 + $0xa00] sm:$0xff]
  %v354 = vld [vmem:[%s1 + $0xa08] sm:$0xff]
  %v355 = vld [vmem:[%s1 + $0xa10] sm:$0xff]
  %v356 = vld [vmem:[%s1 + $0xa18] sm:$0xff]
  %v357 = vld [vmem:[%s1 + $0xa20] sm:$0xff]
  %v358 = vld [vmem:[%s1 + $0xa28] sm:$0xff]
  %v359 = vld [vmem:[%s1 + $0xa30] sm:$0xff]
  %v360 = vld [vmem:[%s1 + $0xa38] sm:$0xff]
  %v361 = vld [vmem:[%s1 + $0xa40] sm:$0xff]
  %v362 = vld [vmem:[%s1 + $0xa48] sm:$0xff]
  %v363 = vld [vmem:[%s1 + $0xa50] sm:$0xff]
  %v364 = vld [vmem:[%s1 + $0xa58] sm:$0xff]
  %v365 = vld [vmem:[%s1 + $0xa60] sm:$0xff]
  %v366 = vld [vmem:[%s1 + $0xa68] sm:$0xff]
  %v367 = vld [vmem:[%s1 + $0xa70] sm:$0xff]
  %v368 = vld [vmem:[%s1 + $0xa78] sm:$0xff]
  %v369 = vld [vmem:[%s1 + $0xa80] sm:$0xff]
  %v370 = vld [vmem:[%s1 + $0xa88] sm:$0xff]
  %v371 = vld [vmem:[%s1 + $0xa90] sm:$0xff]
  %v372 = vld [vmem:[%s1 + $0xa98] sm:$0xff]
  %v373 = vld [vmem:[%s1 + $0xaa0] sm:$0xff]
  %v374 = vld [vmem:[%s1 + $0xaa8] sm:$0xff]
  %v375 = vld [vmem:[%s1 + $0xab0] sm:$0xff]
  %v376 = vld [vmem:[%s1 + $0xab8] sm:$0xff]
  %v377 = vld [vmem:[%s1 + $0xac0] sm:$0xff]
  %v378 = vld [vmem:[%s1 + $0xac8] sm:$0xff]
  %v379 = vld [vmem:[%s1 + $0xad0] sm:$0xff]
  %v380 = vld [vmem:[%s1 + $0xad8] sm:$0xff]
  %v381 = vld [vmem:[%s1 + $0xae0] sm:$0xff]
  %v382 = vld [vmem:[%s1 + $0xae8] sm:$0xff]
  %v383 = vld [vmem:[%s1 + $0xaf0] sm:$0xff]
  %v384 = vld [vmem:[%s1 + $0xaf8] sm:$0xff]
  %v385 = vld [vmem:[%s1 + $0xb00] sm:$0xff]
  %v386 = vld [vmem:[%s1 + $0xb08] sm:$0xff]
  %v387 = vld [vmem:[%s1 + $0xb10] sm:$0xff]
  %v388 = vld [vmem:[%s1 + $0xb18] sm:$0xff]
  %v389 = vld [vmem:[%s1 + $0xb20] sm:$0xff]
  %v390 = vld [vmem:[%s1 + $0xb28] sm:$0xff]
  %v391 = vld [vmem:[%s1 + $0xb30] sm:$0xff]
  %v392 = vld [vmem:[%s1 + $0xb38] sm:$0xff]
  %v393 = vld [vmem:[%s1 + $0xb40] sm:$0xff]
  %v394 = vld [vmem:[%s1 + $0xb48] sm:$0xff]
  %v395 = vld [vmem:[%s1 + $0xb50] sm:$0xff]
  %v396 = vld [vmem:[%s1 + $0xb58] sm:$0xff]
  %v397 = vld [vmem:[%s1 + $0xb60] sm:$0xff]
  %v398 = vld [vmem:[%s1 + $0xb68] sm:$0xff]
  %v399 = vld [vmem:[%s1 + $0xb70] sm:$0xff]
  %v400 = vld [vmem:[%s1 + $0xb78] sm:$0xff]
  %v401 = vld [vmem:[%s1 + $0xb80] sm:$0xff]
  %v402 = vld [vmem:[%s1 + $0xb88] sm:$0xff]
  %v403 = vld [vmem:[%s1 + $0xb90] sm:$0xff]
  %v404 = vld [vmem:[%s1 + $0xb98] sm:$0xff]
  %v405 = vld [vmem:[%s1 + $0xba0] sm:$0xff]
  %v406 = vld [vmem:[%s1 + $0xba8] sm:$0xff]
  %v407 = vld [vmem:[%s1 + $0xbb0] sm:$0xff]
  %v408 = vld [vmem:[%s1 + $0xbb8] sm:$0xff]
  %v409 = vld [vmem:[%s1 + $0xbc0] sm:$0xff]
  %v410 = vld [vmem:[%s1 + $0xbc8] sm:$0xff]
  %v411 = vld [vmem:[%s1 + $0xbd0] sm:$0xff]
  %v412 = vld [vmem:[%s1 + $0xbd8] sm:$0xff]
  %v413 = vld [vmem:[%s1 + $0xbe0] sm:$0xff]
  %v414 = vld [vmem:[%s1 + $0xbe8] sm:$0xff]
  %v415 = vld [vmem:[%s1 + $0xbf0] sm:$0xff]
  %v416 = vld [vmem:[%s1 + $0xbf8] sm:$0xff]
  %v417 = vld [vmem:[%s1 + $0xc00] sm:$0xff]
  %v418 = vld [vmem:[%s1 + $0xc08] sm:$0xff]
  %v419 = vld [vmem:[%s1 + $0xc10] sm:$0xff]
  %v420 = vld [vmem:[%s1 + $0xc18] sm:$0xff]
  %v421 = vld [vmem:[%s1 + $0xc20] sm:$0xff]
  %v422 = vld [vmem:[%s1 + $0xc28] sm:$0xff]
  %v423 = vld [vmem:[%s1 + $0xc30] sm:$0xff]
  %v424 = vld [vmem:[%s1 + $0xc38] sm:$0xff]
  %v425 = vld [vmem:[%s1 + $0xc40] sm:$0xff]
  %v426 = vld [vmem:[%s1 + $0xc48] sm:$0xff]
  %v427 = vld [vmem:[%s1 + $0xc50] sm:$0xff]
  %v428 = vld [vmem:[%s1 + $0xc58] sm:$0xff]
  %v429 = vld [vmem:[%s1 + $0xc60] sm:$0xff]
  %v430 = vld [vmem:[%s1 + $0xc68] sm:$0xff]
  %v431 = vld [vmem:[%s1 + $0xc70] sm:$0xff]
  %v432 = vld [vmem:[%s1 + $0xc78] sm:$0xff]
  %v433 = vld [vmem:[%s1 + $0xc80] sm:$0xff]
  %v434 = vld [vmem:[%s1 + $0xc88] sm:$0xff]
  %v435 = vld [vmem:[%s1 + $0xc90] sm:$0xff]
  %v436 = vld [vmem:[%s1 + $0xc98] sm:$0xff]
  %v437 = vld [vmem:[%s1 + $0xca0] sm:$0xff]
  %v438 = vld [vmem:[%s1 + $0xca8] sm:$0xff]
  %v439 = vld [vmem:[%s1 + $0xcb0] sm:$0xff]
  %v440 = vld [vmem:[%s1 + $0xcb8] sm:$0xff]
  %v441 = vld [vmem:[%s1 + $0xcc0] sm:$0xff]
  %v442 = vld [vmem:[%s1 + $0xcc8] sm:$0xff]
  %v443 = vld [vmem:[%s1 + $0xcd0] sm:$0xff]
  %v444 = vld [vmem:[%s1 + $0xcd8] sm:$0xff]
  %v445 = vld [vmem:[%s1 + $0xce0] sm:$0xff]
  %v446 = vld [vmem:[%s1 + $0xce8] sm:$0xff]
  %v447 = vld [vmem:[%s1 + $0xcf0] sm:$0xff]
  %v448 = vld [vmem:[%s1 + $0xcf8] sm:$0xff]
  %v449 = vld [vmem:[%s1 + $0xd00] sm:$0xff]
  %v450 = vld [vmem:[%s1 + $0xd08] sm:$0xff]
  %v451 = vld [vmem:[%s1 + $0xd10] sm:$0xff]
  %v452 = vld [vmem:[%s1 + $0xd18] sm:$0xff]
  %v453 = vld [vmem:[%s1 + $0xd20] sm:$0xff]
  %v454 = vld [vmem:[%s1 + $0xd28] sm:$0xff]
  %v455 = vld [vmem:[%s1 + $0xd30] sm:$0xff]
  %v456 = vld [vmem:[%s1 + $0xd38] sm:$0xff]
  %v457 = vld [vmem:[%s1 + $0xd40] sm:$0xff]
  %v458 = vld [vmem:[%s1 + $0xd48] sm:$0xff]
  %v459 = vld [vmem:[%s1 + $0xd50] sm:$0xff]
  %v460 = vld [vmem:[%s1 + $0xd58] sm:$0xff]
  %v461 = vld [vmem:[%s1 + $0xd60] sm:$0xff]
  %v462 = vld [vmem:[%s1 + $0xd68] sm:$0xff]
  %v463 = vld [vmem:[%s1 + $0xd70] sm:$0xff]
  %v464 = vld [vmem:[%s1 + $0xd78] sm:$0xff]
  %v465 = vld [vmem:[%s1 + $0xd80] sm:$0xff]
  %v466 = vld [vmem:[%s1 + $0xd88] sm:$0xff]
  %v467 = vld [vmem:[%s1 + $0xd90] sm:$0xff]
  %v468 = vld [vmem:[%s1 + $0xd98] sm:$0xff]
  %v469 = vld [vmem:[%s1 + $0xda0] sm:$0xff]
  %v470 = vld [vmem:[%s1 + $0xda8] sm:$0xff]
  %v471 = vld [vmem:[%s1 + $0xdb0] sm:$0xff]
  %v472 = vld [vmem:[%s1 + $0xdb8] sm:$0xff]
  %v473 = vld [vmem:[%s1 + $0xdc0] sm:$0xff]
  %v474 = vld [vmem:[%s1 + $0xdc8] sm:$0xff]
  %v475 = vld [vmem:[%s1 + $0xdd0] sm:$0xff]
  %v476 = vld [vmem:[%s1 + $0xdd8] sm:$0xff]
  %v477 = vld [vmem:[%s1 + $0xde0] sm:$0xff]
  %v478 = vld [vmem:[%s1 + $0xde8] sm:$0xff]
  %v479 = vld [vmem:[%s1 + $0xdf0] sm:$0xff]
  %v480 = vld [vmem:[%s1 + $0xdf8] sm:$0xff]
  %v481 = vld [vmem:[%s1 + $0xe00] sm:$0xff]
  %v482 = vld [vmem:[%s1 + $0xe08] sm:$0xff]
  %v483 = vld [vmem:[%s1 + $0xe10] sm:$0xff]
  %v484 = vld [vmem:[%s1 + $0xe18] sm:$0xff]
  %v485 = vld [vmem:[%s1 + $0xe20] sm:$0xff]
  %v486 = vld [vmem:[%s1 + $0xe28] sm:$0xff]
  %v487 = vld [vmem:[%s1 + $0xe30] sm:$0xff]
  %v488 = vld [vmem:[%s1 + $0xe38] sm:$0xff]
  %v489 = vld [vmem:[%s1 + $0xe40] sm:$0xff]
  %v490 = vld [vmem:[%s1 + $0xe48] sm:$0xff]
  %v491 = vld [vmem:[%s1 + $0xe50] sm:$0xff]
  %v492 = vld [vmem:[%s1 + $0xe58] sm:$0xff]
  %v493 = vld [vmem:[%s1 + $0xe60] sm:$0xff]
  %v494 = vld [vmem:[%s1 + $0xe68] sm:$0xff]
  %v495 = vld [vmem:[%s1 + $0xe70] sm:$0xff]
  %v496 = vld [vmem:[%s1 + $0xe78] sm:$0xff]
  %v497 = vld [vmem:[%s1 + $0xe80] sm:$0xff]
  %v498 = vld [vmem:[%s1 + $0xe88] sm:$0xff]
  %v499 = vld [vmem:[%s1 + $0xe90] sm:$0xff]
  %v500 = vld [vmem:[%s1 + $0xe98] sm:$0xff]
  %v501 = vld [vmem:[%s1 + $0xea0] sm:$0xff]
  %v502 = vld [vmem:[%s1 + $0xea8] sm:$0xff]
  %v503 = vld [vmem:[%s1 + $0xeb0] sm:$0xff]
  %v504 = vld [vmem:[%s1 + $0xeb8] sm:$0xff]
  %v505 = vld [vmem:[%s1 + $0xec0] sm:$0xff]
  %v506 = vld [vmem:[%s1 + $0xec8] sm:$0xff]
  %v507 = vld [vmem:[%s1 + $0xed0] sm:$0xff]
  %v508 = vld [vmem:[%s1 + $0xed8] sm:$0xff]
  %v509 = vld [vmem:[%s1 + $0xee0] sm:$0xff]
  %v510 = vld [vmem:[%s1 + $0xee8] sm:$0xff]
  %v511 = vld [vmem:[%s1 + $0xef0] sm:$0xff]
  %v512 = vld [vmem:[%s1 + $0xef8] sm:$0xff]
  %v513 = vld [vmem:[%s1 + $0xf00] sm:$0xff]
  %v514 = vld [vmem:[%s1 + $0xf08] sm:$0xff]
  %v515 = vld [vmem:[%s1 + $0xf10] sm:$0xff]
  %v516 = vld [vmem:[%s1 + $0xf18] sm:$0xff]
  %v517 = vld [vmem:[%s1 + $0xf20] sm:$0xff]
  %v518 = vld [vmem:[%s1 + $0xf28] sm:$0xff]
  %v519 = vld [vmem:[%s1 + $0xf30] sm:$0xff]
  %v520 = vld [vmem:[%s1 + $0xf38] sm:$0xff]
  %v521 = vld [vmem:[%s1 + $0xf40] sm:$0xff]
  %v522 = vld [vmem:[%s1 + $0xf48] sm:$0xff]
  %v523 = vld [vmem:[%s1 + $0xf50] sm:$0xff]
  %v524 = vld [vmem:[%s1 + $0xf58] sm:$0xff]
  %v525 = vld [vmem:[%s1 + $0xf60] sm:$0xff]
  %v526 = vld [vmem:[%s1 + $0xf68] sm:$0xff]
  %v527 = vld [vmem:[%s1 + $0xf70] sm:$0xff]
  %v528 = vld [vmem:[%s1 + $0xf78] sm:$0xff]
  %v529 = vld [vmem:[%s1 + $0xf80] sm:$0xff]
  %v530 = vld [vmem:[%s1 + $0xf88] sm:$0xff]
  %v531 = vld [vmem:[%s1 + $0xf90] sm:$0xff]
  %v532 = vld [vmem:[%s1 + $0xf98] sm:$0xff]
  %v533 = vld [vmem:[%s1 + $0xfa0] sm:$0xff]
  %v534 = vld [vmem:[%s1 + $0xfa8] sm:$0xff]
  %v535 = vld [vmem:[%s1 + $0xfb0] sm:$0xff]
  %v536 = vld [vmem:[%s1 + $0xfb8] sm:$0xff]
  %v537 = vld [vmem:[%s1 + $0xfc0] sm:$0xff]
  %v538 = vld [vmem:[%s1 + $0xfc8] sm:$0xff]
  %v539 = vld [vmem:[%s1 + $0xfd0] sm:$0xff]
  %v540 = vld [vmem:[%s1 + $0xfd8] sm:$0xff]
  %v541 = vld [vmem:[%s1 + $0xfe0] sm:$0xff]
  %v542 = vld [vmem:[%s1 + $0xfe8] sm:$0xff]
  %v543 = vld [vmem:[%s1 + $0xff0] sm:$0xff]
  %v544 = vld [vmem:[%s1 + $0xff8] sm:$0xff]
  %v545 = vld [vmem:[%s2] sm:$0xff]
  %v546 = vld [vmem:[%s2 + $0x8] sm:$0xff]
  %v549 = vlaneseq
  %v550 = vshrl.u32 %v549, 7
  %v551 = vsub.s32 0, %v550
  %v552 = vrot.slane %v545, %v551
  %v553 = vlaneseq
  %v554 = vshrl.u32 %v553, 7
  %v555 = vsub.s32 1, %v554
  %v556 = vrot.slane %v545, %v555
  %v557 = vlaneseq
  %v558 = vshrl.u32 %v557, 7
  %v559 = vsub.s32 2, %v558
  %v560 = vrot.slane %v545, %v559
  %v561 = vlaneseq
  %v562 = vshrl.u32 %v561, 7
  %v563 = vsub.s32 3, %v562
  %v564 = vrot.slane %v545, %v563
  %v565 = vlaneseq
  %v566 = vshrl.u32 %v565, 7
  %v567 = vsub.s32 4, %v566
  %v568 = vrot.slane %v545, %v567
  %v569 = vlaneseq
  %v570 = vshrl.u32 %v569, 7
  %v571 = vsub.s32 5, %v570
  %v572 = vrot.slane %v545, %v571
  %v573 = vlaneseq
  %v574 = vshrl.u32 %v573, 7
  %v575 = vsub.s32 6, %v574
  %v576 = vrot.slane %v545, %v575
  %v577 = vlaneseq
  %v578 = vshrl.u32 %v577, 7
  %v579 = vsub.s32 7, %v578
  %v580 = vrot.slane %v545, %v579
  %v581 = vlaneseq
  %v582 = vshrl.u32 %v581, 7
  %v583 = vsub.s32 0, %v582
  %v584 = vrot.slane %v546, %v583
  %v585 = vlaneseq
  %v586 = vshrl.u32 %v585, 7
  %v587 = vsub.s32 1, %v586
  %v588 = vrot.slane %v546, %v587
  %v589 = vlaneseq
  %v590 = vshrl.u32 %v589, 7
  %v591 = vsub.s32 2, %v590
  %v592 = vrot.slane %v546, %v591
  %v593 = vlaneseq
  %v594 = vshrl.u32 %v593, 7
  %v595 = vsub.s32 3, %v594
  %v596 = vrot.slane %v546, %v595
  %v597 = vlaneseq
  %v598 = vshrl.u32 %v597, 7
  %v599 = vsub.s32 4, %v598
  %v600 = vrot.slane %v546, %v599
  %v601 = vlaneseq
  %v602 = vshrl.u32 %v601, 7
  %v603 = vsub.s32 5, %v602
  %v604 = vrot.slane %v546, %v603
  %v605 = vlaneseq
  %v606 = vshrl.u32 %v605, 7
  %v607 = vsub.s32 6, %v606
  %v608 = vrot.slane %v546, %v607
  %v609 = vlaneseq
  %v610 = vshrl.u32 %v609, 7
  %v611 = vsub.s32 7, %v610
  %v612 = vrot.slane %v546, %v611
  %v631 = vunpack.c.l.s4 1983009808
  %v632 = vunpack.c.0.s8 %v631
  %v633 = vlaneseq
  %v634 = vshrl.u32 %v633, 7
  %v635 = vsub.s32 %v632, %v634
  %v636 = vrot.slane %v32, %v635
  %v637 = vcombine.high %v636, %v636
  %640 = vmatprep.subr.mxu0 %v34
  %641 = vmatpush1.msra.mxu0 %v33
  %642 = vmatprep.subr.mxu0 %v50
  %643 = vmatpush1.msra.mxu0 %v49
  %644 = vmatprep.subr.mxu0 %v66
  %645 = vmatpush1.msra.mxu0 %v65
  %646 = vmatprep.subr.mxu0 %v82
  %647 = vmatpush1.msra.mxu0 %v81
  %648 = vmatprep.subr.mxu0 %v98
  %649 = vmatpush1.msra.mxu0 %v97
  %650 = vmatprep.subr.mxu0 %v114
  %651 = vmatpush1.msra.mxu0 %v113
  %652 = vmatprep.subr.mxu0 %v130
  %653 = vmatpush1.msra.mxu0 %v129
  %654 = vmatprep.subr.mxu0 %v146
  %655 = vmatpush1.msra.mxu0 %v145
  %656 = vmatprep.subr.mxu0 %v162
  %657 = vmatpush1.msra.mxu0 %v161
  %658 = vmatprep.subr.mxu0 %v178
  %659 = vmatpush1.msra.mxu0 %v177
  %660 = vmatprep.subr.mxu0 %v194
  %661 = vmatpush1.msra.mxu0 %v193
  %662 = vmatprep.subr.mxu0 %v210
  %663 = vmatpush1.msra.mxu0 %v209
  %664 = vmatprep.subr.mxu0 %v226
  %665 = vmatpush1.msra.mxu0 %v225
  %666 = vmatprep.subr.mxu0 %v242
  %667 = vmatpush1.msra.mxu0 %v241
  %668 = vmatprep.subr.mxu0 %v258
  %669 = vmatpush1.msra.mxu0 %v257
  %670 = vmatprep.subr.mxu0 %v274
  %671 = vmatpush1.msra.mxu0 %v273
  %672 = vmatprep.subr.mxu0 %v290
  %673 = vmatpush1.msra.mxu0 %v289
  %674 = vmatprep.subr.mxu0 %v306
  %675 = vmatpush1.msra.mxu0 %v305
  %676 = vmatprep.subr.mxu0 %v322
  %677 = vmatpush1.msra.mxu0 %v321
  %678 = vmatprep.subr.mxu0 %v338
  %679 = vmatpush1.msra.mxu0 %v337
  %680 = vmatprep.subr.mxu0 %v354
  %681 = vmatpush1.msra.mxu0 %v353
  %682 = vmatprep.subr.mxu0 %v370
  %683 = vmatpush1.msra.mxu0 %v369
  %684 = vmatprep.subr.mxu0 %v386
  %685 = vmatpush1.msra.mxu0 %v385
  %686 = vmatprep.subr.mxu0 %v402
  %687 = vmatpush1.msra.mxu0 %v401
  %688 = vmatprep.subr.mxu0 %v418
  %689 = vmatpush1.msra.mxu0 %v417
  %690 = vmatprep.subr.mxu0 %v434
  %691 = vmatpush1.msra.mxu0 %v433
  %692 = vmatprep.subr.mxu0 %v450
  %693 = vmatpush1.msra.mxu0 %v449
  %694 = vmatprep.subr.mxu0 %v466
  %695 = vmatpush1.msra.mxu0 %v465
  %696 = vmatprep.subr.mxu0 %v482
  %697 = vmatpush1.msra.mxu0 %v481
  %698 = vmatprep.subr.mxu0 %v498
  %699 = vmatpush1.msra.mxu0 %v497
  %700 = vmatprep.subr.mxu0 %v514
  %701 = vmatpush1.msra.mxu0 %v513
  %702 = vmatprep.subr.mxu0 %v530
  %703 = vmatpush1.msra.mxu0 %v529
  %704 = vmatprep.mubr.f32.mxu0 %v637
  %705 = vmatmul.mubr.f32.gmra.mrb[0].mxu0 %v636
  %v706 = vpop.f32.mrb[0].mxu0
  %v707 = vadd.f32 %v552, %v706
  %v708 = vpop.f32.mrb[0].mxu0
  %v709 = vadd.f32 %v556, %v708
  %710 = vdwg.mxu0
  %711 = vmatprep.subr.mxu0 %v36
  %712 = vmatpush1.msra.mxu0 %v35
  %713 = vmatprep.subr.mxu0 %v52
  %714 = vmatpush1.msra.mxu0 %v51
  %715 = vmatprep.subr.mxu0 %v68
  %716 = vmatpush1.msra.mxu0 %v67
  %717 = vmatprep.subr.mxu0 %v84
  %718 = vmatpush1.msra.mxu0 %v83
  %719 = vmatprep.subr.mxu0 %v100
  %720 = vmatpush1.msra.mxu0 %v99
  %721 = vmatprep.subr.mxu0 %v116
  %722 = vmatpush1.msra.mxu0 %v115
  %723 = vmatprep.subr.mxu0 %v132
  %724 = vmatpush1.msra.mxu0 %v131
  %725 = vmatprep.subr.mxu0 %v148
  %726 = vmatpush1.msra.mxu0 %v147
  %727 = vmatprep.subr.mxu0 %v164
  %728 = vmatpush1.msra.mxu0 %v163
  %729 = vmatprep.subr.mxu0 %v180
  %730 = vmatpush1.msra.mxu0 %v179
  %731 = vmatprep.subr.mxu0 %v196
  %732 = vmatpush1.msra.mxu0 %v195
  %733 = vmatprep.subr.mxu0 %v212
  %734 = vmatpush1.msra.mxu0 %v211
  %735 = vmatprep.subr.mxu0 %v228
  %736 = vmatpush1.msra.mxu0 %v227
  %737 = vmatprep.subr.mxu0 %v244
  %738 = vmatpush1.msra.mxu0 %v243
  %739 = vmatprep.subr.mxu0 %v260
  %740 = vmatpush1.msra.mxu0 %v259
  %741 = vmatprep.subr.mxu0 %v276
  %742 = vmatpush1.msra.mxu0 %v275
  %743 = vmatprep.subr.mxu0 %v292
  %744 = vmatpush1.msra.mxu0 %v291
  %745 = vmatprep.subr.mxu0 %v308
  %746 = vmatpush1.msra.mxu0 %v307
  %747 = vmatprep.subr.mxu0 %v324
  %748 = vmatpush1.msra.mxu0 %v323
  %749 = vmatprep.subr.mxu0 %v340
  %750 = vmatpush1.msra.mxu0 %v339
  %751 = vmatprep.subr.mxu0 %v356
  %752 = vmatpush1.msra.mxu0 %v355
  %753 = vmatprep.subr.mxu0 %v372
  %754 = vmatpush1.msra.mxu0 %v371
  %755 = vmatprep.subr.mxu0 %v388
  %756 = vmatpush1.msra.mxu0 %v387
  %757 = vmatprep.subr.mxu0 %v404
  %758 = vmatpush1.msra.mxu0 %v403
  %759 = vmatprep.subr.mxu0 %v420
  %760 = vmatpush1.msra.mxu0 %v419
  %761 = vmatprep.subr.mxu0 %v436
  %762 = vmatpush1.msra.mxu0 %v435
  %763 = vmatprep.subr.mxu0 %v452
  %764 = vmatpush1.msra.mxu0 %v451
  %765 = vmatprep.subr.mxu0 %v468
  %766 = vmatpush1.msra.mxu0 %v467
  %767 = vmatprep.subr.mxu0 %v484
  %768 = vmatpush1.msra.mxu0 %v483
  %769 = vmatprep.subr.mxu0 %v500
  %770 = vmatpush1.msra.mxu0 %v499
  %771 = vmatprep.subr.mxu0 %v516
  %772 = vmatpush1.msra.mxu0 %v515
  %773 = vmatprep.subr.mxu0 %v532
  %774 = vmatpush1.msra.mxu0 %v531
  %775 = vmatprep.mubr.f32.mxu0 %v637
  %776 = vmatmul.mubr.f32.gmra.mrb[0].mxu0 %v636
  %v777 = vpop.f32.mrb[0].mxu0
  %v778 = vadd.f32 %v560, %v777
  %v779 = vpop.f32.mrb[0].mxu0
  %v780 = vadd.f32 %v564, %v779
  %781 = vdwg.mxu0
  %782 = vmatprep.subr.mxu0 %v38
  %783 = vmatpush1.msra.mxu0 %v37
  %784 = vmatprep.subr.mxu0 %v54
  %785 = vmatpush1.msra.mxu0 %v53
  %786 = vmatprep.subr.mxu0 %v70
  %787 = vmatpush1.msra.mxu0 %v69
  %788 = vmatprep.subr.mxu0 %v86
  %789 = vmatpush1.msra.mxu0 %v85
  %790 = vmatprep.subr.mxu0 %v102
  %791 = vmatpush1.msra.mxu0 %v101
  %792 = vmatprep.subr.mxu0 %v118
  %793 = vmatpush1.msra.mxu0 %v117
  %794 = vmatprep.subr.mxu0 %v134
  %795 = vmatpush1.msra.mxu0 %v133
  %796 = vmatprep.subr.mxu0 %v150
  %797 = vmatpush1.msra.mxu0 %v149
  %798 = vmatprep.subr.mxu0 %v166
  %799 = vmatpush1.msra.mxu0 %v165
  %800 = vmatprep.subr.mxu0 %v182
  %801 = vmatpush1.msra.mxu0 %v181
  %802 = vmatprep.subr.mxu0 %v198
  %803 = vmatpush1.msra.mxu0 %v197
  %804 = vmatprep.subr.mxu0 %v214
  %805 = vmatpush1.msra.mxu0 %v213
  %806 = vmatprep.subr.mxu0 %v230
  %807 = vmatpush1.msra.mxu0 %v229
  %808 = vmatprep.subr.mxu0 %v246
  %809 = vmatpush1.msra.mxu0 %v245
  %810 = vmatprep.subr.mxu0 %v262
  %811 = vmatpush1.msra.mxu0 %v261
  %812 = vmatprep.subr.mxu0 %v278
  %813 = vmatpush1.msra.mxu0 %v277
  %814 = vmatprep.subr.mxu0 %v294
  %815 = vmatpush1.msra.mxu0 %v293
  %816 = vmatprep.subr.mxu0 %v310
  %817 = vmatpush1.msra.mxu0 %v309
  %818 = vmatprep.subr.mxu0 %v326
  %819 = vmatpush1.msra.mxu0 %v325
  %820 = vmatprep.subr.mxu0 %v342
  %821 = vmatpush1.msra.mxu0 %v341
  %822 = vmatprep.subr.mxu0 %v358
  %823 = vmatpush1.msra.mxu0 %v357
  %824 = vmatprep.subr.mxu0 %v374
  %825 = vmatpush1.msra.mxu0 %v373
  %826 = vmatprep.subr.mxu0 %v390
  %827 = vmatpush1.msra.mxu0 %v389
  %828 = vmatprep.subr.mxu0 %v406
  %829 = vmatpush1.msra.mxu0 %v405
  %830 = vmatprep.subr.mxu0 %v422
  %831 = vmatpush1.msra.mxu0 %v421
  %832 = vmatprep.subr.mxu0 %v438
  %833 = vmatpush1.msra.mxu0 %v437
  %834 = vmatprep.subr.mxu0 %v454
  %835 = vmatpush1.msra.mxu0 %v453
  %836 = vmatprep.subr.mxu0 %v470
  %837 = vmatpush1.msra.mxu0 %v469
  %838 = vmatprep.subr.mxu0 %v486
  %839 = vmatpush1.msra.mxu0 %v485
  %840 = vmatprep.subr.mxu0 %v502
  %841 = vmatpush1.msra.mxu0 %v501
  %842 = vmatprep.subr.mxu0 %v518
  %843 = vmatpush1.msra.mxu0 %v517
  %844 = vmatprep.subr.mxu0 %v534
  %845 = vmatpush1.msra.mxu0 %v533
  %846 = vmatprep.mubr.f32.mxu0 %v637
  %847 = vmatmul.mubr.f32.gmra.mrb[0].mxu0 %v636
  %v848 = vpop.f32.mrb[0].mxu0
  %v849 = vadd.f32 %v568, %v848
  %v850 = vpop.f32.mrb[0].mxu0
  %v851 = vadd.f32 %v572, %v850
  %852 = vdwg.mxu0
  %853 = vmatprep.subr.mxu0 %v40
  %854 = vmatpush1.msra.mxu0 %v39
  %855 = vmatprep.subr.mxu0 %v56
  %856 = vmatpush1.msra.mxu0 %v55
  %857 = vmatprep.subr.mxu0 %v72
  %858 = vmatpush1.msra.mxu0 %v71
  %859 = vmatprep.subr.mxu0 %v88
  %860 = vmatpush1.msra.mxu0 %v87
  %861 = vmatprep.subr.mxu0 %v104
  %862 = vmatpush1.msra.mxu0 %v103
  %863 = vmatprep.subr.mxu0 %v120
  %864 = vmatpush1.msra.mxu0 %v119
  %865 = vmatprep.subr.mxu0 %v136
  %866 = vmatpush1.msra.mxu0 %v135
  %867 = vmatprep.subr.mxu0 %v152
  %868 = vmatpush1.msra.mxu0 %v151
  %869 = vmatprep.subr.mxu0 %v168
  %870 = vmatpush1.msra.mxu0 %v167
  %871 = vmatprep.subr.mxu0 %v184
  %872 = vmatpush1.msra.mxu0 %v183
  %873 = vmatprep.subr.mxu0 %v200
  %874 = vmatpush1.msra.mxu0 %v199
  %875 = vmatprep.subr.mxu0 %v216
  %876 = vmatpush1.msra.mxu0 %v215
  %877 = vmatprep.subr.mxu0 %v232
  %878 = vmatpush1.msra.mxu0 %v231
  %879 = vmatprep.subr.mxu0 %v248
  %880 = vmatpush1.msra.mxu0 %v247
  %881 = vmatprep.subr.mxu0 %v264
  %882 = vmatpush1.msra.mxu0 %v263
  %883 = vmatprep.subr.mxu0 %v280
  %884 = vmatpush1.msra.mxu0 %v279
  %885 = vmatprep.subr.mxu0 %v296
  %886 = vmatpush1.msra.mxu0 %v295
  %887 = vmatprep.subr.mxu0 %v312
  %888 = vmatpush1.msra.mxu0 %v311
  %889 = vmatprep.subr.mxu0 %v328
  %890 = vmatpush1.msra.mxu0 %v327
  %891 = vmatprep.subr.mxu0 %v344
  %892 = vmatpush1.msra.mxu0 %v343
  %893 = vmatprep.subr.mxu0 %v360
  %894 = vmatpush1.msra.mxu0 %v359
  %895 = vmatprep.subr.mxu0 %v376
  %896 = vmatpush1.msra.mxu0 %v375
  %897 = vmatprep.subr.mxu0 %v392
  %898 = vmatpush1.msra.mxu0 %v391
  %899 = vmatprep.subr.mxu0 %v408
  %900 = vmatpush1.msra.mxu0 %v407
  %901 = vmatprep.subr.mxu0 %v424
  %902 = vmatpush1.msra.mxu0 %v423
  %903 = vmatprep.subr.mxu0 %v440
  %904 = vmatpush1.msra.mxu0 %v439
  %905 = vmatprep.subr.mxu0 %v456
  %906 = vmatpush1.msra.mxu0 %v455
  %907 = vmatprep.subr.mxu0 %v472
  %908 = vmatpush1.msra.mxu0 %v471
  %909 = vmatprep.subr.mxu0 %v488
  %910 = vmatpush1.msra.mxu0 %v487
  %911 = vmatprep.subr.mxu0 %v504
  %912 = vmatpush1.msra.mxu0 %v503
  %913 = vmatprep.subr.mxu0 %v520
  %914 = vmatpush1.msra.mxu0 %v519
  %915 = vmatprep.subr.mxu0 %v536
  %916 = vmatpush1.msra.mxu0 %v535
  %917 = vmatprep.mubr.f32.mxu0 %v637
  %918 = vmatmul.mubr.f32.gmra.mrb[0].mxu0 %v636
  %v919 = vpop.f32.mrb[0].mxu0
  %v920 = vadd.f32 %v576, %v919
  %v921 = vpop.f32.mrb[0].mxu0
  %v922 = vadd.f32 %v580, %v921
  %923 = vdwg.mxu0
  %924 = vmatprep.subr.mxu0 %v42
  %925 = vmatpush1.msra.mxu0 %v41
  %926 = vmatprep.subr.mxu0 %v58
  %927 = vmatpush1.msra.mxu0 %v57
  %928 = vmatprep.subr.mxu0 %v74
  %929 = vmatpush1.msra.mxu0 %v73
  %930 = vmatprep.subr.mxu0 %v90
  %931 = vmatpush1.msra.mxu0 %v89
  %932 = vmatprep.subr.mxu0 %v106
  %933 = vmatpush1.msra.mxu0 %v105
  %934 = vmatprep.subr.mxu0 %v122
  %935 = vmatpush1.msra.mxu0 %v121
  %936 = vmatprep.subr.mxu0 %v138
  %937 = vmatpush1.msra.mxu0 %v137
  %938 = vmatprep.subr.mxu0 %v154
  %939 = vmatpush1.msra.mxu0 %v153
  %940 = vmatprep.subr.mxu0 %v170
  %941 = vmatpush1.msra.mxu0 %v169
  %942 = vmatprep.subr.mxu0 %v186
  %943 = vmatpush1.msra.mxu0 %v185
  %944 = vmatprep.subr.mxu0 %v202
  %945 = vmatpush1.msra.mxu0 %v201
  %946 = vmatprep.subr.mxu0 %v218
  %947 = vmatpush1.msra.mxu0 %v217
  %948 = vmatprep.subr.mxu0 %v234
  %949 = vmatpush1.msra.mxu0 %v233
  %950 = vmatprep.subr.mxu0 %v250
  %951 = vmatpush1.msra.mxu0 %v249
  %952 = vmatprep.subr.mxu0 %v266
  %953 = vmatpush1.msra.mxu0 %v265
  %954 = vmatprep.subr.mxu0 %v282
  %955 = vmatpush1.msra.mxu0 %v281
  %956 = vmatprep.subr.mxu0 %v298
  %957 = vmatpush1.msra.mxu0 %v297
  %958 = vmatprep.subr.mxu0 %v314
  %959 = vmatpush1.msra.mxu0 %v313
  %960 = vmatprep.subr.mxu0 %v330
  %961 = vmatpush1.msra.mxu0 %v329
  %962 = vmatprep.subr.mxu0 %v346
  %963 = vmatpush1.msra.mxu0 %v345
  %964 = vmatprep.subr.mxu0 %v362
  %965 = vmatpush1.msra.mxu0 %v361
  %966 = vmatprep.subr.mxu0 %v378
  %967 = vmatpush1.msra.mxu0 %v377
  %968 = vmatprep.subr.mxu0 %v394
  %969 = vmatpush1.msra.mxu0 %v393
  %970 = vmatprep.subr.mxu0 %v410
  %971 = vmatpush1.msra.mxu0 %v409
  %972 = vmatprep.subr.mxu0 %v426
  %973 = vmatpush1.msra.mxu0 %v425
  %974 = vmatprep.subr.mxu0 %v442
  %975 = vmatpush1.msra.mxu0 %v441
  %976 = vmatprep.subr.mxu0 %v458
  %977 = vmatpush1.msra.mxu0 %v457
  %978 = vmatprep.subr.mxu0 %v474
  %979 = vmatpush1.msra.mxu0 %v473
  %980 = vmatprep.subr.mxu0 %v490
  %981 = vmatpush1.msra.mxu0 %v489
  %982 = vmatprep.subr.mxu0 %v506
  %983 = vmatpush1.msra.mxu0 %v505
  %984 = vmatprep.subr.mxu0 %v522
  %985 = vmatpush1.msra.mxu0 %v521
  %986 = vmatprep.subr.mxu0 %v538
  %987 = vmatpush1.msra.mxu0 %v537
  %988 = vmatprep.mubr.f32.mxu0 %v637
  %989 = vmatmul.mubr.f32.gmra.mrb[0].mxu0 %v636
  %v990 = vpop.f32.mrb[0].mxu0
  %v991 = vadd.f32 %v584, %v990
  %v992 = vpop.f32.mrb[0].mxu0
  %v993 = vadd.f32 %v588, %v992
  %994 = vdwg.mxu0
  %995 = vmatprep.subr.mxu0 %v44
  %996 = vmatpush1.msra.mxu0 %v43
  %997 = vmatprep.subr.mxu0 %v60
  %998 = vmatpush1.msra.mxu0 %v59
  %999 = vmatprep.subr.mxu0 %v76
  %1000 = vmatpush1.msra.mxu0 %v75
  %1001 = vmatprep.subr.mxu0 %v92
  %1002 = vmatpush1.msra.mxu0 %v91
  %1003 = vmatprep.subr.mxu0 %v108
  %1004 = vmatpush1.msra.mxu0 %v107
  %1005 = vmatprep.subr.mxu0 %v124
  %1006 = vmatpush1.msra.mxu0 %v123
  %1007 = vmatprep.subr.mxu0 %v140
  %1008 = vmatpush1.msra.mxu0 %v139
  %1009 = vmatprep.subr.mxu0 %v156
  %1010 = vmatpush1.msra.mxu0 %v155
  %1011 = vmatprep.subr.mxu0 %v172
  %1012 = vmatpush1.msra.mxu0 %v171
  %1013 = vmatprep.subr.mxu0 %v188
  %1014 = vmatpush1.msra.mxu0 %v187
  %1015 = vmatprep.subr.mxu0 %v204
  %1016 = vmatpush1.msra.mxu0 %v203
  %1017 = vmatprep.subr.mxu0 %v220
  %1018 = vmatpush1.msra.mxu0 %v219
  %1019 = vmatprep.subr.mxu0 %v236
  %1020 = vmatpush1.msra.mxu0 %v235
  %1021 = vmatprep.subr.mxu0 %v252
  %1022 = vmatpush1.msra.mxu0 %v251
  %1023 = vmatprep.subr.mxu0 %v268
  %1024 = vmatpush1.msra.mxu0 %v267
  %1025 = vmatprep.subr.mxu0 %v284
  %1026 = vmatpush1.msra.mxu0 %v283
  %1027 = vmatprep.subr.mxu0 %v300
  %1028 = vmatpush1.msra.mxu0 %v299
  %1029 = vmatprep.subr.mxu0 %v316
  %1030 = vmatpush1.msra.mxu0 %v315
  %1031 = vmatprep.subr.mxu0 %v332
  %1032 = vmatpush1.msra.mxu0 %v331
  %1033 = vmatprep.subr.mxu0 %v348
  %1034 = vmatpush1.msra.mxu0 %v347
  %1035 = vmatprep.subr.mxu0 %v364
  %1036 = vmatpush1.msra.mxu0 %v363
  %1037 = vmatprep.subr.mxu0 %v380
  %1038 = vmatpush1.msra.mxu0 %v379
  %1039 = vmatprep.subr.mxu0 %v396
  %1040 = vmatpush1.msra.mxu0 %v395
  %1041 = vmatprep.subr.mxu0 %v412
  %1042 = vmatpush1.msra.mxu0 %v411
  %1043 = vmatprep.subr.mxu0 %v428
  %1044 = vmatpush1.msra.mxu0 %v427
  %1045 = vmatprep.subr.mxu0 %v444
  %1046 = vmatpush1.msra.mxu0 %v443
  %1047 = vmatprep.subr.mxu0 %v460
  %1048 = vmatpush1.msra.mxu0 %v459
  %1049 = vmatprep.subr.mxu0 %v476
  %1050 = vmatpush1.msra.mxu0 %v475
  %1051 = vmatprep.subr.mxu0 %v492
  %1052 = vmatpush1.msra.mxu0 %v491
  %1053 = vmatprep.subr.mxu0 %v508
  %1054 = vmatpush1.msra.mxu0 %v507
  %1055 = vmatprep.subr.mxu0 %v524
  %1056 = vmatpush1.msra.mxu0 %v523
  %1057 = vmatprep.subr.mxu0 %v540
  %1058 = vmatpush1.msra.mxu0 %v539
  %1059 = vmatprep.mubr.f32.mxu0 %v637
  %1060 = vmatmul.mubr.f32.gmra.mrb[0].mxu0 %v636
  %v1061 = vpop.f32.mrb[0].mxu0
  %v1062 = vadd.f32 %v592, %v1061
  %v1063 = vpop.f32.mrb[0].mxu0
  %v1064 = vadd.f32 %v596, %v1063
  %1065 = vdwg.mxu0
  %1066 = vmatprep.subr.mxu0 %v46
  %1067 = vmatpush1.msra.mxu0 %v45
  %1068 = vmatprep.subr.mxu0 %v62
  %1069 = vmatpush1.msra.mxu0 %v61
  %1070 = vmatprep.subr.mxu0 %v78
  %1071 = vmatpush1.msra.mxu0 %v77
  %1072 = vmatprep.subr.mxu0 %v94
  %1073 = vmatpush1.msra.mxu0 %v93
  %1074 = vmatprep.subr.mxu0 %v110
  %1075 = vmatpush1.msra.mxu0 %v109
  %1076 = vmatprep.subr.mxu0 %v126
  %1077 = vmatpush1.msra.mxu0 %v125
  %1078 = vmatprep.subr.mxu0 %v142
  %1079 = vmatpush1.msra.mxu0 %v141
  %1080 = vmatprep.subr.mxu0 %v158
  %1081 = vmatpush1.msra.mxu0 %v157
  %1082 = vmatprep.subr.mxu0 %v174
  %1083 = vmatpush1.msra.mxu0 %v173
  %1084 = vmatprep.subr.mxu0 %v190
  %1085 = vmatpush1.msra.mxu0 %v189
  %1086 = vmatprep.subr.mxu0 %v206
  %1087 = vmatpush1.msra.mxu0 %v205
  %1088 = vmatprep.subr.mxu0 %v222
  %1089 = vmatpush1.msra.mxu0 %v221
  %1090 = vmatprep.subr.mxu0 %v238
  %1091 = vmatpush1.msra.mxu0 %v237
  %1092 = vmatprep.subr.mxu0 %v254
  %1093 = vmatpush1.msra.mxu0 %v253
  %1094 = vmatprep.subr.mxu0 %v270
  %1095 = vmatpush1.msra.mxu0 %v269
  %1096 = vmatprep.subr.mxu0 %v286
  %1097 = vmatpush1.msra.mxu0 %v285
  %1098 = vmatprep.subr.mxu0 %v302
  %1099 = vmatpush1.msra.mxu0 %v301
  %1100 = vmatprep.subr.mxu0 %v318
  %1101 = vmatpush1.msra.mxu0 %v317
  %1102 = vmatprep.subr.mxu0 %v334
  %1103 = vmatpush1.msra.mxu0 %v333
  %1104 = vmatprep.subr.mxu0 %v350
  %1105 = vmatpush1.msra.mxu0 %v349
  %1106 = vmatprep.subr.mxu0 %v366
  %1107 = vmatpush1.msra.mxu0 %v365
  %1108 = vmatprep.subr.mxu0 %v382
  %1109 = vmatpush1.msra.mxu0 %v381
  %1110 = vmatprep.subr.mxu0 %v398
  %1111 = vmatpush1.msra.mxu0 %v397
  %1112 = vmatprep.subr.mxu0 %v414
  %1113 = vmatpush1.msra.mxu0 %v413
  %1114 = vmatprep.subr.mxu0 %v430
  %1115 = vmatpush1.msra.mxu0 %v429
  %1116 = vmatprep.subr.mxu0 %v446
  %1117 = vmatpush1.msra.mxu0 %v445
  %1118 = vmatprep.subr.mxu0 %v462
  %1119 = vmatpush1.msra.mxu0 %v461
  %1120 = vmatprep.subr.mxu0 %v478
  %1121 = vmatpush1.msra.mxu0 %v477
  %1122 = vmatprep.subr.mxu0 %v494
  %1123 = vmatpush1.msra.mxu0 %v493
  %1124 = vmatprep.subr.mxu0 %v510
  %1125 = vmatpush1.msra.mxu0 %v509
  %1126 = vmatprep.subr.mxu0 %v526
  %1127 = vmatpush1.msra.mxu0 %v525
  %1128 = vmatprep.subr.mxu0 %v542
  %1129 = vmatpush1.msra.mxu0 %v541
  %1130 = vmatprep.mubr.f32.mxu0 %v637
  %1131 = vmatmul.mubr.f32.gmra.mrb[0].mxu0 %v636
  %v1132 = vpop.f32.mrb[0].mxu0
  %v1133 = vadd.f32 %v600, %v1132
  %v1134 = vpop.f32.mrb[0].mxu0
  %v1135 = vadd.f32 %v604, %v1134
  %1136 = vdwg.mxu0
  %1137 = vmatprep.subr.mxu0 %v48
  %1138 = vmatpush1.msra.mxu0 %v47
  %1139 = vmatprep.subr.mxu0 %v64
  %1140 = vmatpush1.msra.mxu0 %v63
  %1141 = vmatprep.subr.mxu0 %v80
  %1142 = vmatpush1.msra.mxu0 %v79
  %1143 = vmatprep.subr.mxu0 %v96
  %1144 = vmatpush1.msra.mxu0 %v95
  %1145 = vmatprep.subr.mxu0 %v112
  %1146 = vmatpush1.msra.mxu0 %v111
  %1147 = vmatprep.subr.mxu0 %v128
  %1148 = vmatpush1.msra.mxu0 %v127
  %1149 = vmatprep.subr.mxu0 %v144
  %1150 = vmatpush1.msra.mxu0 %v143
  %1151 = vmatprep.subr.mxu0 %v160
  %1152 = vmatpush1.msra.mxu0 %v159
  %1153 = vmatprep.subr.mxu0 %v176
  %1154 = vmatpush1.msra.mxu0 %v175
  %1155 = vmatprep.subr.mxu0 %v192
  %1156 = vmatpush1.msra.mxu0 %v191
  %1157 = vmatprep.subr.mxu0 %v208
  %1158 = vmatpush1.msra.mxu0 %v207
  %1159 = vmatprep.subr.mxu0 %v224
  %1160 = vmatpush1.msra.mxu0 %v223
  %1161 = vmatprep.subr.mxu0 %v240
  %1162 = vmatpush1.msra.mxu0 %v239
  %1163 = vmatprep.subr.mxu0 %v256
  %1164 = vmatpush1.msra.mxu0 %v255
  %1165 = vmatprep.subr.mxu0 %v272
  %1166 = vmatpush1.msra.mxu0 %v271
  %1167 = vmatprep.subr.mxu0 %v288
  %1168 = vmatpush1.msra.mxu0 %v287
  %1169 = vmatprep.subr.mxu0 %v304
  %1170 = vmatpush1.msra.mxu0 %v303
  %1171 = vmatprep.subr.mxu0 %v320
  %1172 = vmatpush1.msra.mxu0 %v319
  %1173 = vmatprep.subr.mxu0 %v336
  %1174 = vmatpush1.msra.mxu0 %v335
  %1175 = vmatprep.subr.mxu0 %v352
  %1176 = vmatpush1.msra.mxu0 %v351
  %1177 = vmatprep.subr.mxu0 %v368
  %1178 = vmatpush1.msra.mxu0 %v367
  %1179 = vmatprep.subr.mxu0 %v384
  %1180 = vmatpush1.msra.mxu0 %v383
  %1181 = vmatprep.subr.mxu0 %v400
  %1182 = vmatpush1.msra.mxu0 %v399
  %1183 = vmatprep.subr.mxu0 %v416
  %1184 = vmatpush1.msra.mxu0 %v415
  %1185 = vmatprep.subr.mxu0 %v432
  %1186 = vmatpush1.msra.mxu0 %v431
  %1187 = vmatprep.subr.mxu0 %v448
  %1188 = vmatpush1.msra.mxu0 %v447
  %1189 = vmatprep.subr.mxu0 %v464
  %1190 = vmatpush1.msra.mxu0 %v463
  %1191 = vmatprep.subr.mxu0 %v480
  %1192 = vmatpush1.msra.mxu0 %v479
  %1193 = vmatprep.subr.mxu0 %v496
  %1194 = vmatpush1.msra.mxu0 %v495
  %1195 = vmatprep.subr.mxu0 %v512
  %1196 = vmatpush1.msra.mxu0 %v511
  %1197 = vmatprep.subr.mxu0 %v528
  %1198 = vmatpush1.msra.mxu0 %v527
  %1199 = vmatprep.subr.mxu0 %v544
  %1200 = vmatpush1.msra.mxu0 %v543
  %1201 = vmatprep.mubr.f32.mxu0 %v637
  %1202 = vmatmul.mubr.f32.gmra.mrb[0].mxu0 %v636
  %v1203 = vpop.f32.mrb[0].mxu0
  %v1204 = vadd.f32 %v608, %v1203
  %v1205 = vpop.f32.mrb[0].mxu0
  %v1206 = vadd.f32 %v612, %v1205
  %1207 = vdwg.mxu0
  %v1208 = vmax.f32 %v707, 0.0
  %v1209 = vmax.f32 %v709, 0.0
  %v1210 = vmax.f32 %v778, 0.0
  %v1211 = vmax.f32 %v780, 0.0
  %v1212 = vmax.f32 %v849, 0.0
  %v1213 = vmax.f32 %v851, 0.0
  %v1214 = vmax.f32 %v920, 0.0
  %v1215 = vmax.f32 %v922, 0.0
  %v1216 = vmax.f32 %v991, 0.0
  %v1217 = vmax.f32 %v993, 0.0
  %v1218 = vmax.f32 %v1062, 0.0
  %v1219 = vmax.f32 %v1064, 0.0
  %v1220 = vmax.f32 %v1133, 0.0
  %v1221 = vmax.f32 %v1135, 0.0
  %v1222 = vmax.f32 %v1204, 0.0
  %v1223 = vmax.f32 %v1206, 0.0
  %v1224 = vld [vmem:[%s3] sm:$0xff]
  %v1225 = vld [vmem:[%s3 + $0x8] sm:$0xff]
  %v1226 = vld [vmem:[%s3 + $0x10] sm:$0xff]
  %v1227 = vld [vmem:[%s3 + $0x18] sm:$0xff]
  %v1228 = vld [vmem:[%s3 + $0x20] sm:$0xff]
  %v1229 = vld [vmem:[%s3 + $0x28] sm:$0xff]
  %v1230 = vld [vmem:[%s3 + $0x30] sm:$0xff]
  %v1231 = vld [vmem:[%s3 + $0x38] sm:$0xff]
  %v1232 = vld [vmem:[%s3 + $0x40] sm:$0xff]
  %v1233 = vld [vmem:[%s3 + $0x48] sm:$0xff]
  %v1234 = vld [vmem:[%s3 + $0x50] sm:$0xff]
  %v1235 = vld [vmem:[%s3 + $0x58] sm:$0xff]
  %v1236 = vld [vmem:[%s3 + $0x60] sm:$0xff]
  %v1237 = vld [vmem:[%s3 + $0x68] sm:$0xff]
  %v1238 = vld [vmem:[%s3 + $0x70] sm:$0xff]
  %v1239 = vld [vmem:[%s3 + $0x78] sm:$0xff]
  %v1240 = vld [vmem:[%s3 + $0x80] sm:$0xff]
  %v1241 = vld [vmem:[%s3 + $0x88] sm:$0xff]
  %v1242 = vld [vmem:[%s3 + $0x90] sm:$0xff]
  %v1243 = vld [vmem:[%s3 + $0x98] sm:$0xff]
  %v1244 = vld [vmem:[%s3 + $0xa0] sm:$0xff]
  %v1245 = vld [vmem:[%s3 + $0xa8] sm:$0xff]
  %v1246 = vld [vmem:[%s3 + $0xb0] sm:$0xff]
  %v1247 = vld [vmem:[%s3 + $0xb8] sm:$0xff]
  %v1248 = vld [vmem:[%s3 + $0xc0] sm:$0xff]
  %v1249 = vld [vmem:[%s3 + $0xc8] sm:$0xff]
  %v1250 = vld [vmem:[%s3 + $0xd0] sm:$0xff]
  %v1251 = vld [vmem:[%s3 + $0xd8] sm:$0xff]
  %v1252 = vld [vmem:[%s3 + $0xe0] sm:$0xff]
  %v1253 = vld [vmem:[%s3 + $0xe8] sm:$0xff]
  %v1254 = vld [vmem:[%s3 + $0xf0] sm:$0xff]
  %v1255 = vld [vmem:[%s3 + $0xf8] sm:$0xff]
  %v1256 = vld [vmem:[%s3 + $0x100] sm:$0xff]
  %v1257 = vld [vmem:[%s3 + $0x108] sm:$0xff]
  %v1258 = vld [vmem:[%s3 + $0x110] sm:$0xff]
  %v1259 = vld [vmem:[%s3 + $0x118] sm:$0xff]
  %v1260 = vld [vmem:[%s3 + $0x120] sm:$0xff]
  %v1261 = vld [vmem:[%s3 + $0x128] sm:$0xff]
  %v1262 = vld [vmem:[%s3 + $0x130] sm:$0xff]
  %v1263 = vld [vmem:[%s3 + $0x138] sm:$0xff]
  %v1264 = vld [vmem:[%s3 + $0x140] sm:$0xff]
  %v1265 = vld [vmem:[%s3 + $0x148] sm:$0xff]
  %v1266 = vld [vmem:[%s3 + $0x150] sm:$0xff]
  %v1267 = vld [vmem:[%s3 + $0x158] sm:$0xff]
  %v1268 = vld [vmem:[%s3 + $0x160] sm:$0xff]
  %v1269 = vld [vmem:[%s3 + $0x168] sm:$0xff]
  %v1270 = vld [vmem:[%s3 + $0x170] sm:$0xff]
  %v1271 = vld [vmem:[%s3 + $0x178] sm:$0xff]
  %v1272 = vld [vmem:[%s3 + $0x180] sm:$0xff]
  %v1273 = vld [vmem:[%s3 + $0x188] sm:$0xff]
  %v1274 = vld [vmem:[%s3 + $0x190] sm:$0xff]
  %v1275 = vld [vmem:[%s3 + $0x198] sm:$0xff]
  %v1276 = vld [vmem:[%s3 + $0x1a0] sm:$0xff]
  %v1277 = vld [vmem:[%s3 + $0x1a8] sm:$0xff]
  %v1278 = vld [vmem:[%s3 + $0x1b0] sm:$0xff]
  %v1279 = vld [vmem:[%s3 + $0x1b8] sm:$0xff]
  %v1280 = vld [vmem:[%s3 + $0x1c0] sm:$0xff]
  %v1281 = vld [vmem:[%s3 + $0x1c8] sm:$0xff]
  %v1282 = vld [vmem:[%s3 + $0x1d0] sm:$0xff]
  %v1283 = vld [vmem:[%s3 + $0x1d8] sm:$0xff]
  %v1284 = vld [vmem:[%s3 + $0x1e0] sm:$0xff]
  %v1285 = vld [vmem:[%s3 + $0x1e8] sm:$0xff]
  %v1286 = vld [vmem:[%s3 + $0x1f0] sm:$0xff]
  %v1287 = vld [vmem:[%s3 + $0x1f8] sm:$0xff]
  %v1288 = vld [vmem:[%s3 + $0x200] sm:$0xff]
  %v1289 = vld [vmem:[%s3 + $0x208] sm:$0xff]
  %v1290 = vld [vmem:[%s3 + $0x210] sm:$0xff]
  %v1291 = vld [vmem:[%s3 + $0x218] sm:$0xff]
  %v1292 = vld [vmem:[%s3 + $0x220] sm:$0xff]
  %v1293 = vld [vmem:[%s3 + $0x228] sm:$0xff]
  %v1294 = vld [vmem:[%s3 + $0x230] sm:$0xff]
  %v1295 = vld [vmem:[%s3 + $0x238] sm:$0xff]
  %v1296 = vld [vmem:[%s3 + $0x240] sm:$0xff]
  %v1297 = vld [vmem:[%s3 + $0x248] sm:$0xff]
  %v1298 = vld [vmem:[%s3 + $0x250] sm:$0xff]
  %v1299 = vld [vmem:[%s3 + $0x258] sm:$0xff]
  %v1300 = vld [vmem:[%s3 + $0x260] sm:$0xff]
  %v1301 = vld [vmem:[%s3 + $0x268] sm:$0xff]
  %v1302 = vld [vmem:[%s3 + $0x270] sm:$0xff]
  %v1303 = vld [vmem:[%s3 + $0x278] sm:$0xff]
  %v1304 = vld [vmem:[%s3 + $0x280] sm:$0xff]
  %v1305 = vld [vmem:[%s3 + $0x288] sm:$0xff]
  %v1306 = vld [vmem:[%s3 + $0x290] sm:$0xff]
  %v1307 = vld [vmem:[%s3 + $0x298] sm:$0xff]
  %v1308 = vld [vmem:[%s3 + $0x2a0] sm:$0xff]
  %v1309 = vld [vmem:[%s3 + $0x2a8] sm:$0xff]
  %v1310 = vld [vmem:[%s3 + $0x2b0] sm:$0xff]
  %v1311 = vld [vmem:[%s3 + $0x2b8] sm:$0xff]
  %v1312 = vld [vmem:[%s3 + $0x2c0] sm:$0xff]
  %v1313 = vld [vmem:[%s3 + $0x2c8] sm:$0xff]
  %v1314 = vld [vmem:[%s3 + $0x2d0] sm:$0xff]
  %v1315 = vld [vmem:[%s3 + $0x2d8] sm:$0xff]
  %v1316 = vld [vmem:[%s3 + $0x2e0] sm:$0xff]
  %v1317 = vld [vmem:[%s3 + $0x2e8] sm:$0xff]
  %v1318 = vld [vmem:[%s3 + $0x2f0] sm:$0xff]
  %v1319 = vld [vmem:[%s3 + $0x2f8] sm:$0xff]
  %v1320 = vld [vmem:[%s3 + $0x300] sm:$0xff]
  %v1321 = vld [vmem:[%s3 + $0x308] sm:$0xff]
  %v1322 = vld [vmem:[%s3 + $0x310] sm:$0xff]
  %v1323 = vld [vmem:[%s3 + $0x318] sm:$0xff]
  %v1324 = vld [vmem:[%s3 + $0x320] sm:$0xff]
  %v1325 = vld [vmem:[%s3 + $0x328] sm:$0xff]
  %v1326 = vld [vmem:[%s3 + $0x330] sm:$0xff]
  %v1327 = vld [vmem:[%s3 + $0x338] sm:$0xff]
  %v1328 = vld [vmem:[%s3 + $0x340] sm:$0xff]
  %v1329 = vld [vmem:[%s3 + $0x348] sm:$0xff]
  %v1330 = vld [vmem:[%s3 + $0x350] sm:$0xff]
  %v1331 = vld [vmem:[%s3 + $0x358] sm:$0xff]
  %v1332 = vld [vmem:[%s3 + $0x360] sm:$0xff]
  %v1333 = vld [vmem:[%s3 + $0x368] sm:$0xff]
  %v1334 = vld [vmem:[%s3 + $0x370] sm:$0xff]
  %v1335 = vld [vmem:[%s3 + $0x378] sm:$0xff]
  %v1336 = vld [vmem:[%s3 + $0x380] sm:$0xff]
  %v1337 = vld [vmem:[%s3 + $0x388] sm:$0xff]
  %v1338 = vld [vmem:[%s3 + $0x390] sm:$0xff]
  %v1339 = vld [vmem:[%s3 + $0x398] sm:$0xff]
  %v1340 = vld [vmem:[%s3 + $0x3a0] sm:$0xff]
  %v1341 = vld [vmem:[%s3 + $0x3a8] sm:$0xff]
  %v1342 = vld [vmem:[%s3 + $0x3b0] sm:$0xff]
  %v1343 = vld [vmem:[%s3 + $0x3b8] sm:$0xff]
  %v1344 = vld [vmem:[%s3 + $0x3c0] sm:$0xff]
  %v1345 = vld [vmem:[%s3 + $0x3c8] sm:$0xff]
  %v1346 = vld [vmem:[%s3 + $0x3d0] sm:$0xff]
  %v1347 = vld [vmem:[%s3 + $0x3d8] sm:$0xff]
  %v1348 = vld [vmem:[%s3 + $0x3e0] sm:$0xff]
  %v1349 = vld [vmem:[%s3 + $0x3e8] sm:$0xff]
  %v1350 = vld [vmem:[%s3 + $0x3f0] sm:$0xff]
  %v1351 = vld [vmem:[%s3 + $0x3f8] sm:$0xff]
  %v1352 = vld [vmem:[%s3 + $0x400] sm:$0xff]
  %v1353 = vld [vmem:[%s3 + $0x408] sm:$0xff]
  %v1354 = vld [vmem:[%s3 + $0x410] sm:$0xff]
  %v1355 = vld [vmem:[%s3 + $0x418] sm:$0xff]
  %v1356 = vld [vmem:[%s3 + $0x420] sm:$0xff]
  %v1357 = vld [vmem:[%s3 + $0x428] sm:$0xff]
  %v1358 = vld [vmem:[%s3 + $0x430] sm:$0xff]
  %v1359 = vld [vmem:[%s3 + $0x438] sm:$0xff]
  %v1360 = vld [vmem:[%s3 + $0x440] sm:$0xff]
  %v1361 = vld [vmem:[%s3 + $0x448] sm:$0xff]
  %v1362 = vld [vmem:[%s3 + $0x450] sm:$0xff]
  %v1363 = vld [vmem:[%s3 + $0x458] sm:$0xff]
  %v1364 = vld [vmem:[%s3 + $0x460] sm:$0xff]
  %v1365 = vld [vmem:[%s3 + $0x468] sm:$0xff]
  %v1366 = vld [vmem:[%s3 + $0x470] sm:$0xff]
  %v1367 = vld [vmem:[%s3 + $0x478] sm:$0xff]
  %v1368 = vld [vmem:[%s3 + $0x480] sm:$0xff]
  %v1369 = vld [vmem:[%s3 + $0x488] sm:$0xff]
  %v1370 = vld [vmem:[%s3 + $0x490] sm:$0xff]
  %v1371 = vld [vmem:[%s3 + $0x498] sm:$0xff]
  %v1372 = vld [vmem:[%s3 + $0x4a0] sm:$0xff]
  %v1373 = vld [vmem:[%s3 + $0x4a8] sm:$0xff]
  %v1374 = vld [vmem:[%s3 + $0x4b0] sm:$0xff]
  %v1375 = vld [vmem:[%s3 + $0x4b8] sm:$0xff]
  %v1376 = vld [vmem:[%s3 + $0x4c0] sm:$0xff]
  %v1377 = vld [vmem:[%s3 + $0x4c8] sm:$0xff]
  %v1378 = vld [vmem:[%s3 + $0x4d0] sm:$0xff]
  %v1379 = vld [vmem:[%s3 + $0x4d8] sm:$0xff]
  %v1380 = vld [vmem:[%s3 + $0x4e0] sm:$0xff]
  %v1381 = vld [vmem:[%s3 + $0x4e8] sm:$0xff]
  %v1382 = vld [vmem:[%s3 + $0x4f0] sm:$0xff]
  %v1383 = vld [vmem:[%s3 + $0x4f8] sm:$0xff]
  %v1384 = vld [vmem:[%s3 + $0x500] sm:$0xff]
  %v1385 = vld [vmem:[%s3 + $0x508] sm:$0xff]
  %v1386 = vld [vmem:[%s3 + $0x510] sm:$0xff]
  %v1387 = vld [vmem:[%s3 + $0x518] sm:$0xff]
  %v1388 = vld [vmem:[%s3 + $0x520] sm:$0xff]
  %v1389 = vld [vmem:[%s3 + $0x528] sm:$0xff]
  %v1390 = vld [vmem:[%s3 + $0x530] sm:$0xff]
  %v1391 = vld [vmem:[%s3 + $0x538] sm:$0xff]
  %v1392 = vld [vmem:[%s3 + $0x540] sm:$0xff]
  %v1393 = vld [vmem:[%s3 + $0x548] sm:$0xff]
  %v1394 = vld [vmem:[%s3 + $0x550] sm:$0xff]
  %v1395 = vld [vmem:[%s3 + $0x558] sm:$0xff]
  %v1396 = vld [vmem:[%s3 + $0x560] sm:$0xff]
  %v1397 = vld [vmem:[%s3 + $0x568] sm:$0xff]
  %v1398 = vld [vmem:[%s3 + $0x570] sm:$0xff]
  %v1399 = vld [vmem:[%s3 + $0x578] sm:$0xff]
  %v1400 = vld [vmem:[%s3 + $0x580] sm:$0xff]
  %v1401 = vld [vmem:[%s3 + $0x588] sm:$0xff]
  %v1402 = vld [vmem:[%s3 + $0x590] sm:$0xff]
  %v1403 = vld [vmem:[%s3 + $0x598] sm:$0xff]
  %v1404 = vld [vmem:[%s3 + $0x5a0] sm:$0xff]
  %v1405 = vld [vmem:[%s3 + $0x5a8] sm:$0xff]
  %v1406 = vld [vmem:[%s3 + $0x5b0] sm:$0xff]
  %v1407 = vld [vmem:[%s3 + $0x5b8] sm:$0xff]
  %v1408 = vld [vmem:[%s3 + $0x5c0] sm:$0xff]
  %v1409 = vld [vmem:[%s3 + $0x5c8] sm:$0xff]
  %v1410 = vld [vmem:[%s3 + $0x5d0] sm:$0xff]
  %v1411 = vld [vmem:[%s3 + $0x5d8] sm:$0xff]
  %v1412 = vld [vmem:[%s3 + $0x5e0] sm:$0xff]
  %v1413 = vld [vmem:[%s3 + $0x5e8] sm:$0xff]
  %v1414 = vld [vmem:[%s3 + $0x5f0] sm:$0xff]
  %v1415 = vld [vmem:[%s3 + $0x5f8] sm:$0xff]
  %v1416 = vld [vmem:[%s3 + $0x600] sm:$0xff]
  %v1417 = vld [vmem:[%s3 + $0x608] sm:$0xff]
  %v1418 = vld [vmem:[%s3 + $0x610] sm:$0xff]
  %v1419 = vld [vmem:[%s3 + $0x618] sm:$0xff]
  %v1420 = vld [vmem:[%s3 + $0x620] sm:$0xff]
  %v1421 = vld [vmem:[%s3 + $0x628] sm:$0xff]
  %v1422 = vld [vmem:[%s3 + $0x630] sm:$0xff]
  %v1423 = vld [vmem:[%s3 + $0x638] sm:$0xff]
  %v1424 = vld [vmem:[%s3 + $0x640] sm:$0xff]
  %v1425 = vld [vmem:[%s3 + $0x648] sm:$0xff]
  %v1426 = vld [vmem:[%s3 + $0x650] sm:$0xff]
  %v1427 = vld [vmem:[%s3 + $0x658] sm:$0xff]
  %v1428 = vld [vmem:[%s3 + $0x660] sm:$0xff]
  %v1429 = vld [vmem:[%s3 + $0x668] sm:$0xff]
  %v1430 = vld [vmem:[%s3 + $0x670] sm:$0xff]
  %v1431 = vld [vmem:[%s3 + $0x678] sm:$0xff]
  %v1432 = vld [vmem:[%s3 + $0x680] sm:$0xff]
  %v1433 = vld [vmem:[%s3 + $0x688] sm:$0xff]
  %v1434 = vld [vmem:[%s3 + $0x690] sm:$0xff]
  %v1435 = vld [vmem:[%s3 + $0x698] sm:$0xff]
  %v1436 = vld [vmem:[%s3 + $0x6a0] sm:$0xff]
  %v1437 = vld [vmem:[%s3 + $0x6a8] sm:$0xff]
  %v1438 = vld [vmem:[%s3 + $0x6b0] sm:$0xff]
  %v1439 = vld [vmem:[%s3 + $0x6b8] sm:$0xff]
  %v1440 = vld [vmem:[%s3 + $0x6c0] sm:$0xff]
  %v1441 = vld [vmem:[%s3 + $0x6c8] sm:$0xff]
  %v1442 = vld [vmem:[%s3 + $0x6d0] sm:$0xff]
  %v1443 = vld [vmem:[%s3 + $0x6d8] sm:$0xff]
  %v1444 = vld [vmem:[%s3 + $0x6e0] sm:$0xff]
  %v1445 = vld [vmem:[%s3 + $0x6e8] sm:$0xff]
  %v1446 = vld [vmem:[%s3 + $0x6f0] sm:$0xff]
  %v1447 = vld [vmem:[%s3 + $0x6f8] sm:$0xff]
  %v1448 = vld [vmem:[%s3 + $0x700] sm:$0xff]
  %v1449 = vld [vmem:[%s3 + $0x708] sm:$0xff]
  %v1450 = vld [vmem:[%s3 + $0x710] sm:$0xff]
  %v1451 = vld [vmem:[%s3 + $0x718] sm:$0xff]
  %v1452 = vld [vmem:[%s3 + $0x720] sm:$0xff]
  %v1453 = vld [vmem:[%s3 + $0x728] sm:$0xff]
  %v1454 = vld [vmem:[%s3 + $0x730] sm:$0xff]
  %v1455 = vld [vmem:[%s3 + $0x738] sm:$0xff]
  %v1456 = vld [vmem:[%s3 + $0x740] sm:$0xff]
  %v1457 = vld [vmem:[%s3 + $0x748] sm:$0xff]
  %v1458 = vld [vmem:[%s3 + $0x750] sm:$0xff]
  %v1459 = vld [vmem:[%s3 + $0x758] sm:$0xff]
  %v1460 = vld [vmem:[%s3 + $0x760] sm:$0xff]
  %v1461 = vld [vmem:[%s3 + $0x768] sm:$0xff]
  %v1462 = vld [vmem:[%s3 + $0x770] sm:$0xff]
  %v1463 = vld [vmem:[%s3 + $0x778] sm:$0xff]
  %v1464 = vld [vmem:[%s3 + $0x780] sm:$0xff]
  %v1465 = vld [vmem:[%s3 + $0x788] sm:$0xff]
  %v1466 = vld [vmem:[%s3 + $0x790] sm:$0xff]
  %v1467 = vld [vmem:[%s3 + $0x798] sm:$0xff]
  %v1468 = vld [vmem:[%s3 + $0x7a0] sm:$0xff]
  %v1469 = vld [vmem:[%s3 + $0x7a8] sm:$0xff]
  %v1470 = vld [vmem:[%s3 + $0x7b0] sm:$0xff]
  %v1471 = vld [vmem:[%s3 + $0x7b8] sm:$0xff]
  %v1472 = vld [vmem:[%s3 + $0x7c0] sm:$0xff]
  %v1473 = vld [vmem:[%s3 + $0x7c8] sm:$0xff]
  %v1474 = vld [vmem:[%s3 + $0x7d0] sm:$0xff]
  %v1475 = vld [vmem:[%s3 + $0x7d8] sm:$0xff]
  %v1476 = vld [vmem:[%s3 + $0x7e0] sm:$0xff]
  %v1477 = vld [vmem:[%s3 + $0x7e8] sm:$0xff]
  %v1478 = vld [vmem:[%s3 + $0x7f0] sm:$0xff]
  %v1479 = vld [vmem:[%s3 + $0x7f8] sm:$0xff]
  %v1480 = vld [vmem:[%s3 + $0x800] sm:$0xff]
  %v1481 = vld [vmem:[%s3 + $0x808] sm:$0xff]
  %v1482 = vld [vmem:[%s3 + $0x810] sm:$0xff]
  %v1483 = vld [vmem:[%s3 + $0x818] sm:$0xff]
  %v1484 = vld [vmem:[%s3 + $0x820] sm:$0xff]
  %v1485 = vld [vmem:[%s3 + $0x828] sm:$0xff]
  %v1486 = vld [vmem:[%s3 + $0x830] sm:$0xff]
  %v1487 = vld [vmem:[%s3 + $0x838] sm:$0xff]
  %v1488 = vld [vmem:[%s3 + $0x840] sm:$0xff]
  %v1489 = vld [vmem:[%s3 + $0x848] sm:$0xff]
  %v1490 = vld [vmem:[%s3 + $0x850] sm:$0xff]
  %v1491 = vld [vmem:[%s3 + $0x858] sm:$0xff]
  %v1492 = vld [vmem:[%s3 + $0x860] sm:$0xff]
  %v1493 = vld [vmem:[%s3 + $0x868] sm:$0xff]
  %v1494 = vld [vmem:[%s3 + $0x870] sm:$0xff]
  %v1495 = vld [vmem:[%s3 + $0x878] sm:$0xff]
  %v1496 = vld [vmem:[%s3 + $0x880] sm:$0xff]
  %v1497 = vld [vmem:[%s3 + $0x888] sm:$0xff]
  %v1498 = vld [vmem:[%s3 + $0x890] sm:$0xff]
  %v1499 = vld [vmem:[%s3 + $0x898] sm:$0xff]
  %v1500 = vld [vmem:[%s3 + $0x8a0] sm:$0xff]
  %v1501 = vld [vmem:[%s3 + $0x8a8] sm:$0xff]
  %v1502 = vld [vmem:[%s3 + $0x8b0] sm:$0xff]
  %v1503 = vld [vmem:[%s3 + $0x8b8] sm:$0xff]
  %v1504 = vld [vmem:[%s3 + $0x8c0] sm:$0xff]
  %v1505 = vld [vmem:[%s3 + $0x8c8] sm:$0xff]
  %v1506 = vld [vmem:[%s3 + $0x8d0] sm:$0xff]
  %v1507 = vld [vmem:[%s3 + $0x8d8] sm:$0xff]
  %v1508 = vld [vmem:[%s3 + $0x8e0] sm:$0xff]
  %v1509 = vld [vmem:[%s3 + $0x8e8] sm:$0xff]
  %v1510 = vld [vmem:[%s3 + $0x8f0] sm:$0xff]
  %v1511 = vld [vmem:[%s3 + $0x8f8] sm:$0xff]
  %v1512 = vld [vmem:[%s3 + $0x900] sm:$0xff]
  %v1513 = vld [vmem:[%s3 + $0x908] sm:$0xff]
  %v1514 = vld [vmem:[%s3 + $0x910] sm:$0xff]
  %v1515 = vld [vmem:[%s3 + $0x918] sm:$0xff]
  %v1516 = vld [vmem:[%s3 + $0x920] sm:$0xff]
  %v1517 = vld [vmem:[%s3 + $0x928] sm:$0xff]
  %v1518 = vld [vmem:[%s3 + $0x930] sm:$0xff]
  %v1519 = vld [vmem:[%s3 + $0x938] sm:$0xff]
  %v1520 = vld [vmem:[%s3 + $0x940] sm:$0xff]
  %v1521 = vld [vmem:[%s3 + $0x948] sm:$0xff]
  %v1522 = vld [vmem:[%s3 + $0x950] sm:$0xff]
  %v1523 = vld [vmem:[%s3 + $0x958] sm:$0xff]
  %v1524 = vld [vmem:[%s3 + $0x960] sm:$0xff]
  %v1525 = vld [vmem:[%s3 + $0x968] sm:$0xff]
  %v1526 = vld [vmem:[%s3 + $0x970] sm:$0xff]
  %v1527 = vld [vmem:[%s3 + $0x978] sm:$0xff]
  %v1528 = vld [vmem:[%s3 + $0x980] sm:$0xff]
  %v1529 = vld [vmem:[%s3 + $0x988] sm:$0xff]
  %v1530 = vld [vmem:[%s3 + $0x990] sm:$0xff]
  %v1531 = vld [vmem:[%s3 + $0x998] sm:$0xff]
  %v1532 = vld [vmem:[%s3 + $0x9a0] sm:$0xff]
  %v1533 = vld [vmem:[%s3 + $0x9a8] sm:$0xff]
  %v1534 = vld [vmem:[%s3 + $0x9b0] sm:$0xff]
  %v1535 = vld [vmem:[%s3 + $0x9b8] sm:$0xff]
  %v1536 = vld [vmem:[%s3 + $0x9c0] sm:$0xff]
  %v1537 = vld [vmem:[%s3 + $0x9c8] sm:$0xff]
  %v1538 = vld [vmem:[%s3 + $0x9d0] sm:$0xff]
  %v1539 = vld [vmem:[%s3 + $0x9d8] sm:$0xff]
  %v1540 = vld [vmem:[%s3 + $0x9e0] sm:$0xff]
  %v1541 = vld [vmem:[%s3 + $0x9e8] sm:$0xff]
  %v1542 = vld [vmem:[%s3 + $0x9f0] sm:$0xff]
  %v1543 = vld [vmem:[%s3 + $0x9f8] sm:$0xff]
  %v1544 = vld [vmem:[%s3 + $0xa00] sm:$0xff]
  %v1545 = vld [vmem:[%s3 + $0xa08] sm:$0xff]
  %v1546 = vld [vmem:[%s3 + $0xa10] sm:$0xff]
  %v1547 = vld [vmem:[%s3 + $0xa18] sm:$0xff]
  %v1548 = vld [vmem:[%s3 + $0xa20] sm:$0xff]
  %v1549 = vld [vmem:[%s3 + $0xa28] sm:$0xff]
  %v1550 = vld [vmem:[%s3 + $0xa30] sm:$0xff]
  %v1551 = vld [vmem:[%s3 + $0xa38] sm:$0xff]
  %v1552 = vld [vmem:[%s3 + $0xa40] sm:$0xff]
  %v1553 = vld [vmem:[%s3 + $0xa48] sm:$0xff]
  %v1554 = vld [vmem:[%s3 + $0xa50] sm:$0xff]
  %v1555 = vld [vmem:[%s3 + $0xa58] sm:$0xff]
  %v1556 = vld [vmem:[%s3 + $0xa60] sm:$0xff]
  %v1557 = vld [vmem:[%s3 + $0xa68] sm:$0xff]
  %v1558 = vld [vmem:[%s3 + $0xa70] sm:$0xff]
  %v1559 = vld [vmem:[%s3 + $0xa78] sm:$0xff]
  %v1560 = vld [vmem:[%s3 + $0xa80] sm:$0xff]
  %v1561 = vld [vmem:[%s3 + $0xa88] sm:$0xff]
  %v1562 = vld [vmem:[%s3 + $0xa90] sm:$0xff]
  %v1563 = vld [vmem:[%s3 + $0xa98] sm:$0xff]
  %v1564 = vld [vmem:[%s3 + $0xaa0] sm:$0xff]
  %v1565 = vld [vmem:[%s3 + $0xaa8] sm:$0xff]
  %v1566 = vld [vmem:[%s3 + $0xab0] sm:$0xff]
  %v1567 = vld [vmem:[%s3 + $0xab8] sm:$0xff]
  %v1568 = vld [vmem:[%s3 + $0xac0] sm:$0xff]
  %v1569 = vld [vmem:[%s3 + $0xac8] sm:$0xff]
  %v1570 = vld [vmem:[%s3 + $0xad0] sm:$0xff]
  %v1571 = vld [vmem:[%s3 + $0xad8] sm:$0xff]
  %v1572 = vld [vmem:[%s3 + $0xae0] sm:$0xff]
  %v1573 = vld [vmem:[%s3 + $0xae8] sm:$0xff]
  %v1574 = vld [vmem:[%s3 + $0xaf0] sm:$0xff]
  %v1575 = vld [vmem:[%s3 + $0xaf8] sm:$0xff]
  %v1576 = vld [vmem:[%s3 + $0xb00] sm:$0xff]
  %v1577 = vld [vmem:[%s3 + $0xb08] sm:$0xff]
  %v1578 = vld [vmem:[%s3 + $0xb10] sm:$0xff]
  %v1579 = vld [vmem:[%s3 + $0xb18] sm:$0xff]
  %v1580 = vld [vmem:[%s3 + $0xb20] sm:$0xff]
  %v1581 = vld [vmem:[%s3 + $0xb28] sm:$0xff]
  %v1582 = vld [vmem:[%s3 + $0xb30] sm:$0xff]
  %v1583 = vld [vmem:[%s3 + $0xb38] sm:$0xff]
  %v1584 = vld [vmem:[%s3 + $0xb40] sm:$0xff]
  %v1585 = vld [vmem:[%s3 + $0xb48] sm:$0xff]
  %v1586 = vld [vmem:[%s3 + $0xb50] sm:$0xff]
  %v1587 = vld [vmem:[%s3 + $0xb58] sm:$0xff]
  %v1588 = vld [vmem:[%s3 + $0xb60] sm:$0xff]
  %v1589 = vld [vmem:[%s3 + $0xb68] sm:$0xff]
  %v1590 = vld [vmem:[%s3 + $0xb70] sm:$0xff]
  %v1591 = vld [vmem:[%s3 + $0xb78] sm:$0xff]
  %v1592 = vld [vmem:[%s3 + $0xb80] sm:$0xff]
  %v1593 = vld [vmem:[%s3 + $0xb88] sm:$0xff]
  %v1594 = vld [vmem:[%s3 + $0xb90] sm:$0xff]
  %v1595 = vld [vmem:[%s3 + $0xb98] sm:$0xff]
  %v1596 = vld [vmem:[%s3 + $0xba0] sm:$0xff]
  %v1597 = vld [vmem:[%s3 + $0xba8] sm:$0xff]
  %v1598 = vld [vmem:[%s3 + $0xbb0] sm:$0xff]
  %v1599 = vld [vmem:[%s3 + $0xbb8] sm:$0xff]
  %v1600 = vld [vmem:[%s3 + $0xbc0] sm:$0xff]
  %v1601 = vld [vmem:[%s3 + $0xbc8] sm:$0xff]
  %v1602 = vld [vmem:[%s3 + $0xbd0] sm:$0xff]
  %v1603 = vld [vmem:[%s3 + $0xbd8] sm:$0xff]
  %v1604 = vld [vmem:[%s3 + $0xbe0] sm:$0xff]
  %v1605 = vld [vmem:[%s3 + $0xbe8] sm:$0xff]
  %v1606 = vld [vmem:[%s3 + $0xbf0] sm:$0xff]
  %v1607 = vld [vmem:[%s3 + $0xbf8] sm:$0xff]
  %v1608 = vld [vmem:[%s3 + $0xc00] sm:$0xff]
  %v1609 = vld [vmem:[%s3 + $0xc08] sm:$0xff]
  %v1610 = vld [vmem:[%s3 + $0xc10] sm:$0xff]
  %v1611 = vld [vmem:[%s3 + $0xc18] sm:$0xff]
  %v1612 = vld [vmem:[%s3 + $0xc20] sm:$0xff]
  %v1613 = vld [vmem:[%s3 + $0xc28] sm:$0xff]
  %v1614 = vld [vmem:[%s3 + $0xc30] sm:$0xff]
  %v1615 = vld [vmem:[%s3 + $0xc38] sm:$0xff]
  %v1616 = vld [vmem:[%s3 + $0xc40] sm:$0xff]
  %v1617 = vld [vmem:[%s3 + $0xc48] sm:$0xff]
  %v1618 = vld [vmem:[%s3 + $0xc50] sm:$0xff]
  %v1619 = vld [vmem:[%s3 + $0xc58] sm:$0xff]
  %v1620 = vld [vmem:[%s3 + $0xc60] sm:$0xff]
  %v1621 = vld [vmem:[%s3 + $0xc68] sm:$0xff]
  %v1622 = vld [vmem:[%s3 + $0xc70] sm:$0xff]
  %v1623 = vld [vmem:[%s3 + $0xc78] sm:$0xff]
  %v1624 = vld [vmem:[%s3 + $0xc80] sm:$0xff]
  %v1625 = vld [vmem:[%s3 + $0xc88] sm:$0xff]
  %v1626 = vld [vmem:[%s3 + $0xc90] sm:$0xff]
  %v1627 = vld [vmem:[%s3 + $0xc98] sm:$0xff]
  %v1628 = vld [vmem:[%s3 + $0xca0] sm:$0xff]
  %v1629 = vld [vmem:[%s3 + $0xca8] sm:$0xff]
  %v1630 = vld [vmem:[%s3 + $0xcb0] sm:$0xff]
  %v1631 = vld [vmem:[%s3 + $0xcb8] sm:$0xff]
  %v1632 = vld [vmem:[%s3 + $0xcc0] sm:$0xff]
  %v1633 = vld [vmem:[%s3 + $0xcc8] sm:$0xff]
  %v1634 = vld [vmem:[%s3 + $0xcd0] sm:$0xff]
  %v1635 = vld [vmem:[%s3 + $0xcd8] sm:$0xff]
  %v1636 = vld [vmem:[%s3 + $0xce0] sm:$0xff]
  %v1637 = vld [vmem:[%s3 + $0xce8] sm:$0xff]
  %v1638 = vld [vmem:[%s3 + $0xcf0] sm:$0xff]
  %v1639 = vld [vmem:[%s3 + $0xcf8] sm:$0xff]
  %v1640 = vld [vmem:[%s3 + $0xd00] sm:$0xff]
  %v1641 = vld [vmem:[%s3 + $0xd08] sm:$0xff]
  %v1642 = vld [vmem:[%s3 + $0xd10] sm:$0xff]
  %v1643 = vld [vmem:[%s3 + $0xd18] sm:$0xff]
  %v1644 = vld [vmem:[%s3 + $0xd20] sm:$0xff]
  %v1645 = vld [vmem:[%s3 + $0xd28] sm:$0xff]
  %v1646 = vld [vmem:[%s3 + $0xd30] sm:$0xff]
  %v1647 = vld [vmem:[%s3 + $0xd38] sm:$0xff]
  %v1648 = vld [vmem:[%s3 + $0xd40] sm:$0xff]
  %v1649 = vld [vmem:[%s3 + $0xd48] sm:$0xff]
  %v1650 = vld [vmem:[%s3 + $0xd50] sm:$0xff]
  %v1651 = vld [vmem:[%s3 + $0xd58] sm:$0xff]
  %v1652 = vld [vmem:[%s3 + $0xd60] sm:$0xff]
  %v1653 = vld [vmem:[%s3 + $0xd68] sm:$0xff]
  %v1654 = vld [vmem:[%s3 + $0xd70] sm:$0xff]
  %v1655 = vld [vmem:[%s3 + $0xd78] sm:$0xff]
  %v1656 = vld [vmem:[%s3 + $0xd80] sm:$0xff]
  %v1657 = vld [vmem:[%s3 + $0xd88] sm:$0xff]
  %v1658 = vld [vmem:[%s3 + $0xd90] sm:$0xff]
  %v1659 = vld [vmem:[%s3 + $0xd98] sm:$0xff]
  %v1660 = vld [vmem:[%s3 + $0xda0] sm:$0xff]
  %v1661 = vld [vmem:[%s3 + $0xda8] sm:$0xff]
  %v1662 = vld [vmem:[%s3 + $0xdb0] sm:$0xff]
  %v1663 = vld [vmem:[%s3 + $0xdb8] sm:$0xff]
  %v1664 = vld [vmem:[%s3 + $0xdc0] sm:$0xff]
  %v1665 = vld [vmem:[%s3 + $0xdc8] sm:$0xff]
  %v1666 = vld [vmem:[%s3 + $0xdd0] sm:$0xff]
  %v1667 = vld [vmem:[%s3 + $0xdd8] sm:$0xff]
  %v1668 = vld [vmem:[%s3 + $0xde0] sm:$0xff]
  %v1669 = vld [vmem:[%s3 + $0xde8] sm:$0xff]
  %v1670 = vld [vmem:[%s3 + $0xdf0] sm:$0xff]
  %v1671 = vld [vmem:[%s3 + $0xdf8] sm:$0xff]
  %v1672 = vld [vmem:[%s3 + $0xe00] sm:$0xff]
  %v1673 = vld [vmem:[%s3 + $0xe08] sm:$0xff]
  %v1674 = vld [vmem:[%s3 + $0xe10] sm:$0xff]
  %v1675 = vld [vmem:[%s3 + $0xe18] sm:$0xff]
  %v1676 = vld [vmem:[%s3 + $0xe20] sm:$0xff]
  %v1677 = vld [vmem:[%s3 + $0xe28] sm:$0xff]
  %v1678 = vld [vmem:[%s3 + $0xe30] sm:$0xff]
  %v1679 = vld [vmem:[%s3 + $0xe38] sm:$0xff]
  %v1680 = vld [vmem:[%s3 + $0xe40] sm:$0xff]
  %v1681 = vld [vmem:[%s3 + $0xe48] sm:$0xff]
  %v1682 = vld [vmem:[%s3 + $0xe50] sm:$0xff]
  %v1683 = vld [vmem:[%s3 + $0xe58] sm:$0xff]
  %v1684 = vld [vmem:[%s3 + $0xe60] sm:$0xff]
  %v1685 = vld [vmem:[%s3 + $0xe68] sm:$0xff]
  %v1686 = vld [vmem:[%s3 + $0xe70] sm:$0xff]
  %v1687 = vld [vmem:[%s3 + $0xe78] sm:$0xff]
  %v1688 = vld [vmem:[%s3 + $0xe80] sm:$0xff]
  %v1689 = vld [vmem:[%s3 + $0xe88] sm:$0xff]
  %v1690 = vld [vmem:[%s3 + $0xe90] sm:$0xff]
  %v1691 = vld [vmem:[%s3 + $0xe98] sm:$0xff]
  %v1692 = vld [vmem:[%s3 + $0xea0] sm:$0xff]
  %v1693 = vld [vmem:[%s3 + $0xea8] sm:$0xff]
  %v1694 = vld [vmem:[%s3 + $0xeb0] sm:$0xff]
  %v1695 = vld [vmem:[%s3 + $0xeb8] sm:$0xff]
  %v1696 = vld [vmem:[%s3 + $0xec0] sm:$0xff]
  %v1697 = vld [vmem:[%s3 + $0xec8] sm:$0xff]
  %v1698 = vld [vmem:[%s3 + $0xed0] sm:$0xff]
  %v1699 = vld [vmem:[%s3 + $0xed8] sm:$0xff]
  %v1700 = vld [vmem:[%s3 + $0xee0] sm:$0xff]
  %v1701 = vld [vmem:[%s3 + $0xee8] sm:$0xff]
  %v1702 = vld [vmem:[%s3 + $0xef0] sm:$0xff]
  %v1703 = vld [vmem:[%s3 + $0xef8] sm:$0xff]
  %v1704 = vld [vmem:[%s3 + $0xf00] sm:$0xff]
  %v1705 = vld [vmem:[%s3 + $0xf08] sm:$0xff]
  %v1706 = vld [vmem:[%s3 + $0xf10] sm:$0xff]
  %v1707 = vld [vmem:[%s3 + $0xf18] sm:$0xff]
  %v1708 = vld [vmem:[%s3 + $0xf20] sm:$0xff]
  %v1709 = vld [vmem:[%s3 + $0xf28] sm:$0xff]
  %v1710 = vld [vmem:[%s3 + $0xf30] sm:$0xff]
  %v1711 = vld [vmem:[%s3 + $0xf38] sm:$0xff]
  %v1712 = vld [vmem:[%s3 + $0xf40] sm:$0xff]
  %v1713 = vld [vmem:[%s3 + $0xf48] sm:$0xff]
  %v1714 = vld [vmem:[%s3 + $0xf50] sm:$0xff]
  %v1715 = vld [vmem:[%s3 + $0xf58] sm:$0xff]
  %v1716 = vld [vmem:[%s3 + $0xf60] sm:$0xff]
  %v1717 = vld [vmem:[%s3 + $0xf68] sm:$0xff]
  %v1718 = vld [vmem:[%s3 + $0xf70] sm:$0xff]
  %v1719 = vld [vmem:[%s3 + $0xf78] sm:$0xff]
  %v1720 = vld [vmem:[%s3 + $0xf80] sm:$0xff]
  %v1721 = vld [vmem:[%s3 + $0xf88] sm:$0xff]
  %v1722 = vld [vmem:[%s3 + $0xf90] sm:$0xff]
  %v1723 = vld [vmem:[%s3 + $0xf98] sm:$0xff]
  %v1724 = vld [vmem:[%s3 + $0xfa0] sm:$0xff]
  %v1725 = vld [vmem:[%s3 + $0xfa8] sm:$0xff]
  %v1726 = vld [vmem:[%s3 + $0xfb0] sm:$0xff]
  %v1727 = vld [vmem:[%s3 + $0xfb8] sm:$0xff]
  %v1728 = vld [vmem:[%s3 + $0xfc0] sm:$0xff]
  %v1729 = vld [vmem:[%s3 + $0xfc8] sm:$0xff]
  %v1730 = vld [vmem:[%s3 + $0xfd0] sm:$0xff]
  %v1731 = vld [vmem:[%s3 + $0xfd8] sm:$0xff]
  %v1732 = vld [vmem:[%s3 + $0xfe0] sm:$0xff]
  %v1733 = vld [vmem:[%s3 + $0xfe8] sm:$0xff]
  %v1734 = vld [vmem:[%s3 + $0xff0] sm:$0xff]
  %v1735 = vld [vmem:[%s3 + $0xff8] sm:$0xff]
  %v1736 = vld [vmem:[%s3 + $0x1000] sm:$0xff]
  %v1737 = vld [vmem:[%s3 + $0x1008] sm:$0xff]
  %v1738 = vld [vmem:[%s3 + $0x1010] sm:$0xff]
  %v1739 = vld [vmem:[%s3 + $0x1018] sm:$0xff]
  %v1740 = vld [vmem:[%s3 + $0x1020] sm:$0xff]
  %v1741 = vld [vmem:[%s3 + $0x1028] sm:$0xff]
  %v1742 = vld [vmem:[%s3 + $0x1030] sm:$0xff]
  %v1743 = vld [vmem:[%s3 + $0x1038] sm:$0xff]
  %v1744 = vld [vmem:[%s3 + $0x1040] sm:$0xff]
  %v1745 = vld [vmem:[%s3 + $0x1048] sm:$0xff]
  %v1746 = vld [vmem:[%s3 + $0x1050] sm:$0xff]
  %v1747 = vld [vmem:[%s3 + $0x1058] sm:$0xff]
  %v1748 = vld [vmem:[%s3 + $0x1060] sm:$0xff]
  %v1749 = vld [vmem:[%s3 + $0x1068] sm:$0xff]
  %v1750 = vld [vmem:[%s3 + $0x1070] sm:$0xff]
  %v1751 = vld [vmem:[%s3 + $0x1078] sm:$0xff]
  %v1752 = vld [vmem:[%s3 + $0x1080] sm:$0xff]
  %v1753 = vld [vmem:[%s3 + $0x1088] sm:$0xff]
  %v1754 = vld [vmem:[%s3 + $0x1090] sm:$0xff]
  %v1755 = vld [vmem:[%s3 + $0x1098] sm:$0xff]
  %v1756 = vld [vmem:[%s3 + $0x10a0] sm:$0xff]
  %v1757 = vld [vmem:[%s3 + $0x10a8] sm:$0xff]
  %v1758 = vld [vmem:[%s3 + $0x10b0] sm:$0xff]
  %v1759 = vld [vmem:[%s3 + $0x10b8] sm:$0xff]
  %v1760 = vld [vmem:[%s3 + $0x10c0] sm:$0xff]
  %v1761 = vld [vmem:[%s3 + $0x10c8] sm:$0xff]
  %v1762 = vld [vmem:[%s3 + $0x10d0] sm:$0xff]
  %v1763 = vld [vmem:[%s3 + $0x10d8] sm:$0xff]
  %v1764 = vld [vmem:[%s3 + $0x10e0] sm:$0xff]
  %v1765 = vld [vmem:[%s3 + $0x10e8] sm:$0xff]
  %v1766 = vld [vmem:[%s3 + $0x10f0] sm:$0xff]
  %v1767 = vld [vmem:[%s3 + $0x10f8] sm:$0xff]
  %v1768 = vld [vmem:[%s3 + $0x1100] sm:$0xff]
  %v1769 = vld [vmem:[%s3 + $0x1108] sm:$0xff]
  %v1770 = vld [vmem:[%s3 + $0x1110] sm:$0xff]
  %v1771 = vld [vmem:[%s3 + $0x1118] sm:$0xff]
  %v1772 = vld [vmem:[%s3 + $0x1120] sm:$0xff]
  %v1773 = vld [vmem:[%s3 + $0x1128] sm:$0xff]
  %v1774 = vld [vmem:[%s3 + $0x1130] sm:$0xff]
  %v1775 = vld [vmem:[%s3 + $0x1138] sm:$0xff]
  %v1776 = vld [vmem:[%s3 + $0x1140] sm:$0xff]
  %v1777 = vld [vmem:[%s3 + $0x1148] sm:$0xff]
  %v1778 = vld [vmem:[%s3 + $0x1150] sm:$0xff]
  %v1779 = vld [vmem:[%s3 + $0x1158] sm:$0xff]
  %v1780 = vld [vmem:[%s3 + $0x1160] sm:$0xff]
  %v1781 = vld [vmem:[%s3 + $0x1168] sm:$0xff]
  %v1782 = vld [vmem:[%s3 + $0x1170] sm:$0xff]
  %v1783 = vld [vmem:[%s3 + $0x1178] sm:$0xff]
  %v1784 = vld [vmem:[%s3 + $0x1180] sm:$0xff]
  %v1785 = vld [vmem:[%s3 + $0x1188] sm:$0xff]
  %v1786 = vld [vmem:[%s3 + $0x1190] sm:$0xff]
  %v1787 = vld [vmem:[%s3 + $0x1198] sm:$0xff]
  %v1788 = vld [vmem:[%s3 + $0x11a0] sm:$0xff]
  %v1789 = vld [vmem:[%s3 + $0x11a8] sm:$0xff]
  %v1790 = vld [vmem:[%s3 + $0x11b0] sm:$0xff]
  %v1791 = vld [vmem:[%s3 + $0x11b8] sm:$0xff]
  %v1792 = vld [vmem:[%s3 + $0x11c0] sm:$0xff]
  %v1793 = vld [vmem:[%s3 + $0x11c8] sm:$0xff]
  %v1794 = vld [vmem:[%s3 + $0x11d0] sm:$0xff]
  %v1795 = vld [vmem:[%s3 + $0x11d8] sm:$0xff]
  %v1796 = vld [vmem:[%s3 + $0x11e0] sm:$0xff]
  %v1797 = vld [vmem:[%s3 + $0x11e8] sm:$0xff]
  %v1798 = vld [vmem:[%s3 + $0x11f0] sm:$0xff]
  %v1799 = vld [vmem:[%s3 + $0x11f8] sm:$0xff]
  %v1800 = vld [vmem:[%s3 + $0x1200] sm:$0xff]
  %v1801 = vld [vmem:[%s3 + $0x1208] sm:$0xff]
  %v1802 = vld [vmem:[%s3 + $0x1210] sm:$0xff]
  %v1803 = vld [vmem:[%s3 + $0x1218] sm:$0xff]
  %v1804 = vld [vmem:[%s3 + $0x1220] sm:$0xff]
  %v1805 = vld [vmem:[%s3 + $0x1228] sm:$0xff]
  %v1806 = vld [vmem:[%s3 + $0x1230] sm:$0xff]
  %v1807 = vld [vmem:[%s3 + $0x1238] sm:$0xff]
  %v1808 = vld [vmem:[%s3 + $0x1240] sm:$0xff]
  %v1809 = vld [vmem:[%s3 + $0x1248] sm:$0xff]
  %v1810 = vld [vmem:[%s3 + $0x1250] sm:$0xff]
  %v1811 = vld [vmem:[%s3 + $0x1258] sm:$0xff]
  %v1812 = vld [vmem:[%s3 + $0x1260] sm:$0xff]
  %v1813 = vld [vmem:[%s3 + $0x1268] sm:$0xff]
  %v1814 = vld [vmem:[%s3 + $0x1270] sm:$0xff]
  %v1815 = vld [vmem:[%s3 + $0x1278] sm:$0xff]
  %v1816 = vld [vmem:[%s3 + $0x1280] sm:$0xff]
  %v1817 = vld [vmem:[%s3 + $0x1288] sm:$0xff]
  %v1818 = vld [vmem:[%s3 + $0x1290] sm:$0xff]
  %v1819 = vld [vmem:[%s3 + $0x1298] sm:$0xff]
  %v1820 = vld [vmem:[%s3 + $0x12a0] sm:$0xff]
  %v1821 = vld [vmem:[%s3 + $0x12a8] sm:$0xff]
  %v1822 = vld [vmem:[%s3 + $0x12b0] sm:$0xff]
  %v1823 = vld [vmem:[%s3 + $0x12b8] sm:$0xff]
  %v1824 = vld [vmem:[%s3 + $0x12c0] sm:$0xff]
  %v1825 = vld [vmem:[%s3 + $0x12c8] sm:$0xff]
  %v1826 = vld [vmem:[%s3 + $0x12d0] sm:$0xff]
  %v1827 = vld [vmem:[%s3 + $0x12d8] sm:$0xff]
  %v1828 = vld [vmem:[%s3 + $0x12e0] sm:$0xff]
  %v1829 = vld [vmem:[%s3 + $0x12e8] sm:$0xff]
  %v1830 = vld [vmem:[%s3 + $0x12f0] sm:$0xff]
  %v1831 = vld [vmem:[%s3 + $0x12f8] sm:$0xff]
  %v1832 = vld [vmem:[%s3 + $0x1300] sm:$0xff]
  %v1833 = vld [vmem:[%s3 + $0x1308] sm:$0xff]
  %v1834 = vld [vmem:[%s3 + $0x1310] sm:$0xff]
  %v1835 = vld [vmem:[%s3 + $0x1318] sm:$0xff]
  %v1836 = vld [vmem:[%s3 + $0x1320] sm:$0xff]
  %v1837 = vld [vmem:[%s3 + $0x1328] sm:$0xff]
  %v1838 = vld [vmem:[%s3 + $0x1330] sm:$0xff]
  %v1839 = vld [vmem:[%s3 + $0x1338] sm:$0xff]
  %v1840 = vld [vmem:[%s3 + $0x1340] sm:$0xff]
  %v1841 = vld [vmem:[%s3 + $0x1348] sm:$0xff]
  %v1842 = vld [vmem:[%s3 + $0x1350] sm:$0xff]
  %v1843 = vld [vmem:[%s3 + $0x1358] sm:$0xff]
  %v1844 = vld [vmem:[%s3 + $0x1360] sm:$0xff]
  %v1845 = vld [vmem:[%s3 + $0x1368] sm:$0xff]
  %v1846 = vld [vmem:[%s3 + $0x1370] sm:$0xff]
  %v1847 = vld [vmem:[%s3 + $0x1378] sm:$0xff]
  %v1848 = vld [vmem:[%s3 + $0x1380] sm:$0xff]
  %v1849 = vld [vmem:[%s3 + $0x1388] sm:$0xff]
  %v1850 = vld [vmem:[%s3 + $0x1390] sm:$0xff]
  %v1851 = vld [vmem:[%s3 + $0x1398] sm:$0xff]
  %v1852 = vld [vmem:[%s3 + $0x13a0] sm:$0xff]
  %v1853 = vld [vmem:[%s3 + $0x13a8] sm:$0xff]
  %v1854 = vld [vmem:[%s3 + $0x13b0] sm:$0xff]
  %v1855 = vld [vmem:[%s3 + $0x13b8] sm:$0xff]
  %v1856 = vld [vmem:[%s3 + $0x13c0] sm:$0xff]
  %v1857 = vld [vmem:[%s3 + $0x13c8] sm:$0xff]
  %v1858 = vld [vmem:[%s3 + $0x13d0] sm:$0xff]
  %v1859 = vld [vmem:[%s3 + $0x13d8] sm:$0xff]
  %v1860 = vld [vmem:[%s3 + $0x13e0] sm:$0xff]
  %v1861 = vld [vmem:[%s3 + $0x13e8] sm:$0xff]
  %v1862 = vld [vmem:[%s3 + $0x13f0] sm:$0xff]
  %v1863 = vld [vmem:[%s3 + $0x13f8] sm:$0xff]
  %v1864 = vld [vmem:[%s3 + $0x1400] sm:$0xff]
  %v1865 = vld [vmem:[%s3 + $0x1408] sm:$0xff]
  %v1866 = vld [vmem:[%s3 + $0x1410] sm:$0xff]
  %v1867 = vld [vmem:[%s3 + $0x1418] sm:$0xff]
  %v1868 = vld [vmem:[%s3 + $0x1420] sm:$0xff]
  %v1869 = vld [vmem:[%s3 + $0x1428] sm:$0xff]
  %v1870 = vld [vmem:[%s3 + $0x1430] sm:$0xff]
  %v1871 = vld [vmem:[%s3 + $0x1438] sm:$0xff]
  %v1872 = vld [vmem:[%s3 + $0x1440] sm:$0xff]
  %v1873 = vld [vmem:[%s3 + $0x1448] sm:$0xff]
  %v1874 = vld [vmem:[%s3 + $0x1450] sm:$0xff]
  %v1875 = vld [vmem:[%s3 + $0x1458] sm:$0xff]
  %v1876 = vld [vmem:[%s3 + $0x1460] sm:$0xff]
  %v1877 = vld [vmem:[%s3 + $0x1468] sm:$0xff]
  %v1878 = vld [vmem:[%s3 + $0x1470] sm:$0xff]
  %v1879 = vld [vmem:[%s3 + $0x1478] sm:$0xff]
  %v1880 = vld [vmem:[%s3 + $0x1480] sm:$0xff]
  %v1881 = vld [vmem:[%s3 + $0x1488] sm:$0xff]
  %v1882 = vld [vmem:[%s3 + $0x1490] sm:$0xff]
  %v1883 = vld [vmem:[%s3 + $0x1498] sm:$0xff]
  %v1884 = vld [vmem:[%s3 + $0x14a0] sm:$0xff]
  %v1885 = vld [vmem:[%s3 + $0x14a8] sm:$0xff]
  %v1886 = vld [vmem:[%s3 + $0x14b0] sm:$0xff]
  %v1887 = vld [vmem:[%s3 + $0x14b8] sm:$0xff]
  %v1888 = vld [vmem:[%s3 + $0x14c0] sm:$0xff]
  %v1889 = vld [vmem:[%s3 + $0x14c8] sm:$0xff]
  %v1890 = vld [vmem:[%s3 + $0x14d0] sm:$0xff]
  %v1891 = vld [vmem:[%s3 + $0x14d8] sm:$0xff]
  %v1892 = vld [vmem:[%s3 + $0x14e0] sm:$0xff]
  %v1893 = vld [vmem:[%s3 + $0x14e8] sm:$0xff]
  %v1894 = vld [vmem:[%s3 + $0x14f0] sm:$0xff]
  %v1895 = vld [vmem:[%s3 + $0x14f8] sm:$0xff]
  %v1896 = vld [vmem:[%s3 + $0x1500] sm:$0xff]
  %v1897 = vld [vmem:[%s3 + $0x1508] sm:$0xff]
  %v1898 = vld [vmem:[%s3 + $0x1510] sm:$0xff]
  %v1899 = vld [vmem:[%s3 + $0x1518] sm:$0xff]
  %v1900 = vld [vmem:[%s3 + $0x1520] sm:$0xff]
  %v1901 = vld [vmem:[%s3 + $0x1528] sm:$0xff]
  %v1902 = vld [vmem:[%s3 + $0x1530] sm:$0xff]
  %v1903 = vld [vmem:[%s3 + $0x1538] sm:$0xff]
  %v1904 = vld [vmem:[%s3 + $0x1540] sm:$0xff]
  %v1905 = vld [vmem:[%s3 + $0x1548] sm:$0xff]
  %v1906 = vld [vmem:[%s3 + $0x1550] sm:$0xff]
  %v1907 = vld [vmem:[%s3 + $0x1558] sm:$0xff]
  %v1908 = vld [vmem:[%s3 + $0x1560] sm:$0xff]
  %v1909 = vld [vmem:[%s3 + $0x1568] sm:$0xff]
  %v1910 = vld [vmem:[%s3 + $0x1570] sm:$0xff]
  %v1911 = vld [vmem:[%s3 + $0x1578] sm:$0xff]
  %v1912 = vld [vmem:[%s3 + $0x1580] sm:$0xff]
  %v1913 = vld [vmem:[%s3 + $0x1588] sm:$0xff]
  %v1914 = vld [vmem:[%s3 + $0x1590] sm:$0xff]
  %v1915 = vld [vmem:[%s3 + $0x1598] sm:$0xff]
  %v1916 = vld [vmem:[%s3 + $0x15a0] sm:$0xff]
  %v1917 = vld [vmem:[%s3 + $0x15a8] sm:$0xff]
  %v1918 = vld [vmem:[%s3 + $0x15b0] sm:$0xff]
  %v1919 = vld [vmem:[%s3 + $0x15b8] sm:$0xff]
  %v1920 = vld [vmem:[%s3 + $0x15c0] sm:$0xff]
  %v1921 = vld [vmem:[%s3 + $0x15c8] sm:$0xff]
  %v1922 = vld [vmem:[%s3 + $0x15d0] sm:$0xff]
  %v1923 = vld [vmem:[%s3 + $0x15d8] sm:$0xff]
  %v1924 = vld [vmem:[%s3 + $0x15e0] sm:$0xff]
  %v1925 = vld [vmem:[%s3 + $0x15e8] sm:$0xff]
  %v1926 = vld [vmem:[%s3 + $0x15f0] sm:$0xff]
  %v1927 = vld [vmem:[%s3 + $0x15f8] sm:$0xff]
  %v1928 = vld [vmem:[%s3 + $0x1600] sm:$0xff]
  %v1929 = vld [vmem:[%s3 + $0x1608] sm:$0xff]
  %v1930 = vld [vmem:[%s3 + $0x1610] sm:$0xff]
  %v1931 = vld [vmem:[%s3 + $0x1618] sm:$0xff]
  %v1932 = vld [vmem:[%s3 + $0x1620] sm:$0xff]
  %v1933 = vld [vmem:[%s3 + $0x1628] sm:$0xff]
  %v1934 = vld [vmem:[%s3 + $0x1630] sm:$0xff]
  %v1935 = vld [vmem:[%s3 + $0x1638] sm:$0xff]
  %v1936 = vld [vmem:[%s3 + $0x1640] sm:$0xff]
  %v1937 = vld [vmem:[%s3 + $0x1648] sm:$0xff]
  %v1938 = vld [vmem:[%s3 + $0x1650] sm:$0xff]
  %v1939 = vld [vmem:[%s3 + $0x1658] sm:$0xff]
  %v1940 = vld [vmem:[%s3 + $0x1660] sm:$0xff]
  %v1941 = vld [vmem:[%s3 + $0x1668] sm:$0xff]
  %v1942 = vld [vmem:[%s3 + $0x1670] sm:$0xff]
  %v1943 = vld [vmem:[%s3 + $0x1678] sm:$0xff]
  %v1944 = vld [vmem:[%s3 + $0x1680] sm:$0xff]
  %v1945 = vld [vmem:[%s3 + $0x1688] sm:$0xff]
  %v1946 = vld [vmem:[%s3 + $0x1690] sm:$0xff]
  %v1947 = vld [vmem:[%s3 + $0x1698] sm:$0xff]
  %v1948 = vld [vmem:[%s3 + $0x16a0] sm:$0xff]
  %v1949 = vld [vmem:[%s3 + $0x16a8] sm:$0xff]
  %v1950 = vld [vmem:[%s3 + $0x16b0] sm:$0xff]
  %v1951 = vld [vmem:[%s3 + $0x16b8] sm:$0xff]
  %v1952 = vld [vmem:[%s3 + $0x16c0] sm:$0xff]
  %v1953 = vld [vmem:[%s3 + $0x16c8] sm:$0xff]
  %v1954 = vld [vmem:[%s3 + $0x16d0] sm:$0xff]
  %v1955 = vld [vmem:[%s3 + $0x16d8] sm:$0xff]
  %v1956 = vld [vmem:[%s3 + $0x16e0] sm:$0xff]
  %v1957 = vld [vmem:[%s3 + $0x16e8] sm:$0xff]
  %v1958 = vld [vmem:[%s3 + $0x16f0] sm:$0xff]
  %v1959 = vld [vmem:[%s3 + $0x16f8] sm:$0xff]
  %v1960 = vld [vmem:[%s3 + $0x1700] sm:$0xff]
  %v1961 = vld [vmem:[%s3 + $0x1708] sm:$0xff]
  %v1962 = vld [vmem:[%s3 + $0x1710] sm:$0xff]
  %v1963 = vld [vmem:[%s3 + $0x1718] sm:$0xff]
  %v1964 = vld [vmem:[%s3 + $0x1720] sm:$0xff]
  %v1965 = vld [vmem:[%s3 + $0x1728] sm:$0xff]
  %v1966 = vld [vmem:[%s3 + $0x1730] sm:$0xff]
  %v1967 = vld [vmem:[%s3 + $0x1738] sm:$0xff]
  %v1968 = vld [vmem:[%s3 + $0x1740] sm:$0xff]
  %v1969 = vld [vmem:[%s3 + $0x1748] sm:$0xff]
  %v1970 = vld [vmem:[%s3 + $0x1750] sm:$0xff]
  %v1971 = vld [vmem:[%s3 + $0x1758] sm:$0xff]
  %v1972 = vld [vmem:[%s3 + $0x1760] sm:$0xff]
  %v1973 = vld [vmem:[%s3 + $0x1768] sm:$0xff]
  %v1974 = vld [vmem:[%s3 + $0x1770] sm:$0xff]
  %v1975 = vld [vmem:[%s3 + $0x1778] sm:$0xff]
  %v1976 = vld [vmem:[%s3 + $0x1780] sm:$0xff]
  %v1977 = vld [vmem:[%s3 + $0x1788] sm:$0xff]
  %v1978 = vld [vmem:[%s3 + $0x1790] sm:$0xff]
  %v1979 = vld [vmem:[%s3 + $0x1798] sm:$0xff]
  %v1980 = vld [vmem:[%s3 + $0x17a0] sm:$0xff]
  %v1981 = vld [vmem:[%s3 + $0x17a8] sm:$0xff]
  %v1982 = vld [vmem:[%s3 + $0x17b0] sm:$0xff]
  %v1983 = vld [vmem:[%s3 + $0x17b8] sm:$0xff]
  %v1984 = vld [vmem:[%s3 + $0x17c0] sm:$0xff]
  %v1985 = vld [vmem:[%s3 + $0x17c8] sm:$0xff]
  %v1986 = vld [vmem:[%s3 + $0x17d0] sm:$0xff]
  %v1987 = vld [vmem:[%s3 + $0x17d8] sm:$0xff]
  %v1988 = vld [vmem:[%s3 + $0x17e0] sm:$0xff]
  %v1989 = vld [vmem:[%s3 + $0x17e8] sm:$0xff]
  %v1990 = vld [vmem:[%s3 + $0x17f0] sm:$0xff]
  %v1991 = vld [vmem:[%s3 + $0x17f8] sm:$0xff]
  %v1992 = vld [vmem:[%s3 + $0x1800] sm:$0xff]
  %v1993 = vld [vmem:[%s3 + $0x1808] sm:$0xff]
  %v1994 = vld [vmem:[%s3 + $0x1810] sm:$0xff]
  %v1995 = vld [vmem:[%s3 + $0x1818] sm:$0xff]
  %v1996 = vld [vmem:[%s3 + $0x1820] sm:$0xff]
  %v1997 = vld [vmem:[%s3 + $0x1828] sm:$0xff]
  %v1998 = vld [vmem:[%s3 + $0x1830] sm:$0xff]
  %v1999 = vld [vmem:[%s3 + $0x1838] sm:$0xff]
  %v2000 = vld [vmem:[%s3 + $0x1840] sm:$0xff]
  %v2001 = vld [vmem:[%s3 + $0x1848] sm:$0xff]
  %v2002 = vld [vmem:[%s3 + $0x1850] sm:$0xff]
  %v2003 = vld [vmem:[%s3 + $0x1858] sm:$0xff]
  %v2004 = vld [vmem:[%s3 + $0x1860] sm:$0xff]
  %v2005 = vld [vmem:[%s3 + $0x1868] sm:$0xff]
  %v2006 = vld [vmem:[%s3 + $0x1870] sm:$0xff]
  %v2007 = vld [vmem:[%s3 + $0x1878] sm:$0xff]
  %v2008 = vld [vmem:[%s3 + $0x1880] sm:$0xff]
  %v2009 = vld [vmem:[%s3 + $0x1888] sm:$0xff]
  %v2010 = vld [vmem:[%s3 + $0x1890] sm:$0xff]
  %v2011 = vld [vmem:[%s3 + $0x1898] sm:$0xff]
  %v2012 = vld [vmem:[%s3 + $0x18a0] sm:$0xff]
  %v2013 = vld [vmem:[%s3 + $0x18a8] sm:$0xff]
  %v2014 = vld [vmem:[%s3 + $0x18b0] sm:$0xff]
  %v2015 = vld [vmem:[%s3 + $0x18b8] sm:$0xff]
  %v2016 = vld [vmem:[%s3 + $0x18c0] sm:$0xff]
  %v2017 = vld [vmem:[%s3 + $0x18c8] sm:$0xff]
  %v2018 = vld [vmem:[%s3 + $0x18d0] sm:$0xff]
  %v2019 = vld [vmem:[%s3 + $0x18d8] sm:$0xff]
  %v2020 = vld [vmem:[%s3 + $0x18e0] sm:$0xff]
  %v2021 = vld [vmem:[%s3 + $0x18e8] sm:$0xff]
  %v2022 = vld [vmem:[%s3 + $0x18f0] sm:$0xff]
  %v2023 = vld [vmem:[%s3 + $0x18f8] sm:$0xff]
  %v2024 = vld [vmem:[%s3 + $0x1900] sm:$0xff]
  %v2025 = vld [vmem:[%s3 + $0x1908] sm:$0xff]
  %v2026 = vld [vmem:[%s3 + $0x1910] sm:$0xff]
  %v2027 = vld [vmem:[%s3 + $0x1918] sm:$0xff]
  %v2028 = vld [vmem:[%s3 + $0x1920] sm:$0xff]
  %v2029 = vld [vmem:[%s3 + $0x1928] sm:$0xff]
  %v2030 = vld [vmem:[%s3 + $0x1930] sm:$0xff]
  %v2031 = vld [vmem:[%s3 + $0x1938] sm:$0xff]
  %v2032 = vld [vmem:[%s3 + $0x1940] sm:$0xff]
  %v2033 = vld [vmem:[%s3 + $0x1948] sm:$0xff]
  %v2034 = vld [vmem:[%s3 + $0x1950] sm:$0xff]
  %v2035 = vld [vmem:[%s3 + $0x1958] sm:$0xff]
  %v2036 = vld [vmem:[%s3 + $0x1960] sm:$0xff]
  %v2037 = vld [vmem:[%s3 + $0x1968] sm:$0xff]
  %v2038 = vld [vmem:[%s3 + $0x1970] sm:$0xff]
  %v2039 = vld [vmem:[%s3 + $0x1978] sm:$0xff]
  %v2040 = vld [vmem:[%s3 + $0x1980] sm:$0xff]
  %v2041 = vld [vmem:[%s3 + $0x1988] sm:$0xff]
  %v2042 = vld [vmem:[%s3 + $0x1990] sm:$0xff]
  %v2043 = vld [vmem:[%s3 + $0x1998] sm:$0xff]
  %v2044 = vld [vmem:[%s3 + $0x19a0] sm:$0xff]
  %v2045 = vld [vmem:[%s3 + $0x19a8] sm:$0xff]
  %v2046 = vld [vmem:[%s3 + $0x19b0] sm:$0xff]
  %v2047 = vld [vmem:[%s3 + $0x19b8] sm:$0xff]
  %v2048 = vld [vmem:[%s3 + $0x19c0] sm:$0xff]
  %v2049 = vld [vmem:[%s3 + $0x19c8] sm:$0xff]
  %v2050 = vld [vmem:[%s3 + $0x19d0] sm:$0xff]
  %v2051 = vld [vmem:[%s3 + $0x19d8] sm:$0xff]
  %v2052 = vld [vmem:[%s3 + $0x19e0] sm:$0xff]
  %v2053 = vld [vmem:[%s3 + $0x19e8] sm:$0xff]
  %v2054 = vld [vmem:[%s3 + $0x19f0] sm:$0xff]
  %v2055 = vld [vmem:[%s3 + $0x19f8] sm:$0xff]
  %v2056 = vld [vmem:[%s3 + $0x1a00] sm:$0xff]
  %v2057 = vld [vmem:[%s3 + $0x1a08] sm:$0xff]
  %v2058 = vld [vmem:[%s3 + $0x1a10] sm:$0xff]
  %v2059 = vld [vmem:[%s3 + $0x1a18] sm:$0xff]
  %v2060 = vld [vmem:[%s3 + $0x1a20] sm:$0xff]
  %v2061 = vld [vmem:[%s3 + $0x1a28] sm:$0xff]
  %v2062 = vld [vmem:[%s3 + $0x1a30] sm:$0xff]
  %v2063 = vld [vmem:[%s3 + $0x1a38] sm:$0xff]
  %v2064 = vld [vmem:[%s3 + $0x1a40] sm:$0xff]
  %v2065 = vld [vmem:[%s3 + $0x1a48] sm:$0xff]
  %v2066 = vld [vmem:[%s3 + $0x1a50] sm:$0xff]
  %v2067 = vld [vmem:[%s3 + $0x1a58] sm:$0xff]
  %v2068 = vld [vmem:[%s3 + $0x1a60] sm:$0xff]
  %v2069 = vld [vmem:[%s3 + $0x1a68] sm:$0xff]
  %v2070 = vld [vmem:[%s3 + $0x1a70] sm:$0xff]
  %v2071 = vld [vmem:[%s3 + $0x1a78] sm:$0xff]
  %v2072 = vld [vmem:[%s3 + $0x1a80] sm:$0xff]
  %v2073 = vld [vmem:[%s3 + $0x1a88] sm:$0xff]
  %v2074 = vld [vmem:[%s3 + $0x1a90] sm:$0xff]
  %v2075 = vld [vmem:[%s3 + $0x1a98] sm:$0xff]
  %v2076 = vld [vmem:[%s3 + $0x1aa0] sm:$0xff]
  %v2077 = vld [vmem:[%s3 + $0x1aa8] sm:$0xff]
  %v2078 = vld [vmem:[%s3 + $0x1ab0] sm:$0xff]
  %v2079 = vld [vmem:[%s3 + $0x1ab8] sm:$0xff]
  %v2080 = vld [vmem:[%s3 + $0x1ac0] sm:$0xff]
  %v2081 = vld [vmem:[%s3 + $0x1ac8] sm:$0xff]
  %v2082 = vld [vmem:[%s3 + $0x1ad0] sm:$0xff]
  %v2083 = vld [vmem:[%s3 + $0x1ad8] sm:$0xff]
  %v2084 = vld [vmem:[%s3 + $0x1ae0] sm:$0xff]
  %v2085 = vld [vmem:[%s3 + $0x1ae8] sm:$0xff]
  %v2086 = vld [vmem:[%s3 + $0x1af0] sm:$0xff]
  %v2087 = vld [vmem:[%s3 + $0x1af8] sm:$0xff]
  %v2088 = vld [vmem:[%s3 + $0x1b00] sm:$0xff]
  %v2089 = vld [vmem:[%s3 + $0x1b08] sm:$0xff]
  %v2090 = vld [vmem:[%s3 + $0x1b10] sm:$0xff]
  %v2091 = vld [vmem:[%s3 + $0x1b18] sm:$0xff]
  %v2092 = vld [vmem:[%s3 + $0x1b20] sm:$0xff]
  %v2093 = vld [vmem:[%s3 + $0x1b28] sm:$0xff]
  %v2094 = vld [vmem:[%s3 + $0x1b30] sm:$0xff]
  %v2095 = vld [vmem:[%s3 + $0x1b38] sm:$0xff]
  %v2096 = vld [vmem:[%s3 + $0x1b40] sm:$0xff]
  %v2097 = vld [vmem:[%s3 + $0x1b48] sm:$0xff]
  %v2098 = vld [vmem:[%s3 + $0x1b50] sm:$0xff]
  %v2099 = vld [vmem:[%s3 + $0x1b58] sm:$0xff]
  %v2100 = vld [vmem:[%s3 + $0x1b60] sm:$0xff]
  %v2101 = vld [vmem:[%s3 + $0x1b68] sm:$0xff]
  %v2102 = vld [vmem:[%s3 + $0x1b70] sm:$0xff]
  %v2103 = vld [vmem:[%s3 + $0x1b78] sm:$0xff]
  %v2104 = vld [vmem:[%s3 + $0x1b80] sm:$0xff]
  %v2105 = vld [vmem:[%s3 + $0x1b88] sm:$0xff]
  %v2106 = vld [vmem:[%s3 + $0x1b90] sm:$0xff]
  %v2107 = vld [vmem:[%s3 + $0x1b98] sm:$0xff]
  %v2108 = vld [vmem:[%s3 + $0x1ba0] sm:$0xff]
  %v2109 = vld [vmem:[%s3 + $0x1ba8] sm:$0xff]
  %v2110 = vld [vmem:[%s3 + $0x1bb0] sm:$0xff]
  %v2111 = vld [vmem:[%s3 + $0x1bb8] sm:$0xff]
  %v2112 = vld [vmem:[%s3 + $0x1bc0] sm:$0xff]
  %v2113 = vld [vmem:[%s3 + $0x1bc8] sm:$0xff]
  %v2114 = vld [vmem:[%s3 + $0x1bd0] sm:$0xff]
  %v2115 = vld [vmem:[%s3 + $0x1bd8] sm:$0xff]
  %v2116 = vld [vmem:[%s3 + $0x1be0] sm:$0xff]
  %v2117 = vld [vmem:[%s3 + $0x1be8] sm:$0xff]
  %v2118 = vld [vmem:[%s3 + $0x1bf0] sm:$0xff]
  %v2119 = vld [vmem:[%s3 + $0x1bf8] sm:$0xff]
  %v2120 = vld [vmem:[%s3 + $0x1c00] sm:$0xff]
  %v2121 = vld [vmem:[%s3 + $0x1c08] sm:$0xff]
  %v2122 = vld [vmem:[%s3 + $0x1c10] sm:$0xff]
  %v2123 = vld [vmem:[%s3 + $0x1c18] sm:$0xff]
  %v2124 = vld [vmem:[%s3 + $0x1c20] sm:$0xff]
  %v2125 = vld [vmem:[%s3 + $0x1c28] sm:$0xff]
  %v2126 = vld [vmem:[%s3 + $0x1c30] sm:$0xff]
  %v2127 = vld [vmem:[%s3 + $0x1c38] sm:$0xff]
  %v2128 = vld [vmem:[%s3 + $0x1c40] sm:$0xff]
  %v2129 = vld [vmem:[%s3 + $0x1c48] sm:$0xff]
  %v2130 = vld [vmem:[%s3 + $0x1c50] sm:$0xff]
  %v2131 = vld [vmem:[%s3 + $0x1c58] sm:$0xff]
  %v2132 = vld [vmem:[%s3 + $0x1c60] sm:$0xff]
  %v2133 = vld [vmem:[%s3 + $0x1c68] sm:$0xff]
  %v2134 = vld [vmem:[%s3 + $0x1c70] sm:$0xff]
  %v2135 = vld [vmem:[%s3 + $0x1c78] sm:$0xff]
  %v2136 = vld [vmem:[%s3 + $0x1c80] sm:$0xff]
  %v2137 = vld [vmem:[%s3 + $0x1c88] sm:$0xff]
  %v2138 = vld [vmem:[%s3 + $0x1c90] sm:$0xff]
  %v2139 = vld [vmem:[%s3 + $0x1c98] sm:$0xff]
  %v2140 = vld [vmem:[%s3 + $0x1ca0] sm:$0xff]
  %v2141 = vld [vmem:[%s3 + $0x1ca8] sm:$0xff]
  %v2142 = vld [vmem:[%s3 + $0x1cb0] sm:$0xff]
  %v2143 = vld [vmem:[%s3 + $0x1cb8] sm:$0xff]
  %v2144 = vld [vmem:[%s3 + $0x1cc0] sm:$0xff]
  %v2145 = vld [vmem:[%s3 + $0x1cc8] sm:$0xff]
  %v2146 = vld [vmem:[%s3 + $0x1cd0] sm:$0xff]
  %v2147 = vld [vmem:[%s3 + $0x1cd8] sm:$0xff]
  %v2148 = vld [vmem:[%s3 + $0x1ce0] sm:$0xff]
  %v2149 = vld [vmem:[%s3 + $0x1ce8] sm:$0xff]
  %v2150 = vld [vmem:[%s3 + $0x1cf0] sm:$0xff]
  %v2151 = vld [vmem:[%s3 + $0x1cf8] sm:$0xff]
  %v2152 = vld [vmem:[%s3 + $0x1d00] sm:$0xff]
  %v2153 = vld [vmem:[%s3 + $0x1d08] sm:$0xff]
  %v2154 = vld [vmem:[%s3 + $0x1d10] sm:$0xff]
  %v2155 = vld [vmem:[%s3 + $0x1d18] sm:$0xff]
  %v2156 = vld [vmem:[%s3 + $0x1d20] sm:$0xff]
  %v2157 = vld [vmem:[%s3 + $0x1d28] sm:$0xff]
  %v2158 = vld [vmem:[%s3 + $0x1d30] sm:$0xff]
  %v2159 = vld [vmem:[%s3 + $0x1d38] sm:$0xff]
  %v2160 = vld [vmem:[%s3 + $0x1d40] sm:$0xff]
  %v2161 = vld [vmem:[%s3 + $0x1d48] sm:$0xff]
  %v2162 = vld [vmem:[%s3 + $0x1d50] sm:$0xff]
  %v2163 = vld [vmem:[%s3 + $0x1d58] sm:$0xff]
  %v2164 = vld [vmem:[%s3 + $0x1d60] sm:$0xff]
  %v2165 = vld [vmem:[%s3 + $0x1d68] sm:$0xff]
  %v2166 = vld [vmem:[%s3 + $0x1d70] sm:$0xff]
  %v2167 = vld [vmem:[%s3 + $0x1d78] sm:$0xff]
  %v2168 = vld [vmem:[%s3 + $0x1d80] sm:$0xff]
  %v2169 = vld [vmem:[%s3 + $0x1d88] sm:$0xff]
  %v2170 = vld [vmem:[%s3 + $0x1d90] sm:$0xff]
  %v2171 = vld [vmem:[%s3 + $0x1d98] sm:$0xff]
  %v2172 = vld [vmem:[%s3 + $0x1da0] sm:$0xff]
  %v2173 = vld [vmem:[%s3 + $0x1da8] sm:$0xff]
  %v2174 = vld [vmem:[%s3 + $0x1db0] sm:$0xff]
  %v2175 = vld [vmem:[%s3 + $0x1db8] sm:$0xff]
  %v2176 = vld [vmem:[%s3 + $0x1dc0] sm:$0xff]
  %v2177 = vld [vmem:[%s3 + $0x1dc8] sm:$0xff]
  %v2178 = vld [vmem:[%s3 + $0x1dd0] sm:$0xff]
  %v2179 = vld [vmem:[%s3 + $0x1dd8] sm:$0xff]
  %v2180 = vld [vmem:[%s3 + $0x1de0] sm:$0xff]
  %v2181 = vld [vmem:[%s3 + $0x1de8] sm:$0xff]
  %v2182 = vld [vmem:[%s3 + $0x1df0] sm:$0xff]
  %v2183 = vld [vmem:[%s3 + $0x1df8] sm:$0xff]
  %v2184 = vld [vmem:[%s3 + $0x1e00] sm:$0xff]
  %v2185 = vld [vmem:[%s3 + $0x1e08] sm:$0xff]
  %v2186 = vld [vmem:[%s3 + $0x1e10] sm:$0xff]
  %v2187 = vld [vmem:[%s3 + $0x1e18] sm:$0xff]
  %v2188 = vld [vmem:[%s3 + $0x1e20] sm:$0xff]
  %v2189 = vld [vmem:[%s3 + $0x1e28] sm:$0xff]
  %v2190 = vld [vmem:[%s3 + $0x1e30] sm:$0xff]
  %v2191 = vld [vmem:[%s3 + $0x1e38] sm:$0xff]
  %v2192 = vld [vmem:[%s3 + $0x1e40] sm:$0xff]
  %v2193 = vld [vmem:[%s3 + $0x1e48] sm:$0xff]
  %v2194 = vld [vmem:[%s3 + $0x1e50] sm:$0xff]
  %v2195 = vld [vmem:[%s3 + $0x1e58] sm:$0xff]
  %v2196 = vld [vmem:[%s3 + $0x1e60] sm:$0xff]
  %v2197 = vld [vmem:[%s3 + $0x1e68] sm:$0xff]
  %v2198 = vld [vmem:[%s3 + $0x1e70] sm:$0xff]
  %v2199 = vld [vmem:[%s3 + $0x1e78] sm:$0xff]
  %v2200 = vld [vmem:[%s3 + $0x1e80] sm:$0xff]
  %v2201 = vld [vmem:[%s3 + $0x1e88] sm:$0xff]
  %v2202 = vld [vmem:[%s3 + $0x1e90] sm:$0xff]
  %v2203 = vld [vmem:[%s3 + $0x1e98] sm:$0xff]
  %v2204 = vld [vmem:[%s3 + $0x1ea0] sm:$0xff]
  %v2205 = vld [vmem:[%s3 + $0x1ea8] sm:$0xff]
  %v2206 = vld [vmem:[%s3 + $0x1eb0] sm:$0xff]
  %v2207 = vld [vmem:[%s3 + $0x1eb8] sm:$0xff]
  %v2208 = vld [vmem:[%s3 + $0x1ec0] sm:$0xff]
  %v2209 = vld [vmem:[%s3 + $0x1ec8] sm:$0xff]
  %v2210 = vld [vmem:[%s3 + $0x1ed0] sm:$0xff]
  %v2211 = vld [vmem:[%s3 + $0x1ed8] sm:$0xff]
  %v2212 = vld [vmem:[%s3 + $0x1ee0] sm:$0xff]
  %v2213 = vld [vmem:[%s3 + $0x1ee8] sm:$0xff]
  %v2214 = vld [vmem:[%s3 + $0x1ef0] sm:$0xff]
  %v2215 = vld [vmem:[%s3 + $0x1ef8] sm:$0xff]
  %v2216 = vld [vmem:[%s3 + $0x1f00] sm:$0xff]
  %v2217 = vld [vmem:[%s3 + $0x1f08] sm:$0xff]
  %v2218 = vld [vmem:[%s3 + $0x1f10] sm:$0xff]
  %v2219 = vld [vmem:[%s3 + $0x1f18] sm:$0xff]
  %v2220 = vld [vmem:[%s3 + $0x1f20] sm:$0xff]
  %v2221 = vld [vmem:[%s3 + $0x1f28] sm:$0xff]
  %v2222 = vld [vmem:[%s3 + $0x1f30] sm:$0xff]
  %v2223 = vld [vmem:[%s3 + $0x1f38] sm:$0xff]
  %v2224 = vld [vmem:[%s3 + $0x1f40] sm:$0xff]
  %v2225 = vld [vmem:[%s3 + $0x1f48] sm:$0xff]
  %v2226 = vld [vmem:[%s3 + $0x1f50] sm:$0xff]
  %v2227 = vld [vmem:[%s3 + $0x1f58] sm:$0xff]
  %v2228 = vld [vmem:[%s3 + $0x1f60] sm:$0xff]
  %v2229 = vld [vmem:[%s3 + $0x1f68] sm:$0xff]
  %v2230 = vld [vmem:[%s3 + $0x1f70] sm:$0xff]
  %v2231 = vld [vmem:[%s3 + $0x1f78] sm:$0xff]
  %v2232 = vld [vmem:[%s3 + $0x1f80] sm:$0xff]
  %v2233 = vld [vmem:[%s3 + $0x1f88] sm:$0xff]
  %v2234 = vld [vmem:[%s3 + $0x1f90] sm:$0xff]
  %v2235 = vld [vmem:[%s3 + $0x1f98] sm:$0xff]
  %v2236 = vld [vmem:[%s3 + $0x1fa0] sm:$0xff]
  %v2237 = vld [vmem:[%s3 + $0x1fa8] sm:$0xff]
  %v2238 = vld [vmem:[%s3 + $0x1fb0] sm:$0xff]
  %v2239 = vld [vmem:[%s3 + $0x1fb8] sm:$0xff]
  %v2240 = vld [vmem:[%s3 + $0x1fc0] sm:$0xff]
  %v2241 = vld [vmem:[%s3 + $0x1fc8] sm:$0xff]
  %v2242 = vld [vmem:[%s3 + $0x1fd0] sm:$0xff]
  %v2243 = vld [vmem:[%s3 + $0x1fd8] sm:$0xff]
  %v2244 = vld [vmem:[%s3 + $0x1fe0] sm:$0xff]
  %v2245 = vld [vmem:[%s3 + $0x1fe8] sm:$0xff]
  %v2246 = vld [vmem:[%s3 + $0x1ff0] sm:$0xff]
  %v2247 = vld [vmem:[%s3 + $0x1ff8] sm:$0xff]
  %v2248 = vld [vmem:[%s3 + $0x2000] sm:$0xff]
  %v2249 = vld [vmem:[%s3 + $0x2008] sm:$0xff]
  %v2250 = vld [vmem:[%s3 + $0x2010] sm:$0xff]
  %v2251 = vld [vmem:[%s3 + $0x2018] sm:$0xff]
  %v2252 = vld [vmem:[%s3 + $0x2020] sm:$0xff]
  %v2253 = vld [vmem:[%s3 + $0x2028] sm:$0xff]
  %v2254 = vld [vmem:[%s3 + $0x2030] sm:$0xff]
  %v2255 = vld [vmem:[%s3 + $0x2038] sm:$0xff]
  %v2256 = vld [vmem:[%s3 + $0x2040] sm:$0xff]
  %v2257 = vld [vmem:[%s3 + $0x2048] sm:$0xff]
  %v2258 = vld [vmem:[%s3 + $0x2050] sm:$0xff]
  %v2259 = vld [vmem:[%s3 + $0x2058] sm:$0xff]
  %v2260 = vld [vmem:[%s3 + $0x2060] sm:$0xff]
  %v2261 = vld [vmem:[%s3 + $0x2068] sm:$0xff]
  %v2262 = vld [vmem:[%s3 + $0x2070] sm:$0xff]
  %v2263 = vld [vmem:[%s3 + $0x2078] sm:$0xff]
  %v2264 = vld [vmem:[%s3 + $0x2080] sm:$0xff]
  %v2265 = vld [vmem:[%s3 + $0x2088] sm:$0xff]
  %v2266 = vld [vmem:[%s3 + $0x2090] sm:$0xff]
  %v2267 = vld [vmem:[%s3 + $0x2098] sm:$0xff]
  %v2268 = vld [vmem:[%s3 + $0x20a0] sm:$0xff]
  %v2269 = vld [vmem:[%s3 + $0x20a8] sm:$0xff]
  %v2270 = vld [vmem:[%s3 + $0x20b0] sm:$0xff]
  %v2271 = vld [vmem:[%s3 + $0x20b8] sm:$0xff]
  %v2272 = vld [vmem:[%s3 + $0x20c0] sm:$0xff]
  %v2273 = vld [vmem:[%s3 + $0x20c8] sm:$0xff]
  %v2274 = vld [vmem:[%s3 + $0x20d0] sm:$0xff]
  %v2275 = vld [vmem:[%s3 + $0x20d8] sm:$0xff]
  %v2276 = vld [vmem:[%s3 + $0x20e0] sm:$0xff]
  %v2277 = vld [vmem:[%s3 + $0x20e8] sm:$0xff]
  %v2278 = vld [vmem:[%s3 + $0x20f0] sm:$0xff]
  %v2279 = vld [vmem:[%s3 + $0x20f8] sm:$0xff]
  %v2280 = vld [vmem:[%s3 + $0x2100] sm:$0xff]
  %v2281 = vld [vmem:[%s3 + $0x2108] sm:$0xff]
  %v2282 = vld [vmem:[%s3 + $0x2110] sm:$0xff]
  %v2283 = vld [vmem:[%s3 + $0x2118] sm:$0xff]
  %v2284 = vld [vmem:[%s3 + $0x2120] sm:$0xff]
  %v2285 = vld [vmem:[%s3 + $0x2128] sm:$0xff]
  %v2286 = vld [vmem:[%s3 + $0x2130] sm:$0xff]
  %v2287 = vld [vmem:[%s3 + $0x2138] sm:$0xff]
  %v2288 = vld [vmem:[%s3 + $0x2140] sm:$0xff]
  %v2289 = vld [vmem:[%s3 + $0x2148] sm:$0xff]
  %v2290 = vld [vmem:[%s3 + $0x2150] sm:$0xff]
  %v2291 = vld [vmem:[%s3 + $0x2158] sm:$0xff]
  %v2292 = vld [vmem:[%s3 + $0x2160] sm:$0xff]
  %v2293 = vld [vmem:[%s3 + $0x2168] sm:$0xff]
  %v2294 = vld [vmem:[%s3 + $0x2170] sm:$0xff]
  %v2295 = vld [vmem:[%s3 + $0x2178] sm:$0xff]
  %v2296 = vld [vmem:[%s3 + $0x2180] sm:$0xff]
  %v2297 = vld [vmem:[%s3 + $0x2188] sm:$0xff]
  %v2298 = vld [vmem:[%s3 + $0x2190] sm:$0xff]
  %v2299 = vld [vmem:[%s3 + $0x2198] sm:$0xff]
  %v2300 = vld [vmem:[%s3 + $0x21a0] sm:$0xff]
  %v2301 = vld [vmem:[%s3 + $0x21a8] sm:$0xff]
  %v2302 = vld [vmem:[%s3 + $0x21b0] sm:$0xff]
  %v2303 = vld [vmem:[%s3 + $0x21b8] sm:$0xff]
  %v2304 = vld [vmem:[%s3 + $0x21c0] sm:$0xff]
  %v2305 = vld [vmem:[%s3 + $0x21c8] sm:$0xff]
  %v2306 = vld [vmem:[%s3 + $0x21d0] sm:$0xff]
  %v2307 = vld [vmem:[%s3 + $0x21d8] sm:$0xff]
  %v2308 = vld [vmem:[%s3 + $0x21e0] sm:$0xff]
  %v2309 = vld [vmem:[%s3 + $0x21e8] sm:$0xff]
  %v2310 = vld [vmem:[%s3 + $0x21f0] sm:$0xff]
  %v2311 = vld [vmem:[%s3 + $0x21f8] sm:$0xff]
  %v2312 = vld [vmem:[%s3 + $0x2200] sm:$0xff]
  %v2313 = vld [vmem:[%s3 + $0x2208] sm:$0xff]
  %v2314 = vld [vmem:[%s3 + $0x2210] sm:$0xff]
  %v2315 = vld [vmem:[%s3 + $0x2218] sm:$0xff]
  %v2316 = vld [vmem:[%s3 + $0x2220] sm:$0xff]
  %v2317 = vld [vmem:[%s3 + $0x2228] sm:$0xff]
  %v2318 = vld [vmem:[%s3 + $0x2230] sm:$0xff]
  %v2319 = vld [vmem:[%s3 + $0x2238] sm:$0xff]
  %v2320 = vld [vmem:[%s3 + $0x2240] sm:$0xff]
  %v2321 = vld [vmem:[%s3 + $0x2248] sm:$0xff]
  %v2322 = vld [vmem:[%s3 + $0x2250] sm:$0xff]
  %v2323 = vld [vmem:[%s3 + $0x2258] sm:$0xff]
  %v2324 = vld [vmem:[%s3 + $0x2260] sm:$0xff]
  %v2325 = vld [vmem:[%s3 + $0x2268] sm:$0xff]
  %v2326 = vld [vmem:[%s3 + $0x2270] sm:$0xff]
  %v2327 = vld [vmem:[%s3 + $0x2278] sm:$0xff]
  %v2328 = vld [vmem:[%s3 + $0x2280] sm:$0xff]
  %v2329 = vld [vmem:[%s3 + $0x2288] sm:$0xff]
  %v2330 = vld [vmem:[%s3 + $0x2290] sm:$0xff]
  %v2331 = vld [vmem:[%s3 + $0x2298] sm:$0xff]
  %v2332 = vld [vmem:[%s3 + $0x22a0] sm:$0xff]
  %v2333 = vld [vmem:[%s3 + $0x22a8] sm:$0xff]
  %v2334 = vld [vmem:[%s3 + $0x22b0] sm:$0xff]
  %v2335 = vld [vmem:[%s3 + $0x22b8] sm:$0xff]
  %v2336 = vld [vmem:[%s3 + $0x22c0] sm:$0xff]
  %v2337 = vld [vmem:[%s3 + $0x22c8] sm:$0xff]
  %v2338 = vld [vmem:[%s3 + $0x22d0] sm:$0xff]
  %v2339 = vld [vmem:[%s3 + $0x22d8] sm:$0xff]
  %v2340 = vld [vmem:[%s3 + $0x22e0] sm:$0xff]
  %v2341 = vld [vmem:[%s3 + $0x22e8] sm:$0xff]
  %v2342 = vld [vmem:[%s3 + $0x22f0] sm:$0xff]
  %v2343 = vld [vmem:[%s3 + $0x22f8] sm:$0xff]
  %v2344 = vld [vmem:[%s3 + $0x2300] sm:$0xff]
  %v2345 = vld [vmem:[%s3 + $0x2308] sm:$0xff]
  %v2346 = vld [vmem:[%s3 + $0x2310] sm:$0xff]
  %v2347 = vld [vmem:[%s3 + $0x2318] sm:$0xff]
  %v2348 = vld [vmem:[%s3 + $0x2320] sm:$0xff]
  %v2349 = vld [vmem:[%s3 + $0x2328] sm:$0xff]
  %v2350 = vld [vmem:[%s3 + $0x2330] sm:$0xff]
  %v2351 = vld [vmem:[%s3 + $0x2338] sm:$0xff]
  %v2352 = vld [vmem:[%s3 + $0x2340] sm:$0xff]
  %v2353 = vld [vmem:[%s3 + $0x2348] sm:$0xff]
  %v2354 = vld [vmem:[%s3 + $0x2350] sm:$0xff]
  %v2355 = vld [vmem:[%s3 + $0x2358] sm:$0xff]
  %v2356 = vld [vmem:[%s3 + $0x2360] sm:$0xff]
  %v2357 = vld [vmem:[%s3 + $0x2368] sm:$0xff]
  %v2358 = vld [vmem:[%s3 + $0x2370] sm:$0xff]
  %v2359 = vld [vmem:[%s3 + $0x2378] sm:$0xff]
  %v2360 = vld [vmem:[%s3 + $0x2380] sm:$0xff]
  %v2361 = vld [vmem:[%s3 + $0x2388] sm:$0xff]
  %v2362 = vld [vmem:[%s3 + $0x2390] sm:$0xff]
  %v2363 = vld [vmem:[%s3 + $0x2398] sm:$0xff]
  %v2364 = vld [vmem:[%s3 + $0x23a0] sm:$0xff]
  %v2365 = vld [vmem:[%s3 + $0x23a8] sm:$0xff]
  %v2366 = vld [vmem:[%s3 + $0x23b0] sm:$0xff]
  %v2367 = vld [vmem:[%s3 + $0x23b8] sm:$0xff]
  %v2368 = vld [vmem:[%s3 + $0x23c0] sm:$0xff]
  %v2369 = vld [vmem:[%s3 + $0x23c8] sm:$0xff]
  %v2370 = vld [vmem:[%s3 + $0x23d0] sm:$0xff]
  %v2371 = vld [vmem:[%s3 + $0x23d8] sm:$0xff]
  %v2372 = vld [vmem:[%s3 + $0x23e0] sm:$0xff]
  %v2373 = vld [vmem:[%s3 + $0x23e8] sm:$0xff]
  %v2374 = vld [vmem:[%s3 + $0x23f0] sm:$0xff]
  %v2375 = vld [vmem:[%s3 + $0x23f8] sm:$0xff]
  %v2376 = vld [vmem:[%s3 + $0x2400] sm:$0xff]
  %v2377 = vld [vmem:[%s3 + $0x2408] sm:$0xff]
  %v2378 = vld [vmem:[%s3 + $0x2410] sm:$0xff]
  %v2379 = vld [vmem:[%s3 + $0x2418] sm:$0xff]
  %v2380 = vld [vmem:[%s3 + $0x2420] sm:$0xff]
  %v2381 = vld [vmem:[%s3 + $0x2428] sm:$0xff]
  %v2382 = vld [vmem:[%s3 + $0x2430] sm:$0xff]
  %v2383 = vld [vmem:[%s3 + $0x2438] sm:$0xff]
  %v2384 = vld [vmem:[%s3 + $0x2440] sm:$0xff]
  %v2385 = vld [vmem:[%s3 + $0x2448] sm:$0xff]
  %v2386 = vld [vmem:[%s3 + $0x2450] sm:$0xff]
  %v2387 = vld [vmem:[%s3 + $0x2458] sm:$0xff]
  %v2388 = vld [vmem:[%s3 + $0x2460] sm:$0xff]
  %v2389 = vld [vmem:[%s3 + $0x2468] sm:$0xff]
  %v2390 = vld [vmem:[%s3 + $0x2470] sm:$0xff]
  %v2391 = vld [vmem:[%s3 + $0x2478] sm:$0xff]
  %v2392 = vld [vmem:[%s3 + $0x2480] sm:$0xff]
  %v2393 = vld [vmem:[%s3 + $0x2488] sm:$0xff]
  %v2394 = vld [vmem:[%s3 + $0x2490] sm:$0xff]
  %v2395 = vld [vmem:[%s3 + $0x2498] sm:$0xff]
  %v2396 = vld [vmem:[%s3 + $0x24a0] sm:$0xff]
  %v2397 = vld [vmem:[%s3 + $0x24a8] sm:$0xff]
  %v2398 = vld [vmem:[%s3 + $0x24b0] sm:$0xff]
  %v2399 = vld [vmem:[%s3 + $0x24b8] sm:$0xff]
  %v2400 = vld [vmem:[%s3 + $0x24c0] sm:$0xff]
  %v2401 = vld [vmem:[%s3 + $0x24c8] sm:$0xff]
  %v2402 = vld [vmem:[%s3 + $0x24d0] sm:$0xff]
  %v2403 = vld [vmem:[%s3 + $0x24d8] sm:$0xff]
  %v2404 = vld [vmem:[%s3 + $0x24e0] sm:$0xff]
  %v2405 = vld [vmem:[%s3 + $0x24e8] sm:$0xff]
  %v2406 = vld [vmem:[%s3 + $0x24f0] sm:$0xff]
  %v2407 = vld [vmem:[%s3 + $0x24f8] sm:$0xff]
  %v2408 = vld [vmem:[%s3 + $0x2500] sm:$0xff]
  %v2409 = vld [vmem:[%s3 + $0x2508] sm:$0xff]
  %v2410 = vld [vmem:[%s3 + $0x2510] sm:$0xff]
  %v2411 = vld [vmem:[%s3 + $0x2518] sm:$0xff]
  %v2412 = vld [vmem:[%s3 + $0x2520] sm:$0xff]
  %v2413 = vld [vmem:[%s3 + $0x2528] sm:$0xff]
  %v2414 = vld [vmem:[%s3 + $0x2530] sm:$0xff]
  %v2415 = vld [vmem:[%s3 + $0x2538] sm:$0xff]
  %v2416 = vld [vmem:[%s3 + $0x2540] sm:$0xff]
  %v2417 = vld [vmem:[%s3 + $0x2548] sm:$0xff]
  %v2418 = vld [vmem:[%s3 + $0x2550] sm:$0xff]
  %v2419 = vld [vmem:[%s3 + $0x2558] sm:$0xff]
  %v2420 = vld [vmem:[%s3 + $0x2560] sm:$0xff]
  %v2421 = vld [vmem:[%s3 + $0x2568] sm:$0xff]
  %v2422 = vld [vmem:[%s3 + $0x2570] sm:$0xff]
  %v2423 = vld [vmem:[%s3 + $0x2578] sm:$0xff]
  %v2424 = vld [vmem:[%s3 + $0x2580] sm:$0xff]
  %v2425 = vld [vmem:[%s3 + $0x2588] sm:$0xff]
  %v2426 = vld [vmem:[%s3 + $0x2590] sm:$0xff]
  %v2427 = vld [vmem:[%s3 + $0x2598] sm:$0xff]
  %v2428 = vld [vmem:[%s3 + $0x25a0] sm:$0xff]
  %v2429 = vld [vmem:[%s3 + $0x25a8] sm:$0xff]
  %v2430 = vld [vmem:[%s3 + $0x25b0] sm:$0xff]
  %v2431 = vld [vmem:[%s3 + $0x25b8] sm:$0xff]
  %v2432 = vld [vmem:[%s3 + $0x25c0] sm:$0xff]
  %v2433 = vld [vmem:[%s3 + $0x25c8] sm:$0xff]
  %v2434 = vld [vmem:[%s3 + $0x25d0] sm:$0xff]
  %v2435 = vld [vmem:[%s3 + $0x25d8] sm:$0xff]
  %v2436 = vld [vmem:[%s3 + $0x25e0] sm:$0xff]
  %v2437 = vld [vmem:[%s3 + $0x25e8] sm:$0xff]
  %v2438 = vld [vmem:[%s3 + $0x25f0] sm:$0xff]
  %v2439 = vld [vmem:[%s3 + $0x25f8] sm:$0xff]
  %v2440 = vld [vmem:[%s3 + $0x2600] sm:$0xff]
  %v2441 = vld [vmem:[%s3 + $0x2608] sm:$0xff]
  %v2442 = vld [vmem:[%s3 + $0x2610] sm:$0xff]
  %v2443 = vld [vmem:[%s3 + $0x2618] sm:$0xff]
  %v2444 = vld [vmem:[%s3 + $0x2620] sm:$0xff]
  %v2445 = vld [vmem:[%s3 + $0x2628] sm:$0xff]
  %v2446 = vld [vmem:[%s3 + $0x2630] sm:$0xff]
  %v2447 = vld [vmem:[%s3 + $0x2638] sm:$0xff]
  %v2448 = vld [vmem:[%s3 + $0x2640] sm:$0xff]
  %v2449 = vld [vmem:[%s3 + $0x2648] sm:$0xff]
  %v2450 = vld [vmem:[%s3 + $0x2650] sm:$0xff]
  %v2451 = vld [vmem:[%s3 + $0x2658] sm:$0xff]
  %v2452 = vld [vmem:[%s3 + $0x2660] sm:$0xff]
  %v2453 = vld [vmem:[%s3 + $0x2668] sm:$0xff]
  %v2454 = vld [vmem:[%s3 + $0x2670] sm:$0xff]
  %v2455 = vld [vmem:[%s3 + $0x2678] sm:$0xff]
  %v2456 = vld [vmem:[%s3 + $0x2680] sm:$0xff]
  %v2457 = vld [vmem:[%s3 + $0x2688] sm:$0xff]
  %v2458 = vld [vmem:[%s3 + $0x2690] sm:$0xff]
  %v2459 = vld [vmem:[%s3 + $0x2698] sm:$0xff]
  %v2460 = vld [vmem:[%s3 + $0x26a0] sm:$0xff]
  %v2461 = vld [vmem:[%s3 + $0x26a8] sm:$0xff]
  %v2462 = vld [vmem:[%s3 + $0x26b0] sm:$0xff]
  %v2463 = vld [vmem:[%s3 + $0x26b8] sm:$0xff]
  %v2464 = vld [vmem:[%s3 + $0x26c0] sm:$0xff]
  %v2465 = vld [vmem:[%s3 + $0x26c8] sm:$0xff]
  %v2466 = vld [vmem:[%s3 + $0x26d0] sm:$0xff]
  %v2467 = vld [vmem:[%s3 + $0x26d8] sm:$0xff]
  %v2468 = vld [vmem:[%s3 + $0x26e0] sm:$0xff]
  %v2469 = vld [vmem:[%s3 + $0x26e8] sm:$0xff]
  %v2470 = vld [vmem:[%s3 + $0x26f0] sm:$0xff]
  %v2471 = vld [vmem:[%s3 + $0x26f8] sm:$0xff]
  %v2472 = vld [vmem:[%s3 + $0x2700] sm:$0xff]
  %v2473 = vld [vmem:[%s3 + $0x2708] sm:$0xff]
  %v2474 = vld [vmem:[%s3 + $0x2710] sm:$0xff]
  %v2475 = vld [vmem:[%s3 + $0x2718] sm:$0xff]
  %v2476 = vld [vmem:[%s3 + $0x2720] sm:$0xff]
  %v2477 = vld [vmem:[%s3 + $0x2728] sm:$0xff]
  %v2478 = vld [vmem:[%s3 + $0x2730] sm:$0xff]
  %v2479 = vld [vmem:[%s3 + $0x2738] sm:$0xff]
  %v2480 = vld [vmem:[%s3 + $0x2740] sm:$0xff]
  %v2481 = vld [vmem:[%s3 + $0x2748] sm:$0xff]
  %v2482 = vld [vmem:[%s3 + $0x2750] sm:$0xff]
  %v2483 = vld [vmem:[%s3 + $0x2758] sm:$0xff]
  %v2484 = vld [vmem:[%s3 + $0x2760] sm:$0xff]
  %v2485 = vld [vmem:[%s3 + $0x2768] sm:$0xff]
  %v2486 = vld [vmem:[%s3 + $0x2770] sm:$0xff]
  %v2487 = vld [vmem:[%s3 + $0x2778] sm:$0xff]
  %v2488 = vld [vmem:[%s3 + $0x2780] sm:$0xff]
  %v2489 = vld [vmem:[%s3 + $0x2788] sm:$0xff]
  %v2490 = vld [vmem:[%s3 + $0x2790] sm:$0xff]
  %v2491 = vld [vmem:[%s3 + $0x2798] sm:$0xff]
  %v2492 = vld [vmem:[%s3 + $0x27a0] sm:$0xff]
  %v2493 = vld [vmem:[%s3 + $0x27a8] sm:$0xff]
  %v2494 = vld [vmem:[%s3 + $0x27b0] sm:$0xff]
  %v2495 = vld [vmem:[%s3 + $0x27b8] sm:$0xff]
  %v2496 = vld [vmem:[%s3 + $0x27c0] sm:$0xff]
  %v2497 = vld [vmem:[%s3 + $0x27c8] sm:$0xff]
  %v2498 = vld [vmem:[%s3 + $0x27d0] sm:$0xff]
  %v2499 = vld [vmem:[%s3 + $0x27d8] sm:$0xff]
  %v2500 = vld [vmem:[%s3 + $0x27e0] sm:$0xff]
  %v2501 = vld [vmem:[%s3 + $0x27e8] sm:$0xff]
  %v2502 = vld [vmem:[%s3 + $0x27f0] sm:$0xff]
  %v2503 = vld [vmem:[%s3 + $0x27f8] sm:$0xff]
  %v2504 = vld [vmem:[%s3 + $0x2800] sm:$0xff]
  %v2505 = vld [vmem:[%s3 + $0x2808] sm:$0xff]
  %v2506 = vld [vmem:[%s3 + $0x2810] sm:$0xff]
  %v2507 = vld [vmem:[%s3 + $0x2818] sm:$0xff]
  %v2508 = vld [vmem:[%s3 + $0x2820] sm:$0xff]
  %v2509 = vld [vmem:[%s3 + $0x2828] sm:$0xff]
  %v2510 = vld [vmem:[%s3 + $0x2830] sm:$0xff]
  %v2511 = vld [vmem:[%s3 + $0x2838] sm:$0xff]
  %v2512 = vld [vmem:[%s3 + $0x2840] sm:$0xff]
  %v2513 = vld [vmem:[%s3 + $0x2848] sm:$0xff]
  %v2514 = vld [vmem:[%s3 + $0x2850] sm:$0xff]
  %v2515 = vld [vmem:[%s3 + $0x2858] sm:$0xff]
  %v2516 = vld [vmem:[%s3 + $0x2860] sm:$0xff]
  %v2517 = vld [vmem:[%s3 + $0x2868] sm:$0xff]
  %v2518 = vld [vmem:[%s3 + $0x2870] sm:$0xff]
  %v2519 = vld [vmem:[%s3 + $0x2878] sm:$0xff]
  %v2520 = vld [vmem:[%s3 + $0x2880] sm:$0xff]
  %v2521 = vld [vmem:[%s3 + $0x2888] sm:$0xff]
  %v2522 = vld [vmem:[%s3 + $0x2890] sm:$0xff]
  %v2523 = vld [vmem:[%s3 + $0x2898] sm:$0xff]
  %v2524 = vld [vmem:[%s3 + $0x28a0] sm:$0xff]
  %v2525 = vld [vmem:[%s3 + $0x28a8] sm:$0xff]
  %v2526 = vld [vmem:[%s3 + $0x28b0] sm:$0xff]
  %v2527 = vld [vmem:[%s3 + $0x28b8] sm:$0xff]
  %v2528 = vld [vmem:[%s3 + $0x28c0] sm:$0xff]
  %v2529 = vld [vmem:[%s3 + $0x28c8] sm:$0xff]
  %v2530 = vld [vmem:[%s3 + $0x28d0] sm:$0xff]
  %v2531 = vld [vmem:[%s3 + $0x28d8] sm:$0xff]
  %v2532 = vld [vmem:[%s3 + $0x28e0] sm:$0xff]
  %v2533 = vld [vmem:[%s3 + $0x28e8] sm:$0xff]
  %v2534 = vld [vmem:[%s3 + $0x28f0] sm:$0xff]
  %v2535 = vld [vmem:[%s3 + $0x28f8] sm:$0xff]
  %v2536 = vld [vmem:[%s3 + $0x2900] sm:$0xff]
  %v2537 = vld [vmem:[%s3 + $0x2908] sm:$0xff]
  %v2538 = vld [vmem:[%s3 + $0x2910] sm:$0xff]
  %v2539 = vld [vmem:[%s3 + $0x2918] sm:$0xff]
  %v2540 = vld [vmem:[%s3 + $0x2920] sm:$0xff]
  %v2541 = vld [vmem:[%s3 + $0x2928] sm:$0xff]
  %v2542 = vld [vmem:[%s3 + $0x2930] sm:$0xff]
  %v2543 = vld [vmem:[%s3 + $0x2938] sm:$0xff]
  %v2544 = vld [vmem:[%s3 + $0x2940] sm:$0xff]
  %v2545 = vld [vmem:[%s3 + $0x2948] sm:$0xff]
  %v2546 = vld [vmem:[%s3 + $0x2950] sm:$0xff]
  %v2547 = vld [vmem:[%s3 + $0x2958] sm:$0xff]
  %v2548 = vld [vmem:[%s3 + $0x2960] sm:$0xff]
  %v2549 = vld [vmem:[%s3 + $0x2968] sm:$0xff]
  %v2550 = vld [vmem:[%s3 + $0x2970] sm:$0xff]
  %v2551 = vld [vmem:[%s3 + $0x2978] sm:$0xff]
  %v2552 = vld [vmem:[%s3 + $0x2980] sm:$0xff]
  %v2553 = vld [vmem:[%s3 + $0x2988] sm:$0xff]
  %v2554 = vld [vmem:[%s3 + $0x2990] sm:$0xff]
  %v2555 = vld [vmem:[%s3 + $0x2998] sm:$0xff]
  %v2556 = vld [vmem:[%s3 + $0x29a0] sm:$0xff]
  %v2557 = vld [vmem:[%s3 + $0x29a8] sm:$0xff]
  %v2558 = vld [vmem:[%s3 + $0x29b0] sm:$0xff]
  %v2559 = vld [vmem:[%s3 + $0x29b8] sm:$0xff]
  %v2560 = vld [vmem:[%s3 + $0x29c0] sm:$0xff]
  %v2561 = vld [vmem:[%s3 + $0x29c8] sm:$0xff]
  %v2562 = vld [vmem:[%s3 + $0x29d0] sm:$0xff]
  %v2563 = vld [vmem:[%s3 + $0x29d8] sm:$0xff]
  %v2564 = vld [vmem:[%s3 + $0x29e0] sm:$0xff]
  %v2565 = vld [vmem:[%s3 + $0x29e8] sm:$0xff]
  %v2566 = vld [vmem:[%s3 + $0x29f0] sm:$0xff]
  %v2567 = vld [vmem:[%s3 + $0x29f8] sm:$0xff]
  %v2568 = vld [vmem:[%s3 + $0x2a00] sm:$0xff]
  %v2569 = vld [vmem:[%s3 + $0x2a08] sm:$0xff]
  %v2570 = vld [vmem:[%s3 + $0x2a10] sm:$0xff]
  %v2571 = vld [vmem:[%s3 + $0x2a18] sm:$0xff]
  %v2572 = vld [vmem:[%s3 + $0x2a20] sm:$0xff]
  %v2573 = vld [vmem:[%s3 + $0x2a28] sm:$0xff]
  %v2574 = vld [vmem:[%s3 + $0x2a30] sm:$0xff]
  %v2575 = vld [vmem:[%s3 + $0x2a38] sm:$0xff]
  %v2576 = vld [vmem:[%s3 + $0x2a40] sm:$0xff]
  %v2577 = vld [vmem:[%s3 + $0x2a48] sm:$0xff]
  %v2578 = vld [vmem:[%s3 + $0x2a50] sm:$0xff]
  %v2579 = vld [vmem:[%s3 + $0x2a58] sm:$0xff]
  %v2580 = vld [vmem:[%s3 + $0x2a60] sm:$0xff]
  %v2581 = vld [vmem:[%s3 + $0x2a68] sm:$0xff]
  %v2582 = vld [vmem:[%s3 + $0x2a70] sm:$0xff]
  %v2583 = vld [vmem:[%s3 + $0x2a78] sm:$0xff]
  %v2584 = vld [vmem:[%s3 + $0x2a80] sm:$0xff]
  %v2585 = vld [vmem:[%s3 + $0x2a88] sm:$0xff]
  %v2586 = vld [vmem:[%s3 + $0x2a90] sm:$0xff]
  %v2587 = vld [vmem:[%s3 + $0x2a98] sm:$0xff]
  %v2588 = vld [vmem:[%s3 + $0x2aa0] sm:$0xff]
  %v2589 = vld [vmem:[%s3 + $0x2aa8] sm:$0xff]
  %v2590 = vld [vmem:[%s3 + $0x2ab0] sm:$0xff]
  %v2591 = vld [vmem:[%s3 + $0x2ab8] sm:$0xff]
  %v2592 = vld [vmem:[%s3 + $0x2ac0] sm:$0xff]
  %v2593 = vld [vmem:[%s3 + $0x2ac8] sm:$0xff]
  %v2594 = vld [vmem:[%s3 + $0x2ad0] sm:$0xff]
  %v2595 = vld [vmem:[%s3 + $0x2ad8] sm:$0xff]
  %v2596 = vld [vmem:[%s3 + $0x2ae0] sm:$0xff]
  %v2597 = vld [vmem:[%s3 + $0x2ae8] sm:$0xff]
  %v2598 = vld [vmem:[%s3 + $0x2af0] sm:$0xff]
  %v2599 = vld [vmem:[%s3 + $0x2af8] sm:$0xff]
  %v2600 = vld [vmem:[%s3 + $0x2b00] sm:$0xff]
  %v2601 = vld [vmem:[%s3 + $0x2b08] sm:$0xff]
  %v2602 = vld [vmem:[%s3 + $0x2b10] sm:$0xff]
  %v2603 = vld [vmem:[%s3 + $0x2b18] sm:$0xff]
  %v2604 = vld [vmem:[%s3 + $0x2b20] sm:$0xff]
  %v2605 = vld [vmem:[%s3 + $0x2b28] sm:$0xff]
  %v2606 = vld [vmem:[%s3 + $0x2b30] sm:$0xff]
  %v2607 = vld [vmem:[%s3 + $0x2b38] sm:$0xff]
  %v2608 = vld [vmem:[%s3 + $0x2b40] sm:$0xff]
  %v2609 = vld [vmem:[%s3 + $0x2b48] sm:$0xff]
  %v2610 = vld [vmem:[%s3 + $0x2b50] sm:$0xff]
  %v2611 = vld [vmem:[%s3 + $0x2b58] sm:$0xff]
  %v2612 = vld [vmem:[%s3 + $0x2b60] sm:$0xff]
  %v2613 = vld [vmem:[%s3 + $0x2b68] sm:$0xff]
  %v2614 = vld [vmem:[%s3 + $0x2b70] sm:$0xff]
  %v2615 = vld [vmem:[%s3 + $0x2b78] sm:$0xff]
  %v2616 = vld [vmem:[%s3 + $0x2b80] sm:$0xff]
  %v2617 = vld [vmem:[%s3 + $0x2b88] sm:$0xff]
  %v2618 = vld [vmem:[%s3 + $0x2b90] sm:$0xff]
  %v2619 = vld [vmem:[%s3 + $0x2b98] sm:$0xff]
  %v2620 = vld [vmem:[%s3 + $0x2ba0] sm:$0xff]
  %v2621 = vld [vmem:[%s3 + $0x2ba8] sm:$0xff]
  %v2622 = vld [vmem:[%s3 + $0x2bb0] sm:$0xff]
  %v2623 = vld [vmem:[%s3 + $0x2bb8] sm:$0xff]
  %v2624 = vld [vmem:[%s3 + $0x2bc0] sm:$0xff]
  %v2625 = vld [vmem:[%s3 + $0x2bc8] sm:$0xff]
  %v2626 = vld [vmem:[%s3 + $0x2bd0] sm:$0xff]
  %v2627 = vld [vmem:[%s3 + $0x2bd8] sm:$0xff]
  %v2628 = vld [vmem:[%s3 + $0x2be0] sm:$0xff]
  %v2629 = vld [vmem:[%s3 + $0x2be8] sm:$0xff]
  %v2630 = vld [vmem:[%s3 + $0x2bf0] sm:$0xff]
  %v2631 = vld [vmem:[%s3 + $0x2bf8] sm:$0xff]
  %v2632 = vld [vmem:[%s3 + $0x2c00] sm:$0xff]
  %v2633 = vld [vmem:[%s3 + $0x2c08] sm:$0xff]
  %v2634 = vld [vmem:[%s3 + $0x2c10] sm:$0xff]
  %v2635 = vld [vmem:[%s3 + $0x2c18] sm:$0xff]
  %v2636 = vld [vmem:[%s3 + $0x2c20] sm:$0xff]
  %v2637 = vld [vmem:[%s3 + $0x2c28] sm:$0xff]
  %v2638 = vld [vmem:[%s3 + $0x2c30] sm:$0xff]
  %v2639 = vld [vmem:[%s3 + $0x2c38] sm:$0xff]
  %v2640 = vld [vmem:[%s3 + $0x2c40] sm:$0xff]
  %v2641 = vld [vmem:[%s3 + $0x2c48] sm:$0xff]
  %v2642 = vld [vmem:[%s3 + $0x2c50] sm:$0xff]
  %v2643 = vld [vmem:[%s3 + $0x2c58] sm:$0xff]
  %v2644 = vld [vmem:[%s3 + $0x2c60] sm:$0xff]
  %v2645 = vld [vmem:[%s3 + $0x2c68] sm:$0xff]
  %v2646 = vld [vmem:[%s3 + $0x2c70] sm:$0xff]
  %v2647 = vld [vmem:[%s3 + $0x2c78] sm:$0xff]
  %v2648 = vld [vmem:[%s3 + $0x2c80] sm:$0xff]
  %v2649 = vld [vmem:[%s3 + $0x2c88] sm:$0xff]
  %v2650 = vld [vmem:[%s3 + $0x2c90] sm:$0xff]
  %v2651 = vld [vmem:[%s3 + $0x2c98] sm:$0xff]
  %v2652 = vld [vmem:[%s3 + $0x2ca0] sm:$0xff]
  %v2653 = vld [vmem:[%s3 + $0x2ca8] sm:$0xff]
  %v2654 = vld [vmem:[%s3 + $0x2cb0] sm:$0xff]
  %v2655 = vld [vmem:[%s3 + $0x2cb8] sm:$0xff]
  %v2656 = vld [vmem:[%s3 + $0x2cc0] sm:$0xff]
  %v2657 = vld [vmem:[%s3 + $0x2cc8] sm:$0xff]
  %v2658 = vld [vmem:[%s3 + $0x2cd0] sm:$0xff]
  %v2659 = vld [vmem:[%s3 + $0x2cd8] sm:$0xff]
  %v2660 = vld [vmem:[%s3 + $0x2ce0] sm:$0xff]
  %v2661 = vld [vmem:[%s3 + $0x2ce8] sm:$0xff]
  %v2662 = vld [vmem:[%s3 + $0x2cf0] sm:$0xff]
  %v2663 = vld [vmem:[%s3 + $0x2cf8] sm:$0xff]
  %v2664 = vld [vmem:[%s3 + $0x2d00] sm:$0xff]
  %v2665 = vld [vmem:[%s3 + $0x2d08] sm:$0xff]
  %v2666 = vld [vmem:[%s3 + $0x2d10] sm:$0xff]
  %v2667 = vld [vmem:[%s3 + $0x2d18] sm:$0xff]
  %v2668 = vld [vmem:[%s3 + $0x2d20] sm:$0xff]
  %v2669 = vld [vmem:[%s3 + $0x2d28] sm:$0xff]
  %v2670 = vld [vmem:[%s3 + $0x2d30] sm:$0xff]
  %v2671 = vld [vmem:[%s3 + $0x2d38] sm:$0xff]
  %v2672 = vld [vmem:[%s3 + $0x2d40] sm:$0xff]
  %v2673 = vld [vmem:[%s3 + $0x2d48] sm:$0xff]
  %v2674 = vld [vmem:[%s3 + $0x2d50] sm:$0xff]
  %v2675 = vld [vmem:[%s3 + $0x2d58] sm:$0xff]
  %v2676 = vld [vmem:[%s3 + $0x2d60] sm:$0xff]
  %v2677 = vld [vmem:[%s3 + $0x2d68] sm:$0xff]
  %v2678 = vld [vmem:[%s3 + $0x2d70] sm:$0xff]
  %v2679 = vld [vmem:[%s3 + $0x2d78] sm:$0xff]
  %v2680 = vld [vmem:[%s3 + $0x2d80] sm:$0xff]
  %v2681 = vld [vmem:[%s3 + $0x2d88] sm:$0xff]
  %v2682 = vld [vmem:[%s3 + $0x2d90] sm:$0xff]
  %v2683 = vld [vmem:[%s3 + $0x2d98] sm:$0xff]
  %v2684 = vld [vmem:[%s3 + $0x2da0] sm:$0xff]
  %v2685 = vld [vmem:[%s3 + $0x2da8] sm:$0xff]
  %v2686 = vld [vmem:[%s3 + $0x2db0] sm:$0xff]
  %v2687 = vld [vmem:[%s3 + $0x2db8] sm:$0xff]
  %v2688 = vld [vmem:[%s3 + $0x2dc0] sm:$0xff]
  %v2689 = vld [vmem:[%s3 + $0x2dc8] sm:$0xff]
  %v2690 = vld [vmem:[%s3 + $0x2dd0] sm:$0xff]
  %v2691 = vld [vmem:[%s3 + $0x2dd8] sm:$0xff]
  %v2692 = vld [vmem:[%s3 + $0x2de0] sm:$0xff]
  %v2693 = vld [vmem:[%s3 + $0x2de8] sm:$0xff]
  %v2694 = vld [vmem:[%s4] sm:$0x3f]
  %v2696 = vlaneseq
  %v2697 = vshrl.u32 %v2696, 7
  %v2698 = vsub.s32 0, %v2697
  %v2699 = vrot.slane %v2694, %v2698
  %v2700 = vlaneseq
  %v2701 = vshrl.u32 %v2700, 7
  %v2702 = vsub.s32 1, %v2701
  %v2703 = vrot.slane %v2694, %v2702
  %v2704 = vlaneseq
  %v2705 = vshrl.u32 %v2704, 7
  %v2706 = vsub.s32 2, %v2705
  %v2707 = vrot.slane %v2694, %v2706
  %v2708 = vlaneseq
  %v2709 = vshrl.u32 %v2708, 7
  %v2710 = vsub.s32 3, %v2709
  %v2711 = vrot.slane %v2694, %v2710
  %v2712 = vlaneseq
  %v2713 = vshrl.u32 %v2712, 7
  %v2714 = vsub.s32 4, %v2713
  %v2715 = vrot.slane %v2694, %v2714
  %v2716 = vlaneseq
  %v2717 = vshrl.u32 %v2716, 7
  %v2718 = vsub.s32 5, %v2717
  %v2719 = vrot.slane %v2694, %v2718
  %vm2726 = vcmask 326656
  %v2728 = vsel %vm2726, %v1223, 0
  %2730 = vmatprep.subr.mxu0 %v1225
  %2731 = vmatpush1.msra.mxu0 %v1224
  %2732 = vmatprep.subr.mxu0 %v1231
  %2733 = vmatpush1.msra.mxu0 %v1230
  %2734 = vmatprep.subr.mxu0 %v1237
  %2735 = vmatpush1.msra.mxu0 %v1236
  %2736 = vmatprep.subr.mxu0 %v1243
  %2737 = vmatpush1.msra.mxu0 %v1242
  %2738 = vmatprep.subr.mxu0 %v1249
  %2739 = vmatpush1.msra.mxu0 %v1248
  %2740 = vmatprep.subr.mxu0 %v1255
  %2741 = vmatpush1.msra.mxu0 %v1254
  %2742 = vmatprep.subr.mxu0 %v1261
  %2743 = vmatpush1.msra.mxu0 %v1260
  %2744 = vmatprep.subr.mxu0 %v1267
  %2745 = vmatpush1.msra.mxu0 %v1266
  %2746 = vmatprep.subr.mxu0 %v1273
  %2747 = vmatpush1.msra.mxu0 %v1272
  %2748 = vmatprep.subr.mxu0 %v1279
  %2749 = vmatpush1.msra.mxu0 %v1278
  %2750 = vmatprep.subr.mxu0 %v1285
  %2751 = vmatpush1.msra.mxu0 %v1284
  %2752 = vmatprep.subr.mxu0 %v1291
  %2753 = vmatpush1.msra.mxu0 %v1290
  %2754 = vmatprep.subr.mxu0 %v1297
  %2755 = vmatpush1.msra.mxu0 %v1296
  %2756 = vmatprep.subr.mxu0 %v1303
  %2757 = vmatpush1.msra.mxu0 %v1302
  %2758 = vmatprep.subr.mxu0 %v1309
  %2759 = vmatpush1.msra.mxu0 %v1308
  %2760 = vmatprep.subr.mxu0 %v1315
  %2761 = vmatpush1.msra.mxu0 %v1314
  %2762 = vmatprep.subr.mxu0 %v1321
  %2763 = vmatpush1.msra.mxu0 %v1320
  %2764 = vmatprep.subr.mxu0 %v1327
  %2765 = vmatpush1.msra.mxu0 %v1326
  %2766 = vmatprep.subr.mxu0 %v1333
  %2767 = vmatpush1.msra.mxu0 %v1332
  %2768 = vmatprep.subr.mxu0 %v1339
  %2769 = vmatpush1.msra.mxu0 %v1338
  %2770 = vmatprep.subr.mxu0 %v1345
  %2771 = vmatpush1.msra.mxu0 %v1344
  %2772 = vmatprep.subr.mxu0 %v1351
  %2773 = vmatpush1.msra.mxu0 %v1350
  %2774 = vmatprep.subr.mxu0 %v1357
  %2775 = vmatpush1.msra.mxu0 %v1356
  %2776 = vmatprep.subr.mxu0 %v1363
  %2777 = vmatpush1.msra.mxu0 %v1362
  %2778 = vmatprep.subr.mxu0 %v1369
  %2779 = vmatpush1.msra.mxu0 %v1368
  %2780 = vmatprep.subr.mxu0 %v1375
  %2781 = vmatpush1.msra.mxu0 %v1374
  %2782 = vmatprep.subr.mxu0 %v1381
  %2783 = vmatpush1.msra.mxu0 %v1380
  %2784 = vmatprep.subr.mxu0 %v1387
  %2785 = vmatpush1.msra.mxu0 %v1386
  %2786 = vmatprep.subr.mxu0 %v1393
  %2787 = vmatpush1.msra.mxu0 %v1392
  %2788 = vmatprep.subr.mxu0 %v1399
  %2789 = vmatpush1.msra.mxu0 %v1398
  %2790 = vmatprep.subr.mxu0 %v1405
  %2791 = vmatpush1.msra.mxu0 %v1404
  %2792 = vmatprep.subr.mxu0 %v1411
  %2793 = vmatpush1.msra.mxu0 %v1410
  %2794 = vmatprep.mubr.f32.mxu0 %v1209
  %2795 = vmatmul.mubr.f32.gmra.mrb[0].mxu0 %v1208
  %v2796 = vpop.f32.mrb[0].mxu0
  %v2797 = vadd.f32 %v2699, %v2796
  %v2798 = vpop.f32.mrb[0].mxu0
  %v2799 = vadd.f32 %v2703, %v2798
  %2800 = vdwg.mxu0
  %2801 = vmatprep.subr.mxu0 %v1417
  %2802 = vmatpush1.msra.mxu0 %v1416
  %2803 = vmatprep.subr.mxu0 %v1423
  %2804 = vmatpush1.msra.mxu0 %v1422
  %2805 = vmatprep.subr.mxu0 %v1429
  %2806 = vmatpush1.msra.mxu0 %v1428
  %2807 = vmatprep.subr.mxu0 %v1435
  %2808 = vmatpush1.msra.mxu0 %v1434
  %2809 = vmatprep.subr.mxu0 %v1441
  %2810 = vmatpush1.msra.mxu0 %v1440
  %2811 = vmatprep.subr.mxu0 %v1447
  %2812 = vmatpush1.msra.mxu0 %v1446
  %2813 = vmatprep.subr.mxu0 %v1453
  %2814 = vmatpush1.msra.mxu0 %v1452
  %2815 = vmatprep.subr.mxu0 %v1459
  %2816 = vmatpush1.msra.mxu0 %v1458
  %2817 = vmatprep.subr.mxu0 %v1465
  %2818 = vmatpush1.msra.mxu0 %v1464
  %2819 = vmatprep.subr.mxu0 %v1471
  %2820 = vmatpush1.msra.mxu0 %v1470
  %2821 = vmatprep.subr.mxu0 %v1477
  %2822 = vmatpush1.msra.mxu0 %v1476
  %2823 = vmatprep.subr.mxu0 %v1483
  %2824 = vmatpush1.msra.mxu0 %v1482
  %2825 = vmatprep.subr.mxu0 %v1489
  %2826 = vmatpush1.msra.mxu0 %v1488
  %2827 = vmatprep.subr.mxu0 %v1495
  %2828 = vmatpush1.msra.mxu0 %v1494
  %2829 = vmatprep.subr.mxu0 %v1501
  %2830 = vmatpush1.msra.mxu0 %v1500
  %2831 = vmatprep.subr.mxu0 %v1507
  %2832 = vmatpush1.msra.mxu0 %v1506
  %2833 = vmatprep.subr.mxu0 %v1513
  %2834 = vmatpush1.msra.mxu0 %v1512
  %2835 = vmatprep.subr.mxu0 %v1519
  %2836 = vmatpush1.msra.mxu0 %v1518
  %2837 = vmatprep.subr.mxu0 %v1525
  %2838 = vmatpush1.msra.mxu0 %v1524
  %2839 = vmatprep.subr.mxu0 %v1531
  %2840 = vmatpush1.msra.mxu0 %v1530
  %2841 = vmatprep.subr.mxu0 %v1537
  %2842 = vmatpush1.msra.mxu0 %v1536
  %2843 = vmatprep.subr.mxu0 %v1543
  %2844 = vmatpush1.msra.mxu0 %v1542
  %2845 = vmatprep.subr.mxu0 %v1549
  %2846 = vmatpush1.msra.mxu0 %v1548
  %2847 = vmatprep.subr.mxu0 %v1555
  %2848 = vmatpush1.msra.mxu0 %v1554
  %2849 = vmatprep.subr.mxu0 %v1561
  %2850 = vmatpush1.msra.mxu0 %v1560
  %2851 = vmatprep.subr.mxu0 %v1567
  %2852 = vmatpush1.msra.mxu0 %v1566
  %2853 = vmatprep.subr.mxu0 %v1573
  %2854 = vmatpush1.msra.mxu0 %v1572
  %2855 = vmatprep.subr.mxu0 %v1579
  %2856 = vmatpush1.msra.mxu0 %v1578
  %2857 = vmatprep.subr.mxu0 %v1585
  %2858 = vmatpush1.msra.mxu0 %v1584
  %2859 = vmatprep.subr.mxu0 %v1591
  %2860 = vmatpush1.msra.mxu0 %v1590
  %2861 = vmatprep.subr.mxu0 %v1597
  %2862 = vmatpush1.msra.mxu0 %v1596
  %2863 = vmatprep.subr.mxu0 %v1603
  %2864 = vmatpush1.msra.mxu0 %v1602
  %2865 = vmatprep.mubr.f32.mxu0 %v1211
  %2866 = vmatmul.mubr.f32.gmra.mrb[0].mxu0 %v1210
  %v2867 = vpop.f32.mrb[0].mxu0
  %v2868 = vadd.f32 %v2797, %v2867
  %v2869 = vpop.f32.mrb[0].mxu0
  %v2870 = vadd.f32 %v2799, %v2869
  %2871 = vdwg.mxu0
  %2872 = vmatprep.subr.mxu0 %v1609
  %2873 = vmatpush1.msra.mxu0 %v1608
  %2874 = vmatprep.subr.mxu0 %v1615
  %2875 = vmatpush1.msra.mxu0 %v1614
  %2876 = vmatprep.subr.mxu0 %v1621
  %2877 = vmatpush1.msra.mxu0 %v1620
  %2878 = vmatprep.subr.mxu0 %v1627
  %2879 = vmatpush1.msra.mxu0 %v1626
  %2880 = vmatprep.subr.mxu0 %v1633
  %2881 = vmatpush1.msra.mxu0 %v1632
  %2882 = vmatprep.subr.mxu0 %v1639
  %2883 = vmatpush1.msra.mxu0 %v1638
  %2884 = vmatprep.subr.mxu0 %v1645
  %2885 = vmatpush1.msra.mxu0 %v1644
  %2886 = vmatprep.subr.mxu0 %v1651
  %2887 = vmatpush1.msra.mxu0 %v1650
  %2888 = vmatprep.subr.mxu0 %v1657
  %2889 = vmatpush1.msra.mxu0 %v1656
  %2890 = vmatprep.subr.mxu0 %v1663
  %2891 = vmatpush1.msra.mxu0 %v1662
  %2892 = vmatprep.subr.mxu0 %v1669
  %2893 = vmatpush1.msra.mxu0 %v1668
  %2894 = vmatprep.subr.mxu0 %v1675
  %2895 = vmatpush1.msra.mxu0 %v1674
  %2896 = vmatprep.subr.mxu0 %v1681
  %2897 = vmatpush1.msra.mxu0 %v1680
  %2898 = vmatprep.subr.mxu0 %v1687
  %2899 = vmatpush1.msra.mxu0 %v1686
  %2900 = vmatprep.subr.mxu0 %v1693
  %2901 = vmatpush1.msra.mxu0 %v1692
  %2902 = vmatprep.subr.mxu0 %v1699
  %2903 = vmatpush1.msra.mxu0 %v1698
  %2904 = vmatprep.subr.mxu0 %v1705
  %2905 = vmatpush1.msra.mxu0 %v1704
  %2906 = vmatprep.subr.mxu0 %v1711
  %2907 = vmatpush1.msra.mxu0 %v1710
  %2908 = vmatprep.subr.mxu0 %v1717
  %2909 = vmatpush1.msra.mxu0 %v1716
  %2910 = vmatprep.subr.mxu0 %v1723
  %2911 = vmatpush1.msra.mxu0 %v1722
  %2912 = vmatprep.subr.mxu0 %v1729
  %2913 = vmatpush1.msra.mxu0 %v1728
  %2914 = vmatprep.subr.mxu0 %v1735
  %2915 = vmatpush1.msra.mxu0 %v1734
  %2916 = vmatprep.subr.mxu0 %v1741
  %2917 = vmatpush1.msra.mxu0 %v1740
  %2918 = vmatprep.subr.mxu0 %v1747
  %2919 = vmatpush1.msra.mxu0 %v1746
  %2920 = vmatprep.subr.mxu0 %v1753
  %2921 = vmatpush1.msra.mxu0 %v1752
  %2922 = vmatprep.subr.mxu0 %v1759
  %2923 = vmatpush1.msra.mxu0 %v1758
  %2924 = vmatprep.subr.mxu0 %v1765
  %2925 = vmatpush1.msra.mxu0 %v1764
  %2926 = vmatprep.subr.mxu0 %v1771
  %2927 = vmatpush1.msra.mxu0 %v1770
  %2928 = vmatprep.subr.mxu0 %v1777
  %2929 = vmatpush1.msra.mxu0 %v1776
  %2930 = vmatprep.subr.mxu0 %v1783
  %2931 = vmatpush1.msra.mxu0 %v1782
  %2932 = vmatprep.subr.mxu0 %v1789
  %2933 = vmatpush1.msra.mxu0 %v1788
  %2934 = vmatprep.subr.mxu0 %v1795
  %2935 = vmatpush1.msra.mxu0 %v1794
  %2936 = vmatprep.mubr.f32.mxu0 %v1213
  %2937 = vmatmul.mubr.f32.gmra.mrb[0].mxu0 %v1212
  %v2938 = vpop.f32.mrb[0].mxu0
  %v2939 = vadd.f32 %v2868, %v2938
  %v2940 = vpop.f32.mrb[0].mxu0
  %v2941 = vadd.f32 %v2870, %v2940
  %2942 = vdwg.mxu0
  %2943 = vmatprep.subr.mxu0 %v1801
  %2944 = vmatpush1.msra.mxu0 %v1800
  %2945 = vmatprep.subr.mxu0 %v1807
  %2946 = vmatpush1.msra.mxu0 %v1806
  %2947 = vmatprep.subr.mxu0 %v1813
  %2948 = vmatpush1.msra.mxu0 %v1812
  %2949 = vmatprep.subr.mxu0 %v1819
  %2950 = vmatpush1.msra.mxu0 %v1818
  %2951 = vmatprep.subr.mxu0 %v1825
  %2952 = vmatpush1.msra.mxu0 %v1824
  %2953 = vmatprep.subr.mxu0 %v1831
  %2954 = vmatpush1.msra.mxu0 %v1830
  %2955 = vmatprep.subr.mxu0 %v1837
  %2956 = vmatpush1.msra.mxu0 %v1836
  %2957 = vmatprep.subr.mxu0 %v1843
  %2958 = vmatpush1.msra.mxu0 %v1842
  %2959 = vmatprep.subr.mxu0 %v1849
  %2960 = vmatpush1.msra.mxu0 %v1848
  %2961 = vmatprep.subr.mxu0 %v1855
  %2962 = vmatpush1.msra.mxu0 %v1854
  %2963 = vmatprep.subr.mxu0 %v1861
  %2964 = vmatpush1.msra.mxu0 %v1860
  %2965 = vmatprep.subr.mxu0 %v1867
  %2966 = vmatpush1.msra.mxu0 %v1866
  %2967 = vmatprep.subr.mxu0 %v1873
  %2968 = vmatpush1.msra.mxu0 %v1872
  %2969 = vmatprep.subr.mxu0 %v1879
  %2970 = vmatpush1.msra.mxu0 %v1878
  %2971 = vmatprep.subr.mxu0 %v1885
  %2972 = vmatpush1.msra.mxu0 %v1884
  %2973 = vmatprep.subr.mxu0 %v1891
  %2974 = vmatpush1.msra.mxu0 %v1890
  %2975 = vmatprep.subr.mxu0 %v1897
  %2976 = vmatpush1.msra.mxu0 %v1896
  %2977 = vmatprep.subr.mxu0 %v1903
  %2978 = vmatpush1.msra.mxu0 %v1902
  %2979 = vmatprep.subr.mxu0 %v1909
  %2980 = vmatpush1.msra.mxu0 %v1908
  %2981 = vmatprep.subr.mxu0 %v1915
  %2982 = vmatpush1.msra.mxu0 %v1914
  %2983 = vmatprep.subr.mxu0 %v1921
  %2984 = vmatpush1.msra.mxu0 %v1920
  %2985 = vmatprep.subr.mxu0 %v1927
  %2986 = vmatpush1.msra.mxu0 %v1926
  %2987 = vmatprep.subr.mxu0 %v1933
  %2988 = vmatpush1.msra.mxu0 %v1932
  %2989 = vmatprep.subr.mxu0 %v1939
  %2990 = vmatpush1.msra.mxu0 %v1938
  %2991 = vmatprep.subr.mxu0 %v1945
  %2992 = vmatpush1.msra.mxu0 %v1944
  %2993 = vmatprep.subr.mxu0 %v1951
  %2994 = vmatpush1.msra.mxu0 %v1950
  %2995 = vmatprep.subr.mxu0 %v1957
  %2996 = vmatpush1.msra.mxu0 %v1956
  %2997 = vmatprep.subr.mxu0 %v1963
  %2998 = vmatpush1.msra.mxu0 %v1962
  %2999 = vmatprep.subr.mxu0 %v1969
  %3000 = vmatpush1.msra.mxu0 %v1968
  %3001 = vmatprep.subr.mxu0 %v1975
  %3002 = vmatpush1.msra.mxu0 %v1974
  %3003 = vmatprep.subr.mxu0 %v1981
  %3004 = vmatpush1.msra.mxu0 %v1980
  %3005 = vmatprep.subr.mxu0 %v1987
  %3006 = vmatpush1.msra.mxu0 %v1986
  %3007 = vmatprep.mubr.f32.mxu0 %v1215
  %3008 = vmatmul.mubr.f32.gmra.mrb[0].mxu0 %v1214
  %v3009 = vpop.f32.mrb[0].mxu0
  %v3010 = vadd.f32 %v2939, %v3009
  %v3011 = vpop.f32.mrb[0].mxu0
  %v3012 = vadd.f32 %v2941, %v3011
  %3013 = vdwg.mxu0
  %3014 = vmatprep.subr.mxu0 %v1993
  %3015 = vmatpush1.msra.mxu0 %v1992
  %3016 = vmatprep.subr.mxu0 %v1999
  %3017 = vmatpush1.msra.mxu0 %v1998
  %3018 = vmatprep.subr.mxu0 %v2005
  %3019 = vmatpush1.msra.mxu0 %v2004
  %3020 = vmatprep.subr.mxu0 %v2011
  %3021 = vmatpush1.msra.mxu0 %v2010
  %3022 = vmatprep.subr.mxu0 %v2017
  %3023 = vmatpush1.msra.mxu0 %v2016
  %3024 = vmatprep.subr.mxu0 %v2023
  %3025 = vmatpush1.msra.mxu0 %v2022
  %3026 = vmatprep.subr.mxu0 %v2029
  %3027 = vmatpush1.msra.mxu0 %v2028
  %3028 = vmatprep.subr.mxu0 %v2035
  %3029 = vmatpush1.msra.mxu0 %v2034
  %3030 = vmatprep.subr.mxu0 %v2041
  %3031 = vmatpush1.msra.mxu0 %v2040
  %3032 = vmatprep.subr.mxu0 %v2047
  %3033 = vmatpush1.msra.mxu0 %v2046
  %3034 = vmatprep.subr.mxu0 %v2053
  %3035 = vmatpush1.msra.mxu0 %v2052
  %3036 = vmatprep.subr.mxu0 %v2059
  %3037 = vmatpush1.msra.mxu0 %v2058
  %3038 = vmatprep.subr.mxu0 %v2065
  %3039 = vmatpush1.msra.mxu0 %v2064
  %3040 = vmatprep.subr.mxu0 %v2071
  %3041 = vmatpush1.msra.mxu0 %v2070
  %3042 = vmatprep.subr.mxu0 %v2077
  %3043 = vmatpush1.msra.mxu0 %v2076
  %3044 = vmatprep.subr.mxu0 %v2083
  %3045 = vmatpush1.msra.mxu0 %v2082
  %3046 = vmatprep.subr.mxu0 %v2089
  %3047 = vmatpush1.msra.mxu0 %v2088
  %3048 = vmatprep.subr.mxu0 %v2095
  %3049 = vmatpush1.msra.mxu0 %v2094
  %3050 = vmatprep.subr.mxu0 %v2101
  %3051 = vmatpush1.msra.mxu0 %v2100
  %3052 = vmatprep.subr.mxu0 %v2107
  %3053 = vmatpush1.msra.mxu0 %v2106
  %3054 = vmatprep.subr.mxu0 %v2113
  %3055 = vmatpush1.msra.mxu0 %v2112
  %3056 = vmatprep.subr.mxu0 %v2119
  %3057 = vmatpush1.msra.mxu0 %v2118
  %3058 = vmatprep.subr.mxu0 %v2125
  %3059 = vmatpush1.msra.mxu0 %v2124
  %3060 = vmatprep.subr.mxu0 %v2131
  %3061 = vmatpush1.msra.mxu0 %v2130
  %3062 = vmatprep.subr.mxu0 %v2137
  %3063 = vmatpush1.msra.mxu0 %v2136
  %3064 = vmatprep.subr.mxu0 %v2143
  %3065 = vmatpush1.msra.mxu0 %v2142
  %3066 = vmatprep.subr.mxu0 %v2149
  %3067 = vmatpush1.msra.mxu0 %v2148
  %3068 = vmatprep.subr.mxu0 %v2155
  %3069 = vmatpush1.msra.mxu0 %v2154
  %3070 = vmatprep.subr.mxu0 %v2161
  %3071 = vmatpush1.msra.mxu0 %v2160
  %3072 = vmatprep.subr.mxu0 %v2167
  %3073 = vmatpush1.msra.mxu0 %v2166
  %3074 = vmatprep.subr.mxu0 %v2173
  %3075 = vmatpush1.msra.mxu0 %v2172
  %3076 = vmatprep.subr.mxu0 %v2179
  %3077 = vmatpush1.msra.mxu0 %v2178
  %3078 = vmatprep.mubr.f32.mxu0 %v1217
  %3079 = vmatmul.mubr.f32.gmra.mrb[0].mxu0 %v1216
  %v3080 = vpop.f32.mrb[0].mxu0
  %v3081 = vadd.f32 %v3010, %v3080
  %v3082 = vpop.f32.mrb[0].mxu0
  %v3083 = vadd.f32 %v3012, %v3082
  %3084 = vdwg.mxu0
  %3085 = vmatprep.subr.mxu0 %v2185
  %3086 = vmatpush1.msra.mxu0 %v2184
  %3087 = vmatprep.subr.mxu0 %v2191
  %3088 = vmatpush1.msra.mxu0 %v2190
  %3089 = vmatprep.subr.mxu0 %v2197
  %3090 = vmatpush1.msra.mxu0 %v2196
  %3091 = vmatprep.subr.mxu0 %v2203
  %3092 = vmatpush1.msra.mxu0 %v2202
  %3093 = vmatprep.subr.mxu0 %v2209
  %3094 = vmatpush1.msra.mxu0 %v2208
  %3095 = vmatprep.subr.mxu0 %v2215
  %3096 = vmatpush1.msra.mxu0 %v2214
  %3097 = vmatprep.subr.mxu0 %v2221
  %3098 = vmatpush1.msra.mxu0 %v2220
  %3099 = vmatprep.subr.mxu0 %v2227
  %3100 = vmatpush1.msra.mxu0 %v2226
  %3101 = vmatprep.subr.mxu0 %v2233
  %3102 = vmatpush1.msra.mxu0 %v2232
  %3103 = vmatprep.subr.mxu0 %v2239
  %3104 = vmatpush1.msra.mxu0 %v2238
  %3105 = vmatprep.subr.mxu0 %v2245
  %3106 = vmatpush1.msra.mxu0 %v2244
  %3107 = vmatprep.subr.mxu0 %v2251
  %3108 = vmatpush1.msra.mxu0 %v2250
  %3109 = vmatprep.subr.mxu0 %v2257
  %3110 = vmatpush1.msra.mxu0 %v2256
  %3111 = vmatprep.subr.mxu0 %v2263
  %3112 = vmatpush1.msra.mxu0 %v2262
  %3113 = vmatprep.subr.mxu0 %v2269
  %3114 = vmatpush1.msra.mxu0 %v2268
  %3115 = vmatprep.subr.mxu0 %v2275
  %3116 = vmatpush1.msra.mxu0 %v2274
  %3117 = vmatprep.subr.mxu0 %v2281
  %3118 = vmatpush1.msra.mxu0 %v2280
  %3119 = vmatprep.subr.mxu0 %v2287
  %3120 = vmatpush1.msra.mxu0 %v2286
  %3121 = vmatprep.subr.mxu0 %v2293
  %3122 = vmatpush1.msra.mxu0 %v2292
  %3123 = vmatprep.subr.mxu0 %v2299
  %3124 = vmatpush1.msra.mxu0 %v2298
  %3125 = vmatprep.subr.mxu0 %v2305
  %3126 = vmatpush1.msra.mxu0 %v2304
  %3127 = vmatprep.subr.mxu0 %v2311
  %3128 = vmatpush1.msra.mxu0 %v2310
  %3129 = vmatprep.subr.mxu0 %v2317
  %3130 = vmatpush1.msra.mxu0 %v2316
  %3131 = vmatprep.subr.mxu0 %v2323
  %3132 = vmatpush1.msra.mxu0 %v2322
  %3133 = vmatprep.subr.mxu0 %v2329
  %3134 = vmatpush1.msra.mxu0 %v2328
  %3135 = vmatprep.subr.mxu0 %v2335
  %3136 = vmatpush1.msra.mxu0 %v2334
  %3137 = vmatprep.subr.mxu0 %v2341
  %3138 = vmatpush1.msra.mxu0 %v2340
  %3139 = vmatprep.subr.mxu0 %v2347
  %3140 = vmatpush1.msra.mxu0 %v2346
  %3141 = vmatprep.subr.mxu0 %v2353
  %3142 = vmatpush1.msra.mxu0 %v2352
  %3143 = vmatprep.subr.mxu0 %v2359
  %3144 = vmatpush1.msra.mxu0 %v2358
  %3145 = vmatprep.subr.mxu0 %v2365
  %3146 = vmatpush1.msra.mxu0 %v2364
  %3147 = vmatprep.subr.mxu0 %v2371
  %3148 = vmatpush1.msra.mxu0 %v2370
  %3149 = vmatprep.mubr.f32.mxu0 %v1219
  %3150 = vmatmul.mubr.f32.gmra.mrb[0].mxu0 %v1218
  %v3151 = vpop.f32.mrb[0].mxu0
  %v3152 = vadd.f32 %v3081, %v3151
  %v3153 = vpop.f32.mrb[0].mxu0
  %v3154 = vadd.f32 %v3083, %v3153
  %3155 = vdwg.mxu0
  %3156 = vmatprep.subr.mxu0 %v2377
  %3157 = vmatpush1.msra.mxu0 %v2376
  %3158 = vmatprep.subr.mxu0 %v2383
  %3159 = vmatpush1.msra.mxu0 %v2382
  %3160 = vmatprep.subr.mxu0 %v2389
  %3161 = vmatpush1.msra.mxu0 %v2388
  %3162 = vmatprep.subr.mxu0 %v2395
  %3163 = vmatpush1.msra.mxu0 %v2394
  %3164 = vmatprep.subr.mxu0 %v2401
  %3165 = vmatpush1.msra.mxu0 %v2400
  %3166 = vmatprep.subr.mxu0 %v2407
  %3167 = vmatpush1.msra.mxu0 %v2406
  %3168 = vmatprep.subr.mxu0 %v2413
  %3169 = vmatpush1.msra.mxu0 %v2412
  %3170 = vmatprep.subr.mxu0 %v2419
  %3171 = vmatpush1.msra.mxu0 %v2418
  %3172 = vmatprep.subr.mxu0 %v2425
  %3173 = vmatpush1.msra.mxu0 %v2424
  %3174 = vmatprep.subr.mxu0 %v2431
  %3175 = vmatpush1.msra.mxu0 %v2430
  %3176 = vmatprep.subr.mxu0 %v2437
  %3177 = vmatpush1.msra.mxu0 %v2436
  %3178 = vmatprep.subr.mxu0 %v2443
  %3179 = vmatpush1.msra.mxu0 %v2442
  %3180 = vmatprep.subr.mxu0 %v2449
  %3181 = vmatpush1.msra.mxu0 %v2448
  %3182 = vmatprep.subr.mxu0 %v2455
  %3183 = vmatpush1.msra.mxu0 %v2454
  %3184 = vmatprep.subr.mxu0 %v2461
  %3185 = vmatpush1.msra.mxu0 %v2460
  %3186 = vmatprep.subr.mxu0 %v2467
  %3187 = vmatpush1.msra.mxu0 %v2466
  %3188 = vmatprep.subr.mxu0 %v2473
  %3189 = vmatpush1.msra.mxu0 %v2472
  %3190 = vmatprep.subr.mxu0 %v2479
  %3191 = vmatpush1.msra.mxu0 %v2478
  %3192 = vmatprep.subr.mxu0 %v2485
  %3193 = vmatpush1.msra.mxu0 %v2484
  %3194 = vmatprep.subr.mxu0 %v2491
  %3195 = vmatpush1.msra.mxu0 %v2490
  %3196 = vmatprep.subr.mxu0 %v2497
  %3197 = vmatpush1.msra.mxu0 %v2496
  %3198 = vmatprep.subr.mxu0 %v2503
  %3199 = vmatpush1.msra.mxu0 %v2502
  %3200 = vmatprep.subr.mxu0 %v2509
  %3201 = vmatpush1.msra.mxu0 %v2508
  %3202 = vmatprep.subr.mxu0 %v2515
  %3203 = vmatpush1.msra.mxu0 %v2514
  %3204 = vmatprep.subr.mxu0 %v2521
  %3205 = vmatpush1.msra.mxu0 %v2520
  %3206 = vmatprep.subr.mxu0 %v2527
  %3207 = vmatpush1.msra.mxu0 %v2526
  %3208 = vmatprep.subr.mxu0 %v2533
  %3209 = vmatpush1.msra.mxu0 %v2532
  %3210 = vmatprep.subr.mxu0 %v2539
  %3211 = vmatpush1.msra.mxu0 %v2538
  %3212 = vmatprep.subr.mxu0 %v2545
  %3213 = vmatpush1.msra.mxu0 %v2544
  %3214 = vmatprep.subr.mxu0 %v2551
  %3215 = vmatpush1.msra.mxu0 %v2550
  %3216 = vmatprep.subr.mxu0 %v2557
  %3217 = vmatpush1.msra.mxu0 %v2556
  %3218 = vmatprep.subr.mxu0 %v2563
  %3219 = vmatpush1.msra.mxu0 %v2562
  %3220 = vmatprep.mubr.f32.mxu0 %v1221
  %3221 = vmatmul.mubr.f32.gmra.mrb[0].mxu0 %v1220
  %v3222 = vpop.f32.mrb[0].mxu0
  %v3223 = vadd.f32 %v3152, %v3222
  %v3224 = vpop.f32.mrb[0].mxu0
  %v3225 = vadd.f32 %v3154, %v3224
  %3226 = vdwg.mxu0
  %3227 = vmatprep.subr.mxu0 %v2569
  %3228 = vmatpush1.msra.mxu0 %v2568
  %3229 = vmatprep.subr.mxu0 %v2575
  %3230 = vmatpush1.msra.mxu0 %v2574
  %3231 = vmatprep.subr.mxu0 %v2581
  %3232 = vmatpush1.msra.mxu0 %v2580
  %3233 = vmatprep.subr.mxu0 %v2587
  %3234 = vmatpush1.msra.mxu0 %v2586
  %3235 = vmatprep.subr.mxu0 %v2593
  %3236 = vmatpush1.msra.mxu0 %v2592
  %3237 = vmatprep.subr.mxu0 %v2599
  %3238 = vmatpush1.msra.mxu0 %v2598
  %3239 = vmatprep.subr.mxu0 %v2605
  %3240 = vmatpush1.msra.mxu0 %v2604
  %3241 = vmatprep.subr.mxu0 %v2611
  %3242 = vmatpush1.msra.mxu0 %v2610
  %3243 = vmatprep.subr.mxu0 %v2617
  %3244 = vmatpush1.msra.mxu0 %v2616
  %3245 = vmatprep.subr.mxu0 %v2623
  %3246 = vmatpush1.msra.mxu0 %v2622
  %3247 = vmatprep.subr.mxu0 %v2629
  %3248 = vmatpush1.msra.mxu0 %v2628
  %3249 = vmatprep.subr.mxu0 %v2635
  %3250 = vmatpush1.msra.mxu0 %v2634
  %3251 = vmatprep.subr.mxu0 %v2641
  %3252 = vmatpush1.msra.mxu0 %v2640
  %3253 = vmatprep.subr.mxu0 %v2647
  %3254 = vmatpush1.msra.mxu0 %v2646
  %3255 = vmatprep.subr.mxu0 %v2653
  %3256 = vmatpush1.msra.mxu0 %v2652
  %3257 = vmatprep.subr.mxu0 %v2659
  %3258 = vmatpush1.msra.mxu0 %v2658
  %3259 = vmatprep.subr.mxu0 %v2665
  %3260 = vmatpush1.msra.mxu0 %v2664
  %3261 = vmatprep.subr.mxu0 %v2671
  %3262 = vmatpush1.msra.mxu0 %v2670
  %3263 = vmatprep.subr.mxu0 %v2677
  %3264 = vmatpush1.msra.mxu0 %v2676
  %3265 = vmatprep.subr.mxu0 %v2683
  %3266 = vmatpush1.msra.mxu0 %v2682
  %3267 = vmatprep.subr.mxu0 %v2689
  %3268 = vmatpush1.msra.mxu0 %v2688
  %3269 = vmatprep.subr.mxu0 0.0
  %3270 = vmatpush1.msra.mxu0 0.0
  %3271 = vmatprep.subr.mxu0 0.0
  %3272 = vmatpush1.msra.mxu0 0.0
  %3273 = vmatprep.subr.mxu0 0.0
  %3274 = vmatpush1.msra.mxu0 0.0
  %3275 = vmatprep.subr.mxu0 0.0
  %3276 = vmatpush1.msra.mxu0 0.0
  %3277 = vmatprep.subr.mxu0 0.0
  %3278 = vmatpush1.msra.mxu0 0.0
  %3279 = vmatprep.subr.mxu0 0.0
  %3280 = vmatpush1.msra.mxu0 0.0
  %3281 = vmatprep.subr.mxu0 0.0
  %3282 = vmatpush1.msra.mxu0 0.0
  %3283 = vmatprep.subr.mxu0 0.0
  %3284 = vmatpush1.msra.mxu0 0.0
  %3285 = vmatprep.subr.mxu0 0.0
  %3286 = vmatpush1.msra.mxu0 0.0
  %3287 = vmatprep.subr.mxu0 0.0
  %3288 = vmatpush1.msra.mxu0 0.0
  %3289 = vmatprep.subr.mxu0 0.0
  %3290 = vmatpush1.msra.mxu0 0.0
  %3291 = vmatprep.mubr.f32.mxu0 %v2728
  %3292 = vmatmul.mubr.f32.gmra.mrb[0].mxu0 %v1222
  %v3293 = vpop.f32.mrb[0].mxu0
  %v3294 = vadd.f32 %v3223, %v3293
  %v3295 = vpop.f32.mrb[0].mxu0
  %v3296 = vadd.f32 %v3225, %v3295
  %3297 = vdwg.mxu0
  %3298 = vmatprep.subr.mxu0 %v1227
  %3299 = vmatpush1.msra.mxu0 %v1226
  %3300 = vmatprep.subr.mxu0 %v1233
  %3301 = vmatpush1.msra.mxu0 %v1232
  %3302 = vmatprep.subr.mxu0 %v1239
  %3303 = vmatpush1.msra.mxu0 %v1238
  %3304 = vmatprep.subr.mxu0 %v1245
  %3305 = vmatpush1.msra.mxu0 %v1244
  %3306 = vmatprep.subr.mxu0 %v1251
  %3307 = vmatpush1.msra.mxu0 %v1250
  %3308 = vmatprep.subr.mxu0 %v1257
  %3309 = vmatpush1.msra.mxu0 %v1256
  %3310 = vmatprep.subr.mxu0 %v1263
  %3311 = vmatpush1.msra.mxu0 %v1262
  %3312 = vmatprep.subr.mxu0 %v1269
  %3313 = vmatpush1.msra.mxu0 %v1268
  %3314 = vmatprep.subr.mxu0 %v1275
  %3315 = vmatpush1.msra.mxu0 %v1274
  %3316 = vmatprep.subr.mxu0 %v1281
  %3317 = vmatpush1.msra.mxu0 %v1280
  %3318 = vmatprep.subr.mxu0 %v1287
  %3319 = vmatpush1.msra.mxu0 %v1286
  %3320 = vmatprep.subr.mxu0 %v1293
  %3321 = vmatpush1.msra.mxu0 %v1292
  %3322 = vmatprep.subr.mxu0 %v1299
  %3323 = vmatpush1.msra.mxu0 %v1298
  %3324 = vmatprep.subr.mxu0 %v1305
  %3325 = vmatpush1.msra.mxu0 %v1304
  %3326 = vmatprep.subr.mxu0 %v1311
  %3327 = vmatpush1.msra.mxu0 %v1310
  %3328 = vmatprep.subr.mxu0 %v1317
  %3329 = vmatpush1.msra.mxu0 %v1316
  %3330 = vmatprep.subr.mxu0 %v1323
  %3331 = vmatpush1.msra.mxu0 %v1322
  %3332 = vmatprep.subr.mxu0 %v1329
  %3333 = vmatpush1.msra.mxu0 %v1328
  %3334 = vmatprep.subr.mxu0 %v1335
  %3335 = vmatpush1.msra.mxu0 %v1334
  %3336 = vmatprep.subr.mxu0 %v1341
  %3337 = vmatpush1.msra.mxu0 %v1340
  %3338 = vmatprep.subr.mxu0 %v1347
  %3339 = vmatpush1.msra.mxu0 %v1346
  %3340 = vmatprep.subr.mxu0 %v1353
  %3341 = vmatpush1.msra.mxu0 %v1352
  %3342 = vmatprep.subr.mxu0 %v1359
  %3343 = vmatpush1.msra.mxu0 %v1358
  %3344 = vmatprep.subr.mxu0 %v1365
  %3345 = vmatpush1.msra.mxu0 %v1364
  %3346 = vmatprep.subr.mxu0 %v1371
  %3347 = vmatpush1.msra.mxu0 %v1370
  %3348 = vmatprep.subr.mxu0 %v1377
  %3349 = vmatpush1.msra.mxu0 %v1376
  %3350 = vmatprep.subr.mxu0 %v1383
  %3351 = vmatpush1.msra.mxu0 %v1382
  %3352 = vmatprep.subr.mxu0 %v1389
  %3353 = vmatpush1.msra.mxu0 %v1388
  %3354 = vmatprep.subr.mxu0 %v1395
  %3355 = vmatpush1.msra.mxu0 %v1394
  %3356 = vmatprep.subr.mxu0 %v1401
  %3357 = vmatpush1.msra.mxu0 %v1400
  %3358 = vmatprep.subr.mxu0 %v1407
  %3359 = vmatpush1.msra.mxu0 %v1406
  %3360 = vmatprep.subr.mxu0 %v1413
  %3361 = vmatpush1.msra.mxu0 %v1412
  %3362 = vmatprep.mubr.f32.mxu0 %v1209
  %3363 = vmatmul.mubr.f32.gmra.mrb[0].mxu0 %v1208
  %v3364 = vpop.f32.mrb[0].mxu0
  %v3365 = vadd.f32 %v2707, %v3364
  %v3366 = vpop.f32.mrb[0].mxu0
  %v3367 = vadd.f32 %v2711, %v3366
  %3368 = vdwg.mxu0
  %3369 = vmatprep.subr.mxu0 %v1419
  %3370 = vmatpush1.msra.mxu0 %v1418
  %3371 = vmatprep.subr.mxu0 %v1425
  %3372 = vmatpush1.msra.mxu0 %v1424
  %3373 = vmatprep.subr.mxu0 %v1431
  %3374 = vmatpush1.msra.mxu0 %v1430
  %3375 = vmatprep.subr.mxu0 %v1437
  %3376 = vmatpush1.msra.mxu0 %v1436
  %3377 = vmatprep.subr.mxu0 %v1443
  %3378 = vmatpush1.msra.mxu0 %v1442
  %3379 = vmatprep.subr.mxu0 %v1449
  %3380 = vmatpush1.msra.mxu0 %v1448
  %3381 = vmatprep.subr.mxu0 %v1455
  %3382 = vmatpush1.msra.mxu0 %v1454
  %3383 = vmatprep.subr.mxu0 %v1461
  %3384 = vmatpush1.msra.mxu0 %v1460
  %3385 = vmatprep.subr.mxu0 %v1467
  %3386 = vmatpush1.msra.mxu0 %v1466
  %3387 = vmatprep.subr.mxu0 %v1473
  %3388 = vmatpush1.msra.mxu0 %v1472
  %3389 = vmatprep.subr.mxu0 %v1479
  %3390 = vmatpush1.msra.mxu0 %v1478
  %3391 = vmatprep.subr.mxu0 %v1485
  %3392 = vmatpush1.msra.mxu0 %v1484
  %3393 = vmatprep.subr.mxu0 %v1491
  %3394 = vmatpush1.msra.mxu0 %v1490
  %3395 = vmatprep.subr.mxu0 %v1497
  %3396 = vmatpush1.msra.mxu0 %v1496
  %3397 = vmatprep.subr.mxu0 %v1503
  %3398 = vmatpush1.msra.mxu0 %v1502
  %3399 = vmatprep.subr.mxu0 %v1509
  %3400 = vmatpush1.msra.mxu0 %v1508
  %3401 = vmatprep.subr.mxu0 %v1515
  %3402 = vmatpush1.msra.mxu0 %v1514
  %3403 = vmatprep.subr.mxu0 %v1521
  %3404 = vmatpush1.msra.mxu0 %v1520
  %3405 = vmatprep.subr.mxu0 %v1527
  %3406 = vmatpush1.msra.mxu0 %v1526
  %3407 = vmatprep.subr.mxu0 %v1533
  %3408 = vmatpush1.msra.mxu0 %v1532
  %3409 = vmatprep.subr.mxu0 %v1539
  %3410 = vmatpush1.msra.mxu0 %v1538
  %3411 = vmatprep.subr.mxu0 %v1545
  %3412 = vmatpush1.msra.mxu0 %v1544
  %3413 = vmatprep.subr.mxu0 %v1551
  %3414 = vmatpush1.msra.mxu0 %v1550
  %3415 = vmatprep.subr.mxu0 %v1557
  %3416 = vmatpush1.msra.mxu0 %v1556
  %3417 = vmatprep.subr.mxu0 %v1563
  %3418 = vmatpush1.msra.mxu0 %v1562
  %3419 = vmatprep.subr.mxu0 %v1569
  %3420 = vmatpush1.msra.mxu0 %v1568
  %3421 = vmatprep.subr.mxu0 %v1575
  %3422 = vmatpush1.msra.mxu0 %v1574
  %3423 = vmatprep.subr.mxu0 %v1581
  %3424 = vmatpush1.msra.mxu0 %v1580
  %3425 = vmatprep.subr.mxu0 %v1587
  %3426 = vmatpush1.msra.mxu0 %v1586
  %3427 = vmatprep.subr.mxu0 %v1593
  %3428 = vmatpush1.msra.mxu0 %v1592
  %3429 = vmatprep.subr.mxu0 %v1599
  %3430 = vmatpush1.msra.mxu0 %v1598
  %3431 = vmatprep.subr.mxu0 %v1605
  %3432 = vmatpush1.msra.mxu0 %v1604
  %3433 = vmatprep.mubr.f32.mxu0 %v1211
  %3434 = vmatmul.mubr.f32.gmra.mrb[0].mxu0 %v1210
  %v3435 = vpop.f32.mrb[0].mxu0
  %v3436 = vadd.f32 %v3365, %v3435
  %v3437 = vpop.f32.mrb[0].mxu0
  %v3438 = vadd.f32 %v3367, %v3437
  %3439 = vdwg.mxu0
  %3440 = vmatprep.subr.mxu0 %v1611
  %3441 = vmatpush1.msra.mxu0 %v1610
  %3442 = vmatprep.subr.mxu0 %v1617
  %3443 = vmatpush1.msra.mxu0 %v1616
  %3444 = vmatprep.subr.mxu0 %v1623
  %3445 = vmatpush1.msra.mxu0 %v1622
  %3446 = vmatprep.subr.mxu0 %v1629
  %3447 = vmatpush1.msra.mxu0 %v1628
  %3448 = vmatprep.subr.mxu0 %v1635
  %3449 = vmatpush1.msra.mxu0 %v1634
  %3450 = vmatprep.subr.mxu0 %v1641
  %3451 = vmatpush1.msra.mxu0 %v1640
  %3452 = vmatprep.subr.mxu0 %v1647
  %3453 = vmatpush1.msra.mxu0 %v1646
  %3454 = vmatprep.subr.mxu0 %v1653
  %3455 = vmatpush1.msra.mxu0 %v1652
  %3456 = vmatprep.subr.mxu0 %v1659
  %3457 = vmatpush1.msra.mxu0 %v1658
  %3458 = vmatprep.subr.mxu0 %v1665
  %3459 = vmatpush1.msra.mxu0 %v1664
  %3460 = vmatprep.subr.mxu0 %v1671
  %3461 = vmatpush1.msra.mxu0 %v1670
  %3462 = vmatprep.subr.mxu0 %v1677
  %3463 = vmatpush1.msra.mxu0 %v1676
  %3464 = vmatprep.subr.mxu0 %v1683
  %3465 = vmatpush1.msra.mxu0 %v1682
  %3466 = vmatprep.subr.mxu0 %v1689
  %3467 = vmatpush1.msra.mxu0 %v1688
  %3468 = vmatprep.subr.mxu0 %v1695
  %3469 = vmatpush1.msra.mxu0 %v1694
  %3470 = vmatprep.subr.mxu0 %v1701
  %3471 = vmatpush1.msra.mxu0 %v1700
  %3472 = vmatprep.subr.mxu0 %v1707
  %3473 = vmatpush1.msra.mxu0 %v1706
  %3474 = vmatprep.subr.mxu0 %v1713
  %3475 = vmatpush1.msra.mxu0 %v1712
  %3476 = vmatprep.subr.mxu0 %v1719
  %3477 = vmatpush1.msra.mxu0 %v1718
  %3478 = vmatprep.subr.mxu0 %v1725
  %3479 = vmatpush1.msra.mxu0 %v1724
  %3480 = vmatprep.subr.mxu0 %v1731
  %3481 = vmatpush1.msra.mxu0 %v1730
  %3482 = vmatprep.subr.mxu0 %v1737
  %3483 = vmatpush1.msra.mxu0 %v1736
  %3484 = vmatprep.subr.mxu0 %v1743
  %3485 = vmatpush1.msra.mxu0 %v1742
  %3486 = vmatprep.subr.mxu0 %v1749
  %3487 = vmatpush1.msra.mxu0 %v1748
  %3488 = vmatprep.subr.mxu0 %v1755
  %3489 = vmatpush1.msra.mxu0 %v1754
  %3490 = vmatprep.subr.mxu0 %v1761
  %3491 = vmatpush1.msra.mxu0 %v1760
  %3492 = vmatprep.subr.mxu0 %v1767
  %3493 = vmatpush1.msra.mxu0 %v1766
  %3494 = vmatprep.subr.mxu0 %v1773
  %3495 = vmatpush1.msra.mxu0 %v1772
  %3496 = vmatprep.subr.mxu0 %v1779
  %3497 = vmatpush1.msra.mxu0 %v1778
  %3498 = vmatprep.subr.mxu0 %v1785
  %3499 = vmatpush1.msra.mxu0 %v1784
  %3500 = vmatprep.subr.mxu0 %v1791
  %3501 = vmatpush1.msra.mxu0 %v1790
  %3502 = vmatprep.subr.mxu0 %v1797
  %3503 = vmatpush1.msra.mxu0 %v1796
  %3504 = vmatprep.mubr.f32.mxu0 %v1213
  %3505 = vmatmul.mubr.f32.gmra.mrb[0].mxu0 %v1212
  %v3506 = vpop.f32.mrb[0].mxu0
  %v3507 = vadd.f32 %v3436, %v3506
  %v3508 = vpop.f32.mrb[0].mxu0
  %v3509 = vadd.f32 %v3438, %v3508
  %3510 = vdwg.mxu0
  %3511 = vmatprep.subr.mxu0 %v1803
  %3512 = vmatpush1.msra.mxu0 %v1802
  %3513 = vmatprep.subr.mxu0 %v1809
  %3514 = vmatpush1.msra.mxu0 %v1808
  %3515 = vmatprep.subr.mxu0 %v1815
  %3516 = vmatpush1.msra.mxu0 %v1814
  %3517 = vmatprep.subr.mxu0 %v1821
  %3518 = vmatpush1.msra.mxu0 %v1820
  %3519 = vmatprep.subr.mxu0 %v1827
  %3520 = vmatpush1.msra.mxu0 %v1826
  %3521 = vmatprep.subr.mxu0 %v1833
  %3522 = vmatpush1.msra.mxu0 %v1832
  %3523 = vmatprep.subr.mxu0 %v1839
  %3524 = vmatpush1.msra.mxu0 %v1838
  %3525 = vmatprep.subr.mxu0 %v1845
  %3526 = vmatpush1.msra.mxu0 %v1844
  %3527 = vmatprep.subr.mxu0 %v1851
  %3528 = vmatpush1.msra.mxu0 %v1850
  %3529 = vmatprep.subr.mxu0 %v1857
  %3530 = vmatpush1.msra.mxu0 %v1856
  %3531 = vmatprep.subr.mxu0 %v1863
  %3532 = vmatpush1.msra.mxu0 %v1862
  %3533 = vmatprep.subr.mxu0 %v1869
  %3534 = vmatpush1.msra.mxu0 %v1868
  %3535 = vmatprep.subr.mxu0 %v1875
  %3536 = vmatpush1.msra.mxu0 %v1874
  %3537 = vmatprep.subr.mxu0 %v1881
  %3538 = vmatpush1.msra.mxu0 %v1880
  %3539 = vmatprep.subr.mxu0 %v1887
  %3540 = vmatpush1.msra.mxu0 %v1886
  %3541 = vmatprep.subr.mxu0 %v1893
  %3542 = vmatpush1.msra.mxu0 %v1892
  %3543 = vmatprep.subr.mxu0 %v1899
  %3544 = vmatpush1.msra.mxu0 %v1898
  %3545 = vmatprep.subr.mxu0 %v1905
  %3546 = vmatpush1.msra.mxu0 %v1904
  %3547 = vmatprep.subr.mxu0 %v1911
  %3548 = vmatpush1.msra.mxu0 %v1910
  %3549 = vmatprep.subr.mxu0 %v1917
  %3550 = vmatpush1.msra.mxu0 %v1916
  %3551 = vmatprep.subr.mxu0 %v1923
  %3552 = vmatpush1.msra.mxu0 %v1922
  %3553 = vmatprep.subr.mxu0 %v1929
  %3554 = vmatpush1.msra.mxu0 %v1928
  %3555 = vmatprep.subr.mxu0 %v1935
  %3556 = vmatpush1.msra.mxu0 %v1934
  %3557 = vmatprep.subr.mxu0 %v1941
  %3558 = vmatpush1.msra.mxu0 %v1940
  %3559 = vmatprep.subr.mxu0 %v1947
  %3560 = vmatpush1.msra.mxu0 %v1946
  %3561 = vmatprep.subr.mxu0 %v1953
  %3562 = vmatpush1.msra.mxu0 %v1952
  %3563 = vmatprep.subr.mxu0 %v1959
  %3564 = vmatpush1.msra.mxu0 %v1958
  %3565 = vmatprep.subr.mxu0 %v1965
  %3566 = vmatpush1.msra.mxu0 %v1964
  %3567 = vmatprep.subr.mxu0 %v1971
  %3568 = vmatpush1.msra.mxu0 %v1970
  %3569 = vmatprep.subr.mxu0 %v1977
  %3570 = vmatpush1.msra.mxu0 %v1976
  %3571 = vmatprep.subr.mxu0 %v1983
  %3572 = vmatpush1.msra.mxu0 %v1982
  %3573 = vmatprep.subr.mxu0 %v1989
  %3574 = vmatpush1.msra.mxu0 %v1988
  %3575 = vmatprep.mubr.f32.mxu0 %v1215
  %3576 = vmatmul.mubr.f32.gmra.mrb[0].mxu0 %v1214
  %v3577 = vpop.f32.mrb[0].mxu0
  %v3578 = vadd.f32 %v3507, %v3577
  %v3579 = vpop.f32.mrb[0].mxu0
  %v3580 = vadd.f32 %v3509, %v3579
  %3581 = vdwg.mxu0
  %3582 = vmatprep.subr.mxu0 %v1995
  %3583 = vmatpush1.msra.mxu0 %v1994
  %3584 = vmatprep.subr.mxu0 %v2001
  %3585 = vmatpush1.msra.mxu0 %v2000
  %3586 = vmatprep.subr.mxu0 %v2007
  %3587 = vmatpush1.msra.mxu0 %v2006
  %3588 = vmatprep.subr.mxu0 %v2013
  %3589 = vmatpush1.msra.mxu0 %v2012
  %3590 = vmatprep.subr.mxu0 %v2019
  %3591 = vmatpush1.msra.mxu0 %v2018
  %3592 = vmatprep.subr.mxu0 %v2025
  %3593 = vmatpush1.msra.mxu0 %v2024
  %3594 = vmatprep.subr.mxu0 %v2031
  %3595 = vmatpush1.msra.mxu0 %v2030
  %3596 = vmatprep.subr.mxu0 %v2037
  %3597 = vmatpush1.msra.mxu0 %v2036
  %3598 = vmatprep.subr.mxu0 %v2043
  %3599 = vmatpush1.msra.mxu0 %v2042
  %3600 = vmatprep.subr.mxu0 %v2049
  %3601 = vmatpush1.msra.mxu0 %v2048
  %3602 = vmatprep.subr.mxu0 %v2055
  %3603 = vmatpush1.msra.mxu0 %v2054
  %3604 = vmatprep.subr.mxu0 %v2061
  %3605 = vmatpush1.msra.mxu0 %v2060
  %3606 = vmatprep.subr.mxu0 %v2067
  %3607 = vmatpush1.msra.mxu0 %v2066
  %3608 = vmatprep.subr.mxu0 %v2073
  %3609 = vmatpush1.msra.mxu0 %v2072
  %3610 = vmatprep.subr.mxu0 %v2079
  %3611 = vmatpush1.msra.mxu0 %v2078
  %3612 = vmatprep.subr.mxu0 %v2085
  %3613 = vmatpush1.msra.mxu0 %v2084
  %3614 = vmatprep.subr.mxu0 %v2091
  %3615 = vmatpush1.msra.mxu0 %v2090
  %3616 = vmatprep.subr.mxu0 %v2097
  %3617 = vmatpush1.msra.mxu0 %v2096
  %3618 = vmatprep.subr.mxu0 %v2103
  %3619 = vmatpush1.msra.mxu0 %v2102
  %3620 = vmatprep.subr.mxu0 %v2109
  %3621 = vmatpush1.msra.mxu0 %v2108
  %3622 = vmatprep.subr.mxu0 %v2115
  %3623 = vmatpush1.msra.mxu0 %v2114
  %3624 = vmatprep.subr.mxu0 %v2121
  %3625 = vmatpush1.msra.mxu0 %v2120
  %3626 = vmatprep.subr.mxu0 %v2127
  %3627 = vmatpush1.msra.mxu0 %v2126
  %3628 = vmatprep.subr.mxu0 %v2133
  %3629 = vmatpush1.msra.mxu0 %v2132
  %3630 = vmatprep.subr.mxu0 %v2139
  %3631 = vmatpush1.msra.mxu0 %v2138
  %3632 = vmatprep.subr.mxu0 %v2145
  %3633 = vmatpush1.msra.mxu0 %v2144
  %3634 = vmatprep.subr.mxu0 %v2151
  %3635 = vmatpush1.msra.mxu0 %v2150
  %3636 = vmatprep.subr.mxu0 %v2157
  %3637 = vmatpush1.msra.mxu0 %v2156
  %3638 = vmatprep.subr.mxu0 %v2163
  %3639 = vmatpush1.msra.mxu0 %v2162
  %3640 = vmatprep.subr.mxu0 %v2169
  %3641 = vmatpush1.msra.mxu0 %v2168
  %3642 = vmatprep.subr.mxu0 %v2175
  %3643 = vmatpush1.msra.mxu0 %v2174
  %3644 = vmatprep.subr.mxu0 %v2181
  %3645 = vmatpush1.msra.mxu0 %v2180
  %3646 = vmatprep.mubr.f32.mxu0 %v1217
  %3647 = vmatmul.mubr.f32.gmra.mrb[0].mxu0 %v1216
  %v3648 = vpop.f32.mrb[0].mxu0
  %v3649 = vadd.f32 %v3578, %v3648
  %v3650 = vpop.f32.mrb[0].mxu0
  %v3651 = vadd.f32 %v3580, %v3650
  %3652 = vdwg.mxu0
  %3653 = vmatprep.subr.mxu0 %v2187
  %3654 = vmatpush1.msra.mxu0 %v2186
  %3655 = vmatprep.subr.mxu0 %v2193
  %3656 = vmatpush1.msra.mxu0 %v2192
  %3657 = vmatprep.subr.mxu0 %v2199
  %3658 = vmatpush1.msra.mxu0 %v2198
  %3659 = vmatprep.subr.mxu0 %v2205
  %3660 = vmatpush1.msra.mxu0 %v2204
  %3661 = vmatprep.subr.mxu0 %v2211
  %3662 = vmatpush1.msra.mxu0 %v2210
  %3663 = vmatprep.subr.mxu0 %v2217
  %3664 = vmatpush1.msra.mxu0 %v2216
  %3665 = vmatprep.subr.mxu0 %v2223
  %3666 = vmatpush1.msra.mxu0 %v2222
  %3667 = vmatprep.subr.mxu0 %v2229
  %3668 = vmatpush1.msra.mxu0 %v2228
  %3669 = vmatprep.subr.mxu0 %v2235
  %3670 = vmatpush1.msra.mxu0 %v2234
  %3671 = vmatprep.subr.mxu0 %v2241
  %3672 = vmatpush1.msra.mxu0 %v2240
  %3673 = vmatprep.subr.mxu0 %v2247
  %3674 = vmatpush1.msra.mxu0 %v2246
  %3675 = vmatprep.subr.mxu0 %v2253
  %3676 = vmatpush1.msra.mxu0 %v2252
  %3677 = vmatprep.subr.mxu0 %v2259
  %3678 = vmatpush1.msra.mxu0 %v2258
  %3679 = vmatprep.subr.mxu0 %v2265
  %3680 = vmatpush1.msra.mxu0 %v2264
  %3681 = vmatprep.subr.mxu0 %v2271
  %3682 = vmatpush1.msra.mxu0 %v2270
  %3683 = vmatprep.subr.mxu0 %v2277
  %3684 = vmatpush1.msra.mxu0 %v2276
  %3685 = vmatprep.subr.mxu0 %v2283
  %3686 = vmatpush1.msra.mxu0 %v2282
  %3687 = vmatprep.subr.mxu0 %v2289
  %3688 = vmatpush1.msra.mxu0 %v2288
  %3689 = vmatprep.subr.mxu0 %v2295
  %3690 = vmatpush1.msra.mxu0 %v2294
  %3691 = vmatprep.subr.mxu0 %v2301
  %3692 = vmatpush1.msra.mxu0 %v2300
  %3693 = vmatprep.subr.mxu0 %v2307
  %3694 = vmatpush1.msra.mxu0 %v2306
  %3695 = vmatprep.subr.mxu0 %v2313
  %3696 = vmatpush1.msra.mxu0 %v2312
  %3697 = vmatprep.subr.mxu0 %v2319
  %3698 = vmatpush1.msra.mxu0 %v2318
  %3699 = vmatprep.subr.mxu0 %v2325
  %3700 = vmatpush1.msra.mxu0 %v2324
  %3701 = vmatprep.subr.mxu0 %v2331
  %3702 = vmatpush1.msra.mxu0 %v2330
  %3703 = vmatprep.subr.mxu0 %v2337
  %3704 = vmatpush1.msra.mxu0 %v2336
  %3705 = vmatprep.subr.mxu0 %v2343
  %3706 = vmatpush1.msra.mxu0 %v2342
  %3707 = vmatprep.subr.mxu0 %v2349
  %3708 = vmatpush1.msra.mxu0 %v2348
  %3709 = vmatprep.subr.mxu0 %v2355
  %3710 = vmatpush1.msra.mxu0 %v2354
  %3711 = vmatprep.subr.mxu0 %v2361
  %3712 = vmatpush1.msra.mxu0 %v2360
  %3713 = vmatprep.subr.mxu0 %v2367
  %3714 = vmatpush1.msra.mxu0 %v2366
  %3715 = vmatprep.subr.mxu0 %v2373
  %3716 = vmatpush1.msra.mxu0 %v2372
  %3717 = vmatprep.mubr.f32.mxu0 %v1219
  %3718 = vmatmul.mubr.f32.gmra.mrb[0].mxu0 %v1218
  %v3719 = vpop.f32.mrb[0].mxu0
  %v3720 = vadd.f32 %v3649, %v3719
  %v3721 = vpop.f32.mrb[0].mxu0
  %v3722 = vadd.f32 %v3651, %v3721
  %3723 = vdwg.mxu0
  %3724 = vmatprep.subr.mxu0 %v2379
  %3725 = vmatpush1.msra.mxu0 %v2378
  %3726 = vmatprep.subr.mxu0 %v2385
  %3727 = vmatpush1.msra.mxu0 %v2384
  %3728 = vmatprep.subr.mxu0 %v2391
  %3729 = vmatpush1.msra.mxu0 %v2390
  %3730 = vmatprep.subr.mxu0 %v2397
  %3731 = vmatpush1.msra.mxu0 %v2396
  %3732 = vmatprep.subr.mxu0 %v2403
  %3733 = vmatpush1.msra.mxu0 %v2402
  %3734 = vmatprep.subr.mxu0 %v2409
  %3735 = vmatpush1.msra.mxu0 %v2408
  %3736 = vmatprep.subr.mxu0 %v2415
  %3737 = vmatpush1.msra.mxu0 %v2414
  %3738 = vmatprep.subr.mxu0 %v2421
  %3739 = vmatpush1.msra.mxu0 %v2420
  %3740 = vmatprep.subr.mxu0 %v2427
  %3741 = vmatpush1.msra.mxu0 %v2426
  %3742 = vmatprep.subr.mxu0 %v2433
  %3743 = vmatpush1.msra.mxu0 %v2432
  %3744 = vmatprep.subr.mxu0 %v2439
  %3745 = vmatpush1.msra.mxu0 %v2438
  %3746 = vmatprep.subr.mxu0 %v2445
  %3747 = vmatpush1.msra.mxu0 %v2444
  %3748 = vmatprep.subr.mxu0 %v2451
  %3749 = vmatpush1.msra.mxu0 %v2450
  %3750 = vmatprep.subr.mxu0 %v2457
  %3751 = vmatpush1.msra.mxu0 %v2456
  %3752 = vmatprep.subr.mxu0 %v2463
  %3753 = vmatpush1.msra.mxu0 %v2462
  %3754 = vmatprep.subr.mxu0 %v2469
  %3755 = vmatpush1.msra.mxu0 %v2468
  %3756 = vmatprep.subr.mxu0 %v2475
  %3757 = vmatpush1.msra.mxu0 %v2474
  %3758 = vmatprep.subr.mxu0 %v2481
  %3759 = vmatpush1.msra.mxu0 %v2480
  %3760 = vmatprep.subr.mxu0 %v2487
  %3761 = vmatpush1.msra.mxu0 %v2486
  %3762 = vmatprep.subr.mxu0 %v2493
  %3763 = vmatpush1.msra.mxu0 %v2492
  %3764 = vmatprep.subr.mxu0 %v2499
  %3765 = vmatpush1.msra.mxu0 %v2498
  %3766 = vmatprep.subr.mxu0 %v2505
  %3767 = vmatpush1.msra.mxu0 %v2504
  %3768 = vmatprep.subr.mxu0 %v2511
  %3769 = vmatpush1.msra.mxu0 %v2510
  %3770 = vmatprep.subr.mxu0 %v2517
  %3771 = vmatpush1.msra.mxu0 %v2516
  %3772 = vmatprep.subr.mxu0 %v2523
  %3773 = vmatpush1.msra.mxu0 %v2522
  %3774 = vmatprep.subr.mxu0 %v2529
  %3775 = vmatpush1.msra.mxu0 %v2528
  %3776 = vmatprep.subr.mxu0 %v2535
  %3777 = vmatpush1.msra.mxu0 %v2534
  %3778 = vmatprep.subr.mxu0 %v2541
  %3779 = vmatpush1.msra.mxu0 %v2540
  %3780 = vmatprep.subr.mxu0 %v2547
  %3781 = vmatpush1.msra.mxu0 %v2546
  %3782 = vmatprep.subr.mxu0 %v2553
  %3783 = vmatpush1.msra.mxu0 %v2552
  %3784 = vmatprep.subr.mxu0 %v2559
  %3785 = vmatpush1.msra.mxu0 %v2558
  %3786 = vmatprep.subr.mxu0 %v2565
  %3787 = vmatpush1.msra.mxu0 %v2564
  %3788 = vmatprep.mubr.f32.mxu0 %v1221
  %3789 = vmatmul.mubr.f32.gmra.mrb[0].mxu0 %v1220
  %v3790 = vpop.f32.mrb[0].mxu0
  %v3791 = vadd.f32 %v3720, %v3790
  %v3792 = vpop.f32.mrb[0].mxu0
  %v3793 = vadd.f32 %v3722, %v3792
  %3794 = vdwg.mxu0
  %3795 = vmatprep.subr.mxu0 %v2571
  %3796 = vmatpush1.msra.mxu0 %v2570
  %3797 = vmatprep.subr.mxu0 %v2577
  %3798 = vmatpush1.msra.mxu0 %v2576
  %3799 = vmatprep.subr.mxu0 %v2583
  %3800 = vmatpush1.msra.mxu0 %v2582
  %3801 = vmatprep.subr.mxu0 %v2589
  %3802 = vmatpush1.msra.mxu0 %v2588
  %3803 = vmatprep.subr.mxu0 %v2595
  %3804 = vmatpush1.msra.mxu0 %v2594
  %3805 = vmatprep.subr.mxu0 %v2601
  %3806 = vmatpush1.msra.mxu0 %v2600
  %3807 = vmatprep.subr.mxu0 %v2607
  %3808 = vmatpush1.msra.mxu0 %v2606
  %3809 = vmatprep.subr.mxu0 %v2613
  %3810 = vmatpush1.msra.mxu0 %v2612
  %3811 = vmatprep.subr.mxu0 %v2619
  %3812 = vmatpush1.msra.mxu0 %v2618
  %3813 = vmatprep.subr.mxu0 %v2625
  %3814 = vmatpush1.msra.mxu0 %v2624
  %3815 = vmatprep.subr.mxu0 %v2631
  %3816 = vmatpush1.msra.mxu0 %v2630
  %3817 = vmatprep.subr.mxu0 %v2637
  %3818 = vmatpush1.msra.mxu0 %v2636
  %3819 = vmatprep.subr.mxu0 %v2643
  %3820 = vmatpush1.msra.mxu0 %v2642
  %3821 = vmatprep.subr.mxu0 %v2649
  %3822 = vmatpush1.msra.mxu0 %v2648
  %3823 = vmatprep.subr.mxu0 %v2655
  %3824 = vmatpush1.msra.mxu0 %v2654
  %3825 = vmatprep.subr.mxu0 %v2661
  %3826 = vmatpush1.msra.mxu0 %v2660
  %3827 = vmatprep.subr.mxu0 %v2667
  %3828 = vmatpush1.msra.mxu0 %v2666
  %3829 = vmatprep.subr.mxu0 %v2673
  %3830 = vmatpush1.msra.mxu0 %v2672
  %3831 = vmatprep.subr.mxu0 %v2679
  %3832 = vmatpush1.msra.mxu0 %v2678
  %3833 = vmatprep.subr.mxu0 %v2685
  %3834 = vmatpush1.msra.mxu0 %v2684
  %3835 = vmatprep.subr.mxu0 %v2691
  %3836 = vmatpush1.msra.mxu0 %v2690
  %3837 = vmatprep.subr.mxu0 0.0
  %3838 = vmatpush1.msra.mxu0 0.0
  %3839 = vmatprep.subr.mxu0 0.0
  %3840 = vmatpush1.msra.mxu0 0.0
  %3841 = vmatprep.subr.mxu0 0.0
  %3842 = vmatpush1.msra.mxu0 0.0
  %3843 = vmatprep.subr.mxu0 0.0
  %3844 = vmatpush1.msra.mxu0 0.0
  %3845 = vmatprep.subr.mxu0 0.0
  %3846 = vmatpush1.msra.mxu0 0.0
  %3847 = vmatprep.subr.mxu0 0.0
  %3848 = vmatpush1.msra.mxu0 0.0
  %3849 = vmatprep.subr.mxu0 0.0
  %3850 = vmatpush1.msra.mxu0 0.0
  %3851 = vmatprep.subr.mxu0 0.0
  %3852 = vmatpush1.msra.mxu0 0.0
  %3853 = vmatprep.subr.mxu0 0.0
  %3854 = vmatpush1.msra.mxu0 0.0
  %3855 = vmatprep.subr.mxu0 0.0
  %3856 = vmatpush1.msra.mxu0 0.0
  %3857 = vmatprep.subr.mxu0 0.0
  %3858 = vmatpush1.msra.mxu0 0.0
  %3859 = vmatprep.mubr.f32.mxu0 %v2728
  %3860 = vmatmul.mubr.f32.gmra.mrb[0].mxu0 %v1222
  %v3861 = vpop.f32.mrb[0].mxu0
  %v3862 = vadd.f32 %v3791, %v3861
  %v3863 = vpop.f32.mrb[0].mxu0
  %v3864 = vadd.f32 %v3793, %v3863
  %3865 = vdwg.mxu0
  %3866 = vmatprep.subr.mxu0 %v1229
  %3867 = vmatpush1.msra.mxu0 %v1228
  %3868 = vmatprep.subr.mxu0 %v1235
  %3869 = vmatpush1.msra.mxu0 %v1234
  %3870 = vmatprep.subr.mxu0 %v1241
  %3871 = vmatpush1.msra.mxu0 %v1240
  %3872 = vmatprep.subr.mxu0 %v1247
  %3873 = vmatpush1.msra.mxu0 %v1246
  %3874 = vmatprep.subr.mxu0 %v1253
  %3875 = vmatpush1.msra.mxu0 %v1252
  %3876 = vmatprep.subr.mxu0 %v1259
  %3877 = vmatpush1.msra.mxu0 %v1258
  %3878 = vmatprep.subr.mxu0 %v1265
  %3879 = vmatpush1.msra.mxu0 %v1264
  %3880 = vmatprep.subr.mxu0 %v1271
  %3881 = vmatpush1.msra.mxu0 %v1270
  %3882 = vmatprep.subr.mxu0 %v1277
  %3883 = vmatpush1.msra.mxu0 %v1276
  %3884 = vmatprep.subr.mxu0 %v1283
  %3885 = vmatpush1.msra.mxu0 %v1282
  %3886 = vmatprep.subr.mxu0 %v1289
  %3887 = vmatpush1.msra.mxu0 %v1288
  %3888 = vmatprep.subr.mxu0 %v1295
  %3889 = vmatpush1.msra.mxu0 %v1294
  %3890 = vmatprep.subr.mxu0 %v1301
  %3891 = vmatpush1.msra.mxu0 %v1300
  %3892 = vmatprep.subr.mxu0 %v1307
  %3893 = vmatpush1.msra.mxu0 %v1306
  %3894 = vmatprep.subr.mxu0 %v1313
  %3895 = vmatpush1.msra.mxu0 %v1312
  %3896 = vmatprep.subr.mxu0 %v1319
  %3897 = vmatpush1.msra.mxu0 %v1318
  %3898 = vmatprep.subr.mxu0 %v1325
  %3899 = vmatpush1.msra.mxu0 %v1324
  %3900 = vmatprep.subr.mxu0 %v1331
  %3901 = vmatpush1.msra.mxu0 %v1330
  %3902 = vmatprep.subr.mxu0 %v1337
  %3903 = vmatpush1.msra.mxu0 %v1336
  %3904 = vmatprep.subr.mxu0 %v1343
  %3905 = vmatpush1.msra.mxu0 %v1342
  %3906 = vmatprep.subr.mxu0 %v1349
  %3907 = vmatpush1.msra.mxu0 %v1348
  %3908 = vmatprep.subr.mxu0 %v1355
  %3909 = vmatpush1.msra.mxu0 %v1354
  %3910 = vmatprep.subr.mxu0 %v1361
  %3911 = vmatpush1.msra.mxu0 %v1360
  %3912 = vmatprep.subr.mxu0 %v1367
  %3913 = vmatpush1.msra.mxu0 %v1366
  %3914 = vmatprep.subr.mxu0 %v1373
  %3915 = vmatpush1.msra.mxu0 %v1372
  %3916 = vmatprep.subr.mxu0 %v1379
  %3917 = vmatpush1.msra.mxu0 %v1378
  %3918 = vmatprep.subr.mxu0 %v1385
  %3919 = vmatpush1.msra.mxu0 %v1384
  %3920 = vmatprep.subr.mxu0 %v1391
  %3921 = vmatpush1.msra.mxu0 %v1390
  %3922 = vmatprep.subr.mxu0 %v1397
  %3923 = vmatpush1.msra.mxu0 %v1396
  %3924 = vmatprep.subr.mxu0 %v1403
  %3925 = vmatpush1.msra.mxu0 %v1402
  %3926 = vmatprep.subr.mxu0 %v1409
  %3927 = vmatpush1.msra.mxu0 %v1408
  %3928 = vmatprep.subr.mxu0 %v1415
  %3929 = vmatpush1.msra.mxu0 %v1414
  %3930 = vmatprep.mubr.f32.mxu0 %v1209
  %3931 = vmatmul.mubr.f32.gmra.mrb[0].mxu0 %v1208
  %v3932 = vpop.f32.mrb[0].mxu0
  %v3933 = vadd.f32 %v2715, %v3932
  %v3934 = vpop.f32.mrb[0].mxu0
  %v3935 = vadd.f32 %v2719, %v3934
  %3936 = vdwg.mxu0
  %3937 = vmatprep.subr.mxu0 %v1421
  %3938 = vmatpush1.msra.mxu0 %v1420
  %3939 = vmatprep.subr.mxu0 %v1427
  %3940 = vmatpush1.msra.mxu0 %v1426
  %3941 = vmatprep.subr.mxu0 %v1433
  %3942 = vmatpush1.msra.mxu0 %v1432
  %3943 = vmatprep.subr.mxu0 %v1439
  %3944 = vmatpush1.msra.mxu0 %v1438
  %3945 = vmatprep.subr.mxu0 %v1445
  %3946 = vmatpush1.msra.mxu0 %v1444
  %3947 = vmatprep.subr.mxu0 %v1451
  %3948 = vmatpush1.msra.mxu0 %v1450
  %3949 = vmatprep.subr.mxu0 %v1457
  %3950 = vmatpush1.msra.mxu0 %v1456
  %3951 = vmatprep.subr.mxu0 %v1463
  %3952 = vmatpush1.msra.mxu0 %v1462
  %3953 = vmatprep.subr.mxu0 %v1469
  %3954 = vmatpush1.msra.mxu0 %v1468
  %3955 = vmatprep.subr.mxu0 %v1475
  %3956 = vmatpush1.msra.mxu0 %v1474
  %3957 = vmatprep.subr.mxu0 %v1481
  %3958 = vmatpush1.msra.mxu0 %v1480
  %3959 = vmatprep.subr.mxu0 %v1487
  %3960 = vmatpush1.msra.mxu0 %v1486
  %3961 = vmatprep.subr.mxu0 %v1493
  %3962 = vmatpush1.msra.mxu0 %v1492
  %3963 = vmatprep.subr.mxu0 %v1499
  %3964 = vmatpush1.msra.mxu0 %v1498
  %3965 = vmatprep.subr.mxu0 %v1505
  %3966 = vmatpush1.msra.mxu0 %v1504
  %3967 = vmatprep.subr.mxu0 %v1511
  %3968 = vmatpush1.msra.mxu0 %v1510
  %3969 = vmatprep.subr.mxu0 %v1517
  %3970 = vmatpush1.msra.mxu0 %v1516
  %3971 = vmatprep.subr.mxu0 %v1523
  %3972 = vmatpush1.msra.mxu0 %v1522
  %3973 = vmatprep.subr.mxu0 %v1529
  %3974 = vmatpush1.msra.mxu0 %v1528
  %3975 = vmatprep.subr.mxu0 %v1535
  %3976 = vmatpush1.msra.mxu0 %v1534
  %3977 = vmatprep.subr.mxu0 %v1541
  %3978 = vmatpush1.msra.mxu0 %v1540
  %3979 = vmatprep.subr.mxu0 %v1547
  %3980 = vmatpush1.msra.mxu0 %v1546
  %3981 = vmatprep.subr.mxu0 %v1553
  %3982 = vmatpush1.msra.mxu0 %v1552
  %3983 = vmatprep.subr.mxu0 %v1559
  %3984 = vmatpush1.msra.mxu0 %v1558
  %3985 = vmatprep.subr.mxu0 %v1565
  %3986 = vmatpush1.msra.mxu0 %v1564
  %3987 = vmatprep.subr.mxu0 %v1571
  %3988 = vmatpush1.msra.mxu0 %v1570
  %3989 = vmatprep.subr.mxu0 %v1577
  %3990 = vmatpush1.msra.mxu0 %v1576
  %3991 = vmatprep.subr.mxu0 %v1583
  %3992 = vmatpush1.msra.mxu0 %v1582
  %3993 = vmatprep.subr.mxu0 %v1589
  %3994 = vmatpush1.msra.mxu0 %v1588
  %3995 = vmatprep.subr.mxu0 %v1595
  %3996 = vmatpush1.msra.mxu0 %v1594
  %3997 = vmatprep.subr.mxu0 %v1601
  %3998 = vmatpush1.msra.mxu0 %v1600
  %3999 = vmatprep.subr.mxu0 %v1607
  %4000 = vmatpush1.msra.mxu0 %v1606
  %4001 = vmatprep.mubr.f32.mxu0 %v1211
  %4002 = vmatmul.mubr.f32.gmra.mrb[0].mxu0 %v1210
  %v4003 = vpop.f32.mrb[0].mxu0
  %v4004 = vadd.f32 %v3933, %v4003
  %v4005 = vpop.f32.mrb[0].mxu0
  %v4006 = vadd.f32 %v3935, %v4005
  %4007 = vdwg.mxu0
  %4008 = vmatprep.subr.mxu0 %v1613
  %4009 = vmatpush1.msra.mxu0 %v1612
  %4010 = vmatprep.subr.mxu0 %v1619
  %4011 = vmatpush1.msra.mxu0 %v1618
  %4012 = vmatprep.subr.mxu0 %v1625
  %4013 = vmatpush1.msra.mxu0 %v1624
  %4014 = vmatprep.subr.mxu0 %v1631
  %4015 = vmatpush1.msra.mxu0 %v1630
  %4016 = vmatprep.subr.mxu0 %v1637
  %4017 = vmatpush1.msra.mxu0 %v1636
  %4018 = vmatprep.subr.mxu0 %v1643
  %4019 = vmatpush1.msra.mxu0 %v1642
  %4020 = vmatprep.subr.mxu0 %v1649
  %4021 = vmatpush1.msra.mxu0 %v1648
  %4022 = vmatprep.subr.mxu0 %v1655
  %4023 = vmatpush1.msra.mxu0 %v1654
  %4024 = vmatprep.subr.mxu0 %v1661
  %4025 = vmatpush1.msra.mxu0 %v1660
  %4026 = vmatprep.subr.mxu0 %v1667
  %4027 = vmatpush1.msra.mxu0 %v1666
  %4028 = vmatprep.subr.mxu0 %v1673
  %4029 = vmatpush1.msra.mxu0 %v1672
  %4030 = vmatprep.subr.mxu0 %v1679
  %4031 = vmatpush1.msra.mxu0 %v1678
  %4032 = vmatprep.subr.mxu0 %v1685
  %4033 = vmatpush1.msra.mxu0 %v1684
  %4034 = vmatprep.subr.mxu0 %v1691
  %4035 = vmatpush1.msra.mxu0 %v1690
  %4036 = vmatprep.subr.mxu0 %v1697
  %4037 = vmatpush1.msra.mxu0 %v1696
  %4038 = vmatprep.subr.mxu0 %v1703
  %4039 = vmatpush1.msra.mxu0 %v1702
  %4040 = vmatprep.subr.mxu0 %v1709
  %4041 = vmatpush1.msra.mxu0 %v1708
  %4042 = vmatprep.subr.mxu0 %v1715
  %4043 = vmatpush1.msra.mxu0 %v1714
  %4044 = vmatprep.subr.mxu0 %v1721
  %4045 = vmatpush1.msra.mxu0 %v1720
  %4046 = vmatprep.subr.mxu0 %v1727
  %4047 = vmatpush1.msra.mxu0 %v1726
  %4048 = vmatprep.subr.mxu0 %v1733
  %4049 = vmatpush1.msra.mxu0 %v1732
  %4050 = vmatprep.subr.mxu0 %v1739
  %4051 = vmatpush1.msra.mxu0 %v1738
  %4052 = vmatprep.subr.mxu0 %v1745
  %4053 = vmatpush1.msra.mxu0 %v1744
  %4054 = vmatprep.subr.mxu0 %v1751
  %4055 = vmatpush1.msra.mxu0 %v1750
  %4056 = vmatprep.subr.mxu0 %v1757
  %4057 = vmatpush1.msra.mxu0 %v1756
  %4058 = vmatprep.subr.mxu0 %v1763
  %4059 = vmatpush1.msra.mxu0 %v1762
  %4060 = vmatprep.subr.mxu0 %v1769
  %4061 = vmatpush1.msra.mxu0 %v1768
  %4062 = vmatprep.subr.mxu0 %v1775
  %4063 = vmatpush1.msra.mxu0 %v1774
  %4064 = vmatprep.subr.mxu0 %v1781
  %4065 = vmatpush1.msra.mxu0 %v1780
  %4066 = vmatprep.subr.mxu0 %v1787
  %4067 = vmatpush1.msra.mxu0 %v1786
  %4068 = vmatprep.subr.mxu0 %v1793
  %4069 = vmatpush1.msra.mxu0 %v1792
  %4070 = vmatprep.subr.mxu0 %v1799
  %4071 = vmatpush1.msra.mxu0 %v1798
  %4072 = vmatprep.mubr.f32.mxu0 %v1213
  %4073 = vmatmul.mubr.f32.gmra.mrb[0].mxu0 %v1212
  %v4074 = vpop.f32.mrb[0].mxu0
  %v4075 = vadd.f32 %v4004, %v4074
  %v4076 = vpop.f32.mrb[0].mxu0
  %v4077 = vadd.f32 %v4006, %v4076
  %4078 = vdwg.mxu0
  %4079 = vmatprep.subr.mxu0 %v1805
  %4080 = vmatpush1.msra.mxu0 %v1804
  %4081 = vmatprep.subr.mxu0 %v1811
  %4082 = vmatpush1.msra.mxu0 %v1810
  %4083 = vmatprep.subr.mxu0 %v1817
  %4084 = vmatpush1.msra.mxu0 %v1816
  %4085 = vmatprep.subr.mxu0 %v1823
  %4086 = vmatpush1.msra.mxu0 %v1822
  %4087 = vmatprep.subr.mxu0 %v1829
  %4088 = vmatpush1.msra.mxu0 %v1828
  %4089 = vmatprep.subr.mxu0 %v1835
  %4090 = vmatpush1.msra.mxu0 %v1834
  %4091 = vmatprep.subr.mxu0 %v1841
  %4092 = vmatpush1.msra.mxu0 %v1840
  %4093 = vmatprep.subr.mxu0 %v1847
  %4094 = vmatpush1.msra.mxu0 %v1846
  %4095 = vmatprep.subr.mxu0 %v1853
  %4096 = vmatpush1.msra.mxu0 %v1852
  %4097 = vmatprep.subr.mxu0 %v1859
  %4098 = vmatpush1.msra.mxu0 %v1858
  %4099 = vmatprep.subr.mxu0 %v1865
  %4100 = vmatpush1.msra.mxu0 %v1864
  %4101 = vmatprep.subr.mxu0 %v1871
  %4102 = vmatpush1.msra.mxu0 %v1870
  %4103 = vmatprep.subr.mxu0 %v1877
  %4104 = vmatpush1.msra.mxu0 %v1876
  %4105 = vmatprep.subr.mxu0 %v1883
  %4106 = vmatpush1.msra.mxu0 %v1882
  %4107 = vmatprep.subr.mxu0 %v1889
  %4108 = vmatpush1.msra.mxu0 %v1888
  %4109 = vmatprep.subr.mxu0 %v1895
  %4110 = vmatpush1.msra.mxu0 %v1894
  %4111 = vmatprep.subr.mxu0 %v1901
  %4112 = vmatpush1.msra.mxu0 %v1900
  %4113 = vmatprep.subr.mxu0 %v1907
  %4114 = vmatpush1.msra.mxu0 %v1906
  %4115 = vmatprep.subr.mxu0 %v1913
  %4116 = vmatpush1.msra.mxu0 %v1912
  %4117 = vmatprep.subr.mxu0 %v1919
  %4118 = vmatpush1.msra.mxu0 %v1918
  %4119 = vmatprep.subr.mxu0 %v1925
  %4120 = vmatpush1.msra.mxu0 %v1924
  %4121 = vmatprep.subr.mxu0 %v1931
  %4122 = vmatpush1.msra.mxu0 %v1930
  %4123 = vmatprep.subr.mxu0 %v1937
  %4124 = vmatpush1.msra.mxu0 %v1936
  %4125 = vmatprep.subr.mxu0 %v1943
  %4126 = vmatpush1.msra.mxu0 %v1942
  %4127 = vmatprep.subr.mxu0 %v1949
  %4128 = vmatpush1.msra.mxu0 %v1948
  %4129 = vmatprep.subr.mxu0 %v1955
  %4130 = vmatpush1.msra.mxu0 %v1954
  %4131 = vmatprep.subr.mxu0 %v1961
  %4132 = vmatpush1.msra.mxu0 %v1960
  %4133 = vmatprep.subr.mxu0 %v1967
  %4134 = vmatpush1.msra.mxu0 %v1966
  %4135 = vmatprep.subr.mxu0 %v1973
  %4136 = vmatpush1.msra.mxu0 %v1972
  %4137 = vmatprep.subr.mxu0 %v1979
  %4138 = vmatpush1.msra.mxu0 %v1978
  %4139 = vmatprep.subr.mxu0 %v1985
  %4140 = vmatpush1.msra.mxu0 %v1984
  %4141 = vmatprep.subr.mxu0 %v1991
  %4142 = vmatpush1.msra.mxu0 %v1990
  %4143 = vmatprep.mubr.f32.mxu0 %v1215
  %4144 = vmatmul.mubr.f32.gmra.mrb[0].mxu0 %v1214
  %v4145 = vpop.f32.mrb[0].mxu0
  %v4146 = vadd.f32 %v4075, %v4145
  %v4147 = vpop.f32.mrb[0].mxu0
  %v4148 = vadd.f32 %v4077, %v4147
  %4149 = vdwg.mxu0
  %4150 = vmatprep.subr.mxu0 %v1997
  %4151 = vmatpush1.msra.mxu0 %v1996
  %4152 = vmatprep.subr.mxu0 %v2003
  %4153 = vmatpush1.msra.mxu0 %v2002
  %4154 = vmatprep.subr.mxu0 %v2009
  %4155 = vmatpush1.msra.mxu0 %v2008
  %4156 = vmatprep.subr.mxu0 %v2015
  %4157 = vmatpush1.msra.mxu0 %v2014
  %4158 = vmatprep.subr.mxu0 %v2021
  %4159 = vmatpush1.msra.mxu0 %v2020
  %4160 = vmatprep.subr.mxu0 %v2027
  %4161 = vmatpush1.msra.mxu0 %v2026
  %4162 = vmatprep.subr.mxu0 %v2033
  %4163 = vmatpush1.msra.mxu0 %v2032
  %4164 = vmatprep.subr.mxu0 %v2039
  %4165 = vmatpush1.msra.mxu0 %v2038
  %4166 = vmatprep.subr.mxu0 %v2045
  %4167 = vmatpush1.msra.mxu0 %v2044
  %4168 = vmatprep.subr.mxu0 %v2051
  %4169 = vmatpush1.msra.mxu0 %v2050
  %4170 = vmatprep.subr.mxu0 %v2057
  %4171 = vmatpush1.msra.mxu0 %v2056
  %4172 = vmatprep.subr.mxu0 %v2063
  %4173 = vmatpush1.msra.mxu0 %v2062
  %4174 = vmatprep.subr.mxu0 %v2069
  %4175 = vmatpush1.msra.mxu0 %v2068
  %4176 = vmatprep.subr.mxu0 %v2075
  %4177 = vmatpush1.msra.mxu0 %v2074
  %4178 = vmatprep.subr.mxu0 %v2081
  %4179 = vmatpush1.msra.mxu0 %v2080
  %4180 = vmatprep.subr.mxu0 %v2087
  %4181 = vmatpush1.msra.mxu0 %v2086
  %4182 = vmatprep.subr.mxu0 %v2093
  %4183 = vmatpush1.msra.mxu0 %v2092
  %4184 = vmatprep.subr.mxu0 %v2099
  %4185 = vmatpush1.msra.mxu0 %v2098
  %4186 = vmatprep.subr.mxu0 %v2105
  %4187 = vmatpush1.msra.mxu0 %v2104
  %4188 = vmatprep.subr.mxu0 %v2111
  %4189 = vmatpush1.msra.mxu0 %v2110
  %4190 = vmatprep.subr.mxu0 %v2117
  %4191 = vmatpush1.msra.mxu0 %v2116
  %4192 = vmatprep.subr.mxu0 %v2123
  %4193 = vmatpush1.msra.mxu0 %v2122
  %4194 = vmatprep.subr.mxu0 %v2129
  %4195 = vmatpush1.msra.mxu0 %v2128
  %4196 = vmatprep.subr.mxu0 %v2135
  %4197 = vmatpush1.msra.mxu0 %v2134
  %4198 = vmatprep.subr.mxu0 %v2141
  %4199 = vmatpush1.msra.mxu0 %v2140
  %4200 = vmatprep.subr.mxu0 %v2147
  %4201 = vmatpush1.msra.mxu0 %v2146
  %4202 = vmatprep.subr.mxu0 %v2153
  %4203 = vmatpush1.msra.mxu0 %v2152
  %4204 = vmatprep.subr.mxu0 %v2159
  %4205 = vmatpush1.msra.mxu0 %v2158
  %4206 = vmatprep.subr.mxu0 %v2165
  %4207 = vmatpush1.msra.mxu0 %v2164
  %4208 = vmatprep.subr.mxu0 %v2171
  %4209 = vmatpush1.msra.mxu0 %v2170
  %4210 = vmatprep.subr.mxu0 %v2177
  %4211 = vmatpush1.msra.mxu0 %v2176
  %4212 = vmatprep.subr.mxu0 %v2183
  %4213 = vmatpush1.msra.mxu0 %v2182
  %4214 = vmatprep.mubr.f32.mxu0 %v1217
  %4215 = vmatmul.mubr.f32.gmra.mrb[0].mxu0 %v1216
  %v4216 = vpop.f32.mrb[0].mxu0
  %v4217 = vadd.f32 %v4146, %v4216
  %v4218 = vpop.f32.mrb[0].mxu0
  %v4219 = vadd.f32 %v4148, %v4218
  %4220 = vdwg.mxu0
  %4221 = vmatprep.subr.mxu0 %v2189
  %4222 = vmatpush1.msra.mxu0 %v2188
  %4223 = vmatprep.subr.mxu0 %v2195
  %4224 = vmatpush1.msra.mxu0 %v2194
  %4225 = vmatprep.subr.mxu0 %v2201
  %4226 = vmatpush1.msra.mxu0 %v2200
  %4227 = vmatprep.subr.mxu0 %v2207
  %4228 = vmatpush1.msra.mxu0 %v2206
  %4229 = vmatprep.subr.mxu0 %v2213
  %4230 = vmatpush1.msra.mxu0 %v2212
  %4231 = vmatprep.subr.mxu0 %v2219
  %4232 = vmatpush1.msra.mxu0 %v2218
  %4233 = vmatprep.subr.mxu0 %v2225
  %4234 = vmatpush1.msra.mxu0 %v2224
  %4235 = vmatprep.subr.mxu0 %v2231
  %4236 = vmatpush1.msra.mxu0 %v2230
  %4237 = vmatprep.subr.mxu0 %v2237
  %4238 = vmatpush1.msra.mxu0 %v2236
  %4239 = vmatprep.subr.mxu0 %v2243
  %4240 = vmatpush1.msra.mxu0 %v2242
  %4241 = vmatprep.subr.mxu0 %v2249
  %4242 = vmatpush1.msra.mxu0 %v2248
  %4243 = vmatprep.subr.mxu0 %v2255
  %4244 = vmatpush1.msra.mxu0 %v2254
  %4245 = vmatprep.subr.mxu0 %v2261
  %4246 = vmatpush1.msra.mxu0 %v2260
  %4247 = vmatprep.subr.mxu0 %v2267
  %4248 = vmatpush1.msra.mxu0 %v2266
  %4249 = vmatprep.subr.mxu0 %v2273
  %4250 = vmatpush1.msra.mxu0 %v2272
  %4251 = vmatprep.subr.mxu0 %v2279
  %4252 = vmatpush1.msra.mxu0 %v2278
  %4253 = vmatprep.subr.mxu0 %v2285
  %4254 = vmatpush1.msra.mxu0 %v2284
  %4255 = vmatprep.subr.mxu0 %v2291
  %4256 = vmatpush1.msra.mxu0 %v2290
  %4257 = vmatprep.subr.mxu0 %v2297
  %4258 = vmatpush1.msra.mxu0 %v2296
  %4259 = vmatprep.subr.mxu0 %v2303
  %4260 = vmatpush1.msra.mxu0 %v2302
  %4261 = vmatprep.subr.mxu0 %v2309
  %4262 = vmatpush1.msra.mxu0 %v2308
  %4263 = vmatprep.subr.mxu0 %v2315
  %4264 = vmatpush1.msra.mxu0 %v2314
  %4265 = vmatprep.subr.mxu0 %v2321
  %4266 = vmatpush1.msra.mxu0 %v2320
  %4267 = vmatprep.subr.mxu0 %v2327
  %4268 = vmatpush1.msra.mxu0 %v2326
  %4269 = vmatprep.subr.mxu0 %v2333
  %4270 = vmatpush1.msra.mxu0 %v2332
  %4271 = vmatprep.subr.mxu0 %v2339
  %4272 = vmatpush1.msra.mxu0 %v2338
  %4273 = vmatprep.subr.mxu0 %v2345
  %4274 = vmatpush1.msra.mxu0 %v2344
  %4275 = vmatprep.subr.mxu0 %v2351
  %4276 = vmatpush1.msra.mxu0 %v2350
  %4277 = vmatprep.subr.mxu0 %v2357
  %4278 = vmatpush1.msra.mxu0 %v2356
  %4279 = vmatprep.subr.mxu0 %v2363
  %4280 = vmatpush1.msra.mxu0 %v2362
  %4281 = vmatprep.subr.mxu0 %v2369
  %4282 = vmatpush1.msra.mxu0 %v2368
  %4283 = vmatprep.subr.mxu0 %v2375
  %4284 = vmatpush1.msra.mxu0 %v2374
  %4285 = vmatprep.mubr.f32.mxu0 %v1219
  %4286 = vmatmul.mubr.f32.gmra.mrb[0].mxu0 %v1218
  %v4287 = vpop.f32.mrb[0].mxu0
  %v4288 = vadd.f32 %v4217, %v4287
  %v4289 = vpop.f32.mrb[0].mxu0
  %v4290 = vadd.f32 %v4219, %v4289
  %4291 = vdwg.mxu0
  %4292 = vmatprep.subr.mxu0 %v2381
  %4293 = vmatpush1.msra.mxu0 %v2380
  %4294 = vmatprep.subr.mxu0 %v2387
  %4295 = vmatpush1.msra.mxu0 %v2386
  %4296 = vmatprep.subr.mxu0 %v2393
  %4297 = vmatpush1.msra.mxu0 %v2392
  %4298 = vmatprep.subr.mxu0 %v2399
  %4299 = vmatpush1.msra.mxu0 %v2398
  %4300 = vmatprep.subr.mxu0 %v2405
  %4301 = vmatpush1.msra.mxu0 %v2404
  %4302 = vmatprep.subr.mxu0 %v2411
  %4303 = vmatpush1.msra.mxu0 %v2410
  %4304 = vmatprep.subr.mxu0 %v2417
  %4305 = vmatpush1.msra.mxu0 %v2416
  %4306 = vmatprep.subr.mxu0 %v2423
  %4307 = vmatpush1.msra.mxu0 %v2422
  %4308 = vmatprep.subr.mxu0 %v2429
  %4309 = vmatpush1.msra.mxu0 %v2428
  %4310 = vmatprep.subr.mxu0 %v2435
  %4311 = vmatpush1.msra.mxu0 %v2434
  %4312 = vmatprep.subr.mxu0 %v2441
  %4313 = vmatpush1.msra.mxu0 %v2440
  %4314 = vmatprep.subr.mxu0 %v2447
  %4315 = vmatpush1.msra.mxu0 %v2446
  %4316 = vmatprep.subr.mxu0 %v2453
  %4317 = vmatpush1.msra.mxu0 %v2452
  %4318 = vmatprep.subr.mxu0 %v2459
  %4319 = vmatpush1.msra.mxu0 %v2458
  %4320 = vmatprep.subr.mxu0 %v2465
  %4321 = vmatpush1.msra.mxu0 %v2464
  %4322 = vmatprep.subr.mxu0 %v2471
  %4323 = vmatpush1.msra.mxu0 %v2470
  %4324 = vmatprep.subr.mxu0 %v2477
  %4325 = vmatpush1.msra.mxu0 %v2476
  %4326 = vmatprep.subr.mxu0 %v2483
  %4327 = vmatpush1.msra.mxu0 %v2482
  %4328 = vmatprep.subr.mxu0 %v2489
  %4329 = vmatpush1.msra.mxu0 %v2488
  %4330 = vmatprep.subr.mxu0 %v2495
  %4331 = vmatpush1.msra.mxu0 %v2494
  %4332 = vmatprep.subr.mxu0 %v2501
  %4333 = vmatpush1.msra.mxu0 %v2500
  %4334 = vmatprep.subr.mxu0 %v2507
  %4335 = vmatpush1.msra.mxu0 %v2506
  %4336 = vmatprep.subr.mxu0 %v2513
  %4337 = vmatpush1.msra.mxu0 %v2512
  %4338 = vmatprep.subr.mxu0 %v2519
  %4339 = vmatpush1.msra.mxu0 %v2518
  %4340 = vmatprep.subr.mxu0 %v2525
  %4341 = vmatpush1.msra.mxu0 %v2524
  %4342 = vmatprep.subr.mxu0 %v2531
  %4343 = vmatpush1.msra.mxu0 %v2530
  %4344 = vmatprep.subr.mxu0 %v2537
  %4345 = vmatpush1.msra.mxu0 %v2536
  %4346 = vmatprep.subr.mxu0 %v2543
  %4347 = vmatpush1.msra.mxu0 %v2542
  %4348 = vmatprep.subr.mxu0 %v2549
  %4349 = vmatpush1.msra.mxu0 %v2548
  %4350 = vmatprep.subr.mxu0 %v2555
  %4351 = vmatpush1.msra.mxu0 %v2554
  %4352 = vmatprep.subr.mxu0 %v2561
  %4353 = vmatpush1.msra.mxu0 %v2560
  %4354 = vmatprep.subr.mxu0 %v2567
  %4355 = vmatpush1.msra.mxu0 %v2566
  %4356 = vmatprep.mubr.f32.mxu0 %v1221
  %4357 = vmatmul.mubr.f32.gmra.mrb[0].mxu0 %v1220
  %v4358 = vpop.f32.mrb[0].mxu0
  %v4359 = vadd.f32 %v4288, %v4358
  %v4360 = vpop.f32.mrb[0].mxu0
  %v4361 = vadd.f32 %v4290, %v4360
  %4362 = vdwg.mxu0
  %4363 = vmatprep.subr.mxu0 %v2573
  %4364 = vmatpush1.msra.mxu0 %v2572
  %4365 = vmatprep.subr.mxu0 %v2579
  %4366 = vmatpush1.msra.mxu0 %v2578
  %4367 = vmatprep.subr.mxu0 %v2585
  %4368 = vmatpush1.msra.mxu0 %v2584
  %4369 = vmatprep.subr.mxu0 %v2591
  %4370 = vmatpush1.msra.mxu0 %v2590
  %4371 = vmatprep.subr.mxu0 %v2597
  %4372 = vmatpush1.msra.mxu0 %v2596
  %4373 = vmatprep.subr.mxu0 %v2603
  %4374 = vmatpush1.msra.mxu0 %v2602
  %4375 = vmatprep.subr.mxu0 %v2609
  %4376 = vmatpush1.msra.mxu0 %v2608
  %4377 = vmatprep.subr.mxu0 %v2615
  %4378 = vmatpush1.msra.mxu0 %v2614
  %4379 = vmatprep.subr.mxu0 %v2621
  %4380 = vmatpush1.msra.mxu0 %v2620
  %4381 = vmatprep.subr.mxu0 %v2627
  %4382 = vmatpush1.msra.mxu0 %v2626
  %4383 = vmatprep.subr.mxu0 %v2633
  %4384 = vmatpush1.msra.mxu0 %v2632
  %4385 = vmatprep.subr.mxu0 %v2639
  %4386 = vmatpush1.msra.mxu0 %v2638
  %4387 = vmatprep.subr.mxu0 %v2645
  %4388 = vmatpush1.msra.mxu0 %v2644
  %4389 = vmatprep.subr.mxu0 %v2651
  %4390 = vmatpush1.msra.mxu0 %v2650
  %4391 = vmatprep.subr.mxu0 %v2657
  %4392 = vmatpush1.msra.mxu0 %v2656
  %4393 = vmatprep.subr.mxu0 %v2663
  %4394 = vmatpush1.msra.mxu0 %v2662
  %4395 = vmatprep.subr.mxu0 %v2669
  %4396 = vmatpush1.msra.mxu0 %v2668
  %4397 = vmatprep.subr.mxu0 %v2675
  %4398 = vmatpush1.msra.mxu0 %v2674
  %4399 = vmatprep.subr.mxu0 %v2681
  %4400 = vmatpush1.msra.mxu0 %v2680
  %4401 = vmatprep.subr.mxu0 %v2687
  %4402 = vmatpush1.msra.mxu0 %v2686
  %4403 = vmatprep.subr.mxu0 %v2693
  %4404 = vmatpush1.msra.mxu0 %v2692
  %4405 = vmatprep.subr.mxu0 0.0
  %4406 = vmatpush1.msra.mxu0 0.0
  %4407 = vmatprep.subr.mxu0 0.0
  %4408 = vmatpush1.msra.mxu0 0.0
  %4409 = vmatprep.subr.mxu0 0.0
  %4410 = vmatpush1.msra.mxu0 0.0
  %4411 = vmatprep.subr.mxu0 0.0
  %4412 = vmatpush1.msra.mxu0 0.0
  %4413 = vmatprep.subr.mxu0 0.0
  %4414 = vmatpush1.msra.mxu0 0.0
  %4415 = vmatprep.subr.mxu0 0.0
  %4416 = vmatpush1.msra.mxu0 0.0
  %4417 = vmatprep.subr.mxu0 0.0
  %4418 = vmatpush1.msra.mxu0 0.0
  %4419 = vmatprep.subr.mxu0 0.0
  %4420 = vmatpush1.msra.mxu0 0.0
  %4421 = vmatprep.subr.mxu0 0.0
  %4422 = vmatpush1.msra.mxu0 0.0
  %4423 = vmatprep.subr.mxu0 0.0
  %4424 = vmatpush1.msra.mxu0 0.0
  %4425 = vmatprep.subr.mxu0 0.0
  %4426 = vmatpush1.msra.mxu0 0.0
  %4427 = vmatprep.mubr.f32.mxu0 %v2728
  %4428 = vmatmul.mubr.f32.gmra.mrb[0].mxu0 %v1222
  %v4429 = vpop.f32.mrb[0].mxu0
  %v4430 = vadd.f32 %v4359, %v4429
  %v4431 = vpop.f32.mrb[0].mxu0
  %v4432 = vadd.f32 %v4361, %v4431
  %4433 = vdwg.mxu0
  %v4434 = vmax.f32 %v3294, 0.0
  %v4435 = vmax.f32 %v3296, 0.0
  %v4436 = vmax.f32 %v3862, 0.0
  %v4437 = vmax.f32 %v3864, 0.0
  %v4438 = vmax.f32 %v4430, 0.0
  %v4439 = vmax.f32 %v4432, 0.0
  %v4440 = vld [vmem:[%s5] sm:$0xff]
  %v4441 = vld [vmem:[%s5 + $0x8] sm:$0xff]
  %v4442 = vld [vmem:[%s5 + $0x10] sm:$0xff]
  %v4443 = vld [vmem:[%s5 + $0x18] sm:$0xff]
  %v4444 = vld [vmem:[%s5 + $0x20] sm:$0xff]
  %v4445 = vld [vmem:[%s5 + $0x28] sm:$0xff]
  %v4446 = vld [vmem:[%s5 + $0x30] sm:$0xff]
  %v4447 = vld [vmem:[%s5 + $0x38] sm:$0xff]
  %v4448 = vld [vmem:[%s5 + $0x40] sm:$0xff]
  %v4449 = vld [vmem:[%s5 + $0x48] sm:$0xff]
  %v4450 = vld [vmem:[%s5 + $0x50] sm:$0xff]
  %v4451 = vld [vmem:[%s5 + $0x58] sm:$0xff]
  %v4452 = vld [vmem:[%s5 + $0x60] sm:$0xff]
  %v4453 = vld [vmem:[%s5 + $0x68] sm:$0xff]
  %v4454 = vld [vmem:[%s5 + $0x70] sm:$0xff]
  %v4455 = vld [vmem:[%s5 + $0x78] sm:$0xff]
  %v4456 = vld [vmem:[%s5 + $0x80] sm:$0xff]
  %v4457 = vld [vmem:[%s5 + $0x88] sm:$0xff]
  %v4458 = vld [vmem:[%s5 + $0x90] sm:$0xff]
  %v4459 = vld [vmem:[%s5 + $0x98] sm:$0xff]
  %v4460 = vld [vmem:[%s5 + $0xa0] sm:$0xff]
  %v4461 = vld [vmem:[%s5 + $0xa8] sm:$0xff]
  %v4462 = vld [vmem:[%s5 + $0xb0] sm:$0xff]
  %v4463 = vld [vmem:[%s5 + $0xb8] sm:$0xff]
  %v4464 = vld [vmem:[%s5 + $0xc0] sm:$0xff]
  %v4465 = vld [vmem:[%s5 + $0xc8] sm:$0xff]
  %v4466 = vld [vmem:[%s5 + $0xd0] sm:$0xff]
  %v4467 = vld [vmem:[%s5 + $0xd8] sm:$0xff]
  %v4468 = vld [vmem:[%s5 + $0xe0] sm:$0xff]
  %v4469 = vld [vmem:[%s5 + $0xe8] sm:$0xff]
  %v4470 = vld [vmem:[%s5 + $0xf0] sm:$0xff]
  %v4471 = vld [vmem:[%s5 + $0xf8] sm:$0xff]
  %v4472 = vld [vmem:[%s5 + $0x100] sm:$0xff]
  %v4473 = vld [vmem:[%s5 + $0x108] sm:$0xff]
  %v4474 = vld [vmem:[%s5 + $0x110] sm:$0xff]
  %v4475 = vld [vmem:[%s5 + $0x118] sm:$0xff]
  %v4476 = vld [vmem:[%s5 + $0x120] sm:$0xff]
  %v4477 = vld [vmem:[%s5 + $0x128] sm:$0xff]
  %v4478 = vld [vmem:[%s5 + $0x130] sm:$0xff]
  %v4479 = vld [vmem:[%s5 + $0x138] sm:$0xff]
  %v4480 = vld [vmem:[%s5 + $0x140] sm:$0xff]
  %v4481 = vld [vmem:[%s5 + $0x148] sm:$0xff]
  %v4482 = vld [vmem:[%s5 + $0x150] sm:$0xff]
  %v4483 = vld [vmem:[%s5 + $0x158] sm:$0xff]
  %v4484 = vld [vmem:[%s5 + $0x160] sm:$0xff]
  %v4485 = vld [vmem:[%s5 + $0x168] sm:$0xff]
  %v4486 = vld [vmem:[%s5 + $0x170] sm:$0xff]
  %v4487 = vld [vmem:[%s5 + $0x178] sm:$0xff]
  %v4488 = vld [vmem:[%s5 + $0x180] sm:$0xff]
  %v4489 = vld [vmem:[%s5 + $0x188] sm:$0xff]
  %v4490 = vld [vmem:[%s5 + $0x190] sm:$0xff]
  %v4491 = vld [vmem:[%s5 + $0x198] sm:$0xff]
  %v4492 = vld [vmem:[%s5 + $0x1a0] sm:$0xff]
  %v4493 = vld [vmem:[%s5 + $0x1a8] sm:$0xff]
  %v4494 = vld [vmem:[%s5 + $0x1b0] sm:$0xff]
  %v4495 = vld [vmem:[%s5 + $0x1b8] sm:$0xff]
  %v4496 = vld [vmem:[%s5 + $0x1c0] sm:$0xff]
  %v4497 = vld [vmem:[%s5 + $0x1c8] sm:$0xff]
  %v4498 = vld [vmem:[%s5 + $0x1d0] sm:$0xff]
  %v4499 = vld [vmem:[%s5 + $0x1d8] sm:$0xff]
  %v4500 = vld [vmem:[%s5 + $0x1e0] sm:$0xff]
  %v4501 = vld [vmem:[%s5 + $0x1e8] sm:$0xff]
  %v4502 = vld [vmem:[%s5 + $0x1f0] sm:$0xff]
  %v4503 = vld [vmem:[%s5 + $0x1f8] sm:$0xff]
  %v4504 = vld [vmem:[%s5 + $0x200] sm:$0xff]
  %v4505 = vld [vmem:[%s5 + $0x208] sm:$0xff]
  %v4506 = vld [vmem:[%s5 + $0x210] sm:$0xff]
  %v4507 = vld [vmem:[%s5 + $0x218] sm:$0xff]
  %v4508 = vld [vmem:[%s5 + $0x220] sm:$0xff]
  %v4509 = vld [vmem:[%s5 + $0x228] sm:$0xff]
  %v4510 = vld [vmem:[%s5 + $0x230] sm:$0xff]
  %v4511 = vld [vmem:[%s5 + $0x238] sm:$0xff]
  %v4512 = vld [vmem:[%s5 + $0x240] sm:$0xff]
  %v4513 = vld [vmem:[%s5 + $0x248] sm:$0xff]
  %v4514 = vld [vmem:[%s5 + $0x250] sm:$0xff]
  %v4515 = vld [vmem:[%s5 + $0x258] sm:$0xff]
  %v4516 = vld [vmem:[%s5 + $0x260] sm:$0xff]
  %v4517 = vld [vmem:[%s5 + $0x268] sm:$0xff]
  %v4518 = vld [vmem:[%s5 + $0x270] sm:$0xff]
  %v4519 = vld [vmem:[%s5 + $0x278] sm:$0xff]
  %v4520 = vld [vmem:[%s5 + $0x280] sm:$0xff]
  %v4521 = vld [vmem:[%s5 + $0x288] sm:$0xff]
  %v4522 = vld [vmem:[%s5 + $0x290] sm:$0xff]
  %v4523 = vld [vmem:[%s5 + $0x298] sm:$0xff]
  %v4524 = vld [vmem:[%s5 + $0x2a0] sm:$0xff]
  %v4525 = vld [vmem:[%s5 + $0x2a8] sm:$0xff]
  %v4526 = vld [vmem:[%s5 + $0x2b0] sm:$0xff]
  %v4527 = vld [vmem:[%s5 + $0x2b8] sm:$0xff]
  %v4528 = vld [vmem:[%s5 + $0x2c0] sm:$0xff]
  %v4529 = vld [vmem:[%s5 + $0x2c8] sm:$0xff]
  %v4530 = vld [vmem:[%s6] sm:$0x1]
  %v4532 = vlaneseq
  %v4533 = vshrl.u32 %v4532, 7
  %v4534 = vsub.s32 0, %v4533
  %v4535 = vrot.slane %v4530, %v4534
  %vm4537 = vcmask 654336
  %v4539 = vsel %vm4537, %v4439, 0
  %4541 = vmatprep.subr.mxu0 0.0
  %4542 = vmatpush1.msra.mxu0 %v4440
  %4543 = vmatprep.subr.mxu0 0.0
  %4544 = vmatpush1.msra.mxu0 %v4441
  %4545 = vmatprep.subr.mxu0 0.0
  %4546 = vmatpush1.msra.mxu0 %v4442
  %4547 = vmatprep.subr.mxu0 0.0
  %4548 = vmatpush1.msra.mxu0 %v4443
  %4549 = vmatprep.subr.mxu0 0.0
  %4550 = vmatpush1.msra.mxu0 %v4444
  %4551 = vmatprep.subr.mxu0 0.0
  %4552 = vmatpush1.msra.mxu0 %v4445
  %4553 = vmatprep.subr.mxu0 0.0
  %4554 = vmatpush1.msra.mxu0 %v4446
  %4555 = vmatprep.subr.mxu0 0.0
  %4556 = vmatpush1.msra.mxu0 %v4447
  %4557 = vmatprep.subr.mxu0 0.0
  %4558 = vmatpush1.msra.mxu0 %v4448
  %4559 = vmatprep.subr.mxu0 0.0
  %4560 = vmatpush1.msra.mxu0 %v4449
  %4561 = vmatprep.subr.mxu0 0.0
  %4562 = vmatpush1.msra.mxu0 %v4450
  %4563 = vmatprep.subr.mxu0 0.0
  %4564 = vmatpush1.msra.mxu0 %v4451
  %4565 = vmatprep.subr.mxu0 0.0
  %4566 = vmatpush1.msra.mxu0 %v4452
  %4567 = vmatprep.subr.mxu0 0.0
  %4568 = vmatpush1.msra.mxu0 %v4453
  %4569 = vmatprep.subr.mxu0 0.0
  %4570 = vmatpush1.msra.mxu0 %v4454
  %4571 = vmatprep.subr.mxu0 0.0
  %4572 = vmatpush1.msra.mxu0 %v4455
  %4573 = vmatprep.subr.mxu0 0.0
  %4574 = vmatpush1.msra.mxu0 %v4456
  %4575 = vmatprep.subr.mxu0 0.0
  %4576 = vmatpush1.msra.mxu0 %v4457
  %4577 = vmatprep.subr.mxu0 0.0
  %4578 = vmatpush1.msra.mxu0 %v4458
  %4579 = vmatprep.subr.mxu0 0.0
  %4580 = vmatpush1.msra.mxu0 %v4459
  %4581 = vmatprep.subr.mxu0 0.0
  %4582 = vmatpush1.msra.mxu0 %v4460
  %4583 = vmatprep.subr.mxu0 0.0
  %4584 = vmatpush1.msra.mxu0 %v4461
  %4585 = vmatprep.subr.mxu0 0.0
  %4586 = vmatpush1.msra.mxu0 %v4462
  %4587 = vmatprep.subr.mxu0 0.0
  %4588 = vmatpush1.msra.mxu0 %v4463
  %4589 = vmatprep.subr.mxu0 0.0
  %4590 = vmatpush1.msra.mxu0 %v4464
  %4591 = vmatprep.subr.mxu0 0.0
  %4592 = vmatpush1.msra.mxu0 %v4465
  %4593 = vmatprep.subr.mxu0 0.0
  %4594 = vmatpush1.msra.mxu0 %v4466
  %4595 = vmatprep.subr.mxu0 0.0
  %4596 = vmatpush1.msra.mxu0 %v4467
  %4597 = vmatprep.subr.mxu0 0.0
  %4598 = vmatpush1.msra.mxu0 %v4468
  %4599 = vmatprep.subr.mxu0 0.0
  %4600 = vmatpush1.msra.mxu0 %v4469
  %4601 = vmatprep.subr.mxu0 0.0
  %4602 = vmatpush1.msra.mxu0 %v4470
  %4603 = vmatprep.subr.mxu0 0.0
  %4604 = vmatpush1.msra.mxu0 %v4471
  %4605 = vmatprep.mubr.f32.mxu0 %v4435
  %4606 = vmatmul.mubr.f32.gmra.mrb[0].mxu0 %v4434
  %v4607 = vpop.f32.mrb[0].mxu0
  %v4608 = vadd.f32 %v4535, %v4607
  %v4609 = vpop.f32.mrb[0].mxu0
  %4610 = vdwg.mxu0
  %4611 = vmatprep.subr.mxu0 0.0
  %4612 = vmatpush1.msra.mxu0 %v4472
  %4613 = vmatprep.subr.mxu0 0.0
  %4614 = vmatpush1.msra.mxu0 %v4473
  %4615 = vmatprep.subr.mxu0 0.0
  %4616 = vmatpush1.msra.mxu0 %v4474
  %4617 = vmatprep.subr.mxu0 0.0
  %4618 = vmatpush1.msra.mxu0 %v4475
  %4619 = vmatprep.subr.mxu0 0.0
  %4620 = vmatpush1.msra.mxu0 %v4476
  %4621 = vmatprep.subr.mxu0 0.0
  %4622 = vmatpush1.msra.mxu0 %v4477
  %4623 = vmatprep.subr.mxu0 0.0
  %4624 = vmatpush1.msra.mxu0 %v4478
  %4625 = vmatprep.subr.mxu0 0.0
  %4626 = vmatpush1.msra.mxu0 %v4479
  %4627 = vmatprep.subr.mxu0 0.0
  %4628 = vmatpush1.msra.mxu0 %v4480
  %4629 = vmatprep.subr.mxu0 0.0
  %4630 = vmatpush1.msra.mxu0 %v4481
  %4631 = vmatprep.subr.mxu0 0.0
  %4632 = vmatpush1.msra.mxu0 %v4482
  %4633 = vmatprep.subr.mxu0 0.0
  %4634 = vmatpush1.msra.mxu0 %v4483
  %4635 = vmatprep.subr.mxu0 0.0
  %4636 = vmatpush1.msra.mxu0 %v4484
  %4637 = vmatprep.subr.mxu0 0.0
  %4638 = vmatpush1.msra.mxu0 %v4485
  %4639 = vmatprep.subr.mxu0 0.0
  %4640 = vmatpush1.msra.mxu0 %v4486
  %4641 = vmatprep.subr.mxu0 0.0
  %4642 = vmatpush1.msra.mxu0 %v4487
  %4643 = vmatprep.subr.mxu0 0.0
  %4644 = vmatpush1.msra.mxu0 %v4488
  %4645 = vmatprep.subr.mxu0 0.0
  %4646 = vmatpush1.msra.mxu0 %v4489
  %4647 = vmatprep.subr.mxu0 0.0
  %4648 = vmatpush1.msra.mxu0 %v4490
  %4649 = vmatprep.subr.mxu0 0.0
  %4650 = vmatpush1.msra.mxu0 %v4491
  %4651 = vmatprep.subr.mxu0 0.0
  %4652 = vmatpush1.msra.mxu0 %v4492
  %4653 = vmatprep.subr.mxu0 0.0
  %4654 = vmatpush1.msra.mxu0 %v4493
  %4655 = vmatprep.subr.mxu0 0.0
  %4656 = vmatpush1.msra.mxu0 %v4494
  %4657 = vmatprep.subr.mxu0 0.0
  %4658 = vmatpush1.msra.mxu0 %v4495
  %4659 = vmatprep.subr.mxu0 0.0
  %4660 = vmatpush1.msra.mxu0 %v4496
  %4661 = vmatprep.subr.mxu0 0.0
  %4662 = vmatpush1.msra.mxu0 %v4497
  %4663 = vmatprep.subr.mxu0 0.0
  %4664 = vmatpush1.msra.mxu0 %v4498
  %4665 = vmatprep.subr.mxu0 0.0
  %4666 = vmatpush1.msra.mxu0 %v4499
  %4667 = vmatprep.subr.mxu0 0.0
  %4668 = vmatpush1.msra.mxu0 %v4500
  %4669 = vmatprep.subr.mxu0 0.0
  %4670 = vmatpush1.msra.mxu0 %v4501
  %4671 = vmatprep.subr.mxu0 0.0
  %4672 = vmatpush1.msra.mxu0 %v4502
  %4673 = vmatprep.subr.mxu0 0.0
  %4674 = vmatpush1.msra.mxu0 %v4503
  %4675 = vmatprep.mubr.f32.mxu0 %v4437
  %4676 = vmatmul.mubr.f32.gmra.mrb[0].mxu0 %v4436
  %v4677 = vpop.f32.mrb[0].mxu0
  %v4678 = vadd.f32 %v4608, %v4677
  %v4679 = vpop.f32.mrb[0].mxu0
  %4680 = vdwg.mxu0
  %4681 = vmatprep.subr.mxu0 0.0
  %4682 = vmatpush1.msra.mxu0 %v4504
  %4683 = vmatprep.subr.mxu0 0.0
  %4684 = vmatpush1.msra.mxu0 %v4505
  %4685 = vmatprep.subr.mxu0 0.0
  %4686 = vmatpush1.msra.mxu0 %v4506
  %4687 = vmatprep.subr.mxu0 0.0
  %4688 = vmatpush1.msra.mxu0 %v4507
  %4689 = vmatprep.subr.mxu0 0.0
  %4690 = vmatpush1.msra.mxu0 %v4508
  %4691 = vmatprep.subr.mxu0 0.0
  %4692 = vmatpush1.msra.mxu0 %v4509
  %4693 = vmatprep.subr.mxu0 0.0
  %4694 = vmatpush1.msra.mxu0 %v4510
  %4695 = vmatprep.subr.mxu0 0.0
  %4696 = vmatpush1.msra.mxu0 %v4511
  %4697 = vmatprep.subr.mxu0 0.0
  %4698 = vmatpush1.msra.mxu0 %v4512
  %4699 = vmatprep.subr.mxu0 0.0
  %4700 = vmatpush1.msra.mxu0 %v4513
  %4701 = vmatprep.subr.mxu0 0.0
  %4702 = vmatpush1.msra.mxu0 %v4514
  %4703 = vmatprep.subr.mxu0 0.0
  %4704 = vmatpush1.msra.mxu0 %v4515
  %4705 = vmatprep.subr.mxu0 0.0
  %4706 = vmatpush1.msra.mxu0 %v4516
  %4707 = vmatprep.subr.mxu0 0.0
  %4708 = vmatpush1.msra.mxu0 %v4517
  %4709 = vmatprep.subr.mxu0 0.0
  %4710 = vmatpush1.msra.mxu0 %v4518
  %4711 = vmatprep.subr.mxu0 0.0
  %4712 = vmatpush1.msra.mxu0 %v4519
  %4713 = vmatprep.subr.mxu0 0.0
  %4714 = vmatpush1.msra.mxu0 %v4520
  %4715 = vmatprep.subr.mxu0 0.0
  %4716 = vmatpush1.msra.mxu0 %v4521
  %4717 = vmatprep.subr.mxu0 0.0
  %4718 = vmatpush1.msra.mxu0 %v4522
  %4719 = vmatprep.subr.mxu0 0.0
  %4720 = vmatpush1.msra.mxu0 %v4523
  %4721 = vmatprep.subr.mxu0 0.0
  %4722 = vmatpush1.msra.mxu0 %v4524
  %4723 = vmatprep.subr.mxu0 0.0
  %4724 = vmatpush1.msra.mxu0 %v4525
  %4725 = vmatprep.subr.mxu0 0.0
  %4726 = vmatpush1.msra.mxu0 %v4526
  %4727 = vmatprep.subr.mxu0 0.0
  %4728 = vmatpush1.msra.mxu0 %v4527
  %4729 = vmatprep.subr.mxu0 0.0
  %4730 = vmatpush1.msra.mxu0 %v4528
  %4731 = vmatprep.subr.mxu0 0.0
  %4732 = vmatpush1.msra.mxu0 %v4529
  %4733 = vmatprep.subr.mxu0 0.0
  %4734 = vmatpush1.msra.mxu0 0.0
  %4735 = vmatprep.subr.mxu0 0.0
  %4736 = vmatpush1.msra.mxu0 0.0
  %4737 = vmatprep.subr.mxu0 0.0
  %4738 = vmatpush1.msra.mxu0 0.0
  %4739 = vmatprep.subr.mxu0 0.0
  %4740 = vmatpush1.msra.mxu0 0.0
  %4741 = vmatprep.subr.mxu0 0.0
  %4742 = vmatpush1.msra.mxu0 0.0
  %4743 = vmatprep.subr.mxu0 0.0
  %4744 = vmatpush1.msra.mxu0 0.0
  %4745 = vmatprep.mubr.f32.mxu0 %v4539
  %4746 = vmatmul.mubr.f32.gmra.mrb[0].mxu0 %v4438
  %v4747 = vpop.f32.mrb[0].mxu0
  %v4748 = vadd.f32 %v4678, %v4747
  %v4749 = vpop.f32.mrb[0].mxu0
  %4750 = vdwg.mxu0
  %v4751 = vmax.f32 %v4748, 0.0
  %v4752 = vld [vmem:[%s7] sm:$0xff]
  %v4753 = vld [vmem:[%s7 + $0x8] sm:$0xff]
  %v4754 = vld [vmem:[%s7 + $0x10] sm:$0xff]
  %v4755 = vld [vmem:[%s7 + $0x18] sm:$0xff]
  %v4756 = vld [vmem:[%s7 + $0x20] sm:$0xff]
  %v4757 = vld [vmem:[%s7 + $0x28] sm:$0xff]
  %v4758 = vld [vmem:[%s7 + $0x30] sm:$0xff]
  %v4759 = vld [vmem:[%s7 + $0x38] sm:$0xff]
  %v4760 = vld [vmem:[%s7 + $0x40] sm:$0xff]
  %v4761 = vld [vmem:[%s7 + $0x48] sm:$0xff]
  %v4762 = vld [vmem:[%s7 + $0x50] sm:$0xff]
  %v4763 = vld [vmem:[%s7 + $0x58] sm:$0xff]
  %v4764 = vld [vmem:[%s7 + $0x60] sm:$0xff]
  %v4765 = vld [vmem:[%s7 + $0x68] sm:$0xff]
  %v4766 = vld [vmem:[%s7 + $0x70] sm:$0xff]
  %v4767 = vld [vmem:[%s7 + $0x78] sm:$0xff]
  %v4768 = vld [vmem:[%s8] sm:$0x1]
  %v4770 = vlaneseq
  %v4771 = vshrl.u32 %v4770, 7
  %v4772 = vsub.s32 0, %v4771
  %v4773 = vrot.slane %v4768, %v4772
  %4775 = vmatprep.subr.mxu0 0.0
  %4776 = vmatpush1.msra.mxu0 %v4752
  %4777 = vmatprep.subr.mxu0 0.0
  %4778 = vmatpush1.msra.mxu0 %v4753
  %4779 = vmatprep.subr.mxu0 0.0
  %4780 = vmatpush1.msra.mxu0 %v4754
  %4781 = vmatprep.subr.mxu0 0.0
  %4782 = vmatpush1.msra.mxu0 %v4755
  %4783 = vmatprep.subr.mxu0 0.0
  %4784 = vmatpush1.msra.mxu0 %v4756
  %4785 = vmatprep.subr.mxu0 0.0
  %4786 = vmatpush1.msra.mxu0 %v4757
  %4787 = vmatprep.subr.mxu0 0.0
  %4788 = vmatpush1.msra.mxu0 %v4758
  %4789 = vmatprep.subr.mxu0 0.0
  %4790 = vmatpush1.msra.mxu0 %v4759
  %4791 = vmatprep.subr.mxu0 0.0
  %4792 = vmatpush1.msra.mxu0 %v4760
  %4793 = vmatprep.subr.mxu0 0.0
  %4794 = vmatpush1.msra.mxu0 %v4761
  %4795 = vmatprep.subr.mxu0 0.0
  %4796 = vmatpush1.msra.mxu0 %v4762
  %4797 = vmatprep.subr.mxu0 0.0
  %4798 = vmatpush1.msra.mxu0 %v4763
  %4799 = vmatprep.subr.mxu0 0.0
  %4800 = vmatpush1.msra.mxu0 %v4764
  %4801 = vmatprep.subr.mxu0 0.0
  %4802 = vmatpush1.msra.mxu0 %v4765
  %4803 = vmatprep.subr.mxu0 0.0
  %4804 = vmatpush1.msra.mxu0 %v4766
  %4805 = vmatprep.subr.mxu0 0.0
  %4806 = vmatpush1.msra.mxu0 %v4767
  %4807 = vmatprep.subr.mxu0 0.0
  %4808 = vmatpush1.msra.mxu0 0.0
  %4809 = vmatprep.subr.mxu0 0.0
  %4810 = vmatpush1.msra.mxu0 0.0
  %4811 = vmatprep.subr.mxu0 0.0
  %4812 = vmatpush1.msra.mxu0 0.0
  %4813 = vmatprep.subr.mxu0 0.0
  %4814 = vmatpush1.msra.mxu0 0.0
  %4815 = vmatprep.subr.mxu0 0.0
  %4816 = vmatpush1.msra.mxu0 0.0
  %4817 = vmatprep.subr.mxu0 0.0
  %4818 = vmatpush1.msra.mxu0 0.0
  %4819 = vmatprep.subr.mxu0 0.0
  %4820 = vmatpush1.msra.mxu0 0.0
  %4821 = vmatprep.subr.mxu0 0.0
  %4822 = vmatpush1.msra.mxu0 0.0
  %4823 = vmatprep.subr.mxu0 0.0
  %4824 = vmatpush1.msra.mxu0 0.0
  %4825 = vmatprep.subr.mxu0 0.0
  %4826 = vmatpush1.msra.mxu0 0.0
  %4827 = vmatprep.subr.mxu0 0.0
  %4828 = vmatpush1.msra.mxu0 0.0
  %4829 = vmatprep.subr.mxu0 0.0
  %4830 = vmatpush1.msra.mxu0 0.0
  %4831 = vmatprep.subr.mxu0 0.0
  %4832 = vmatpush1.msra.mxu0 0.0
  %4833 = vmatprep.subr.mxu0 0.0
  %4834 = vmatpush1.msra.mxu0 0.0
  %4835 = vmatprep.subr.mxu0 0.0
  %4836 = vmatpush1.msra.mxu0 0.0
  %4837 = vmatprep.subr.mxu0 0.0
  %4838 = vmatpush1.msra.mxu0 0.0
  %4839 = vmatprep.mubr.f32.mxu0 0.0
  %4840 = vmatmul.mubr.f32.gmra.mrb[0].mxu0 %v4751
  %v4841 = vpop.f32.mrb[0].mxu0
  %v4842 = vadd.f32 %v4773, %v4841
  %v4843 = vpop.f32.mrb[0].mxu0
  %4844 = vdwg.mxu0
  %4845 = vst [vmem:[%s9] sm:$0x3] %v4842
  // Predicated region
  $region38: #{critic_cnn_forward.1} parent=0 // pred_check
    _
  $region39: #{critic_cnn_forward.1} parent=0 // pred_check_branch
    %4847 = sbr.rel (0) target = $region41
  $region40: #{critic_cnn_forward.1} parent=0 // pred_region
    _
  $region41: #{critic_cnn_forward.1} parent=0 // pred_fallthru
    _
  // Predicated region
  $region42: #{critic_cnn_forward.1} parent=0 // pred_check
    _
  $region43: #{critic_cnn_forward.1} parent=0 // pred_check_branch
    %4849 = sbr.rel (0) target = $region45
  $region44: #{critic_cnn_forward.1} parent=0 // pred_region
    _
  $region45: #{critic_cnn_forward.1} parent=0 // pred_fallthru
    _

</llo_original>
